<compile_context>
chip_gen: v6e
topology: v6e:2x2x1
jax: 0.10.0
libtpu: 0.0.40
codegen_flags: <defaults>
</compile_context>

<pallas_src>
import functools

import jax
import jax.numpy as jnp
from jax.experimental import pallas as pl
from jax.experimental.pallas import tpu as pltpu


# ---------------------------------------------------------------------------
# Nonlinearities (mirror of nlr_dict).  All map 0 -> 0, which keeps
# zero-padded feature lanes exactly zero through the MLP.  exp() is guarded
# with min(x, 0) so the unselected `where` branch never produces inf.
# ---------------------------------------------------------------------------
def _relu(x):
    return jnp.maximum(x, 0.0)


def _leaky_relu(x):
    return jnp.where(x >= 0.0, x, 0.01 * x)


def _elu(x):
    return jnp.where(x >= 0.0, x, jnp.exp(jnp.minimum(x, 0.0)) - 1.0)


def _relu6(x):
    return jnp.clip(x, 0.0, 6.0)


def _celu(x):  # alpha = 1.0 (torch default)
    return jnp.where(x >= 0.0, x, jnp.exp(jnp.minimum(x, 0.0)) - 1.0)


def _selu(x):
    alpha = 1.6732632423543772848170429916717
    scale = 1.0507009873554804934193349852946
    return scale * jnp.where(x >= 0.0, x, alpha * (jnp.exp(jnp.minimum(x, 0.0)) - 1.0))


def _tanhshrink(x):
    return x - jnp.tanh(x)


NLR_DICT = {
    "ReLU": _relu,
    "ELU": _elu,
    "Tanh": jnp.tanh,
    "LeakyReLU": _leaky_relu,
    "ReLU6": _relu6,
    "SELU": _selu,
    "CELU": _celu,
    "Tanhshrink": _tanhshrink,
}
_TRANSCENDENTAL_ACTS = {"ELU", "Tanh", "SELU", "CELU", "Tanhshrink"}


# ---------------------------------------------------------------------------
# Pallas kernel: fused Gaussian smearing + full MLP for one row-tile.
#   pack == 2: two pair rows share one 128-lane vreg (64 lanes each);
#   pack == 1: classic 128-multiple lane padding.
# ---------------------------------------------------------------------------
def _pairmlp_kernel(n_matmul, pack, n_gauss, act_fn,
                    coeff_ref, r_ref, off_ref, *refs):
    """refs = (w0, b0, ..., w_{L-2}, b_{L-2}, w_last_row, b_last, out_ref)."""
    out_ref = refs[-1]
    params = refs[:-1]

    coeff = coeff_ref[0]                     # f32 scalar from SMEM
    r = r_ref[...]                           # (TP, pack) f32
    off = off_ref[...]                       # (1, F)     f32
    tp = r.shape[0]
    feat = off.shape[-1]

    lane = jax.lax.broadcasted_iota(jnp.int32, (tp, feat), 1)
    if pack == 2:
        half = feat // 2
        # lanes [0,64) carry pair row 2k, lanes [64,128) carry pair row 2k+1.
        rr = jnp.where(lane < half, r[:, 0:1], r[:, 1:2])
        valid = (lane & (half - 1)) < n_gauss
    else:
        rr = r                               # (TP, 1) broadcasts over lanes
        valid = lane < n_gauss

    # Gaussian smearing: exp(coeff * (r - mu)^2)  (f32, EUP)
    diff = rr - off
    h = jnp.exp(coeff * diff * diff)
    # Explicitly zero padded Gaussian lanes (defense for the zero-pad invariant).
    h = jnp.where(valid, h, 0.0)
    hb = h.astype(jnp.bfloat16)              # bf16 MXU input

    a = h
    for i in range(n_matmul):
        w = params[2 * i][...]               # (din_p, dout_p) bf16 (pre-cast)
        b = params[2 * i + 1][...]           # (1, dout_p)     f32
        z = jnp.dot(hb, w, preferred_element_type=jnp.float32) + b
        a = act_fn(z)                        # f32 (VPU/EUP; works on v5e too)
        if i + 1 < n_matmul:
            # Fuse the bf16 cast into the activation write (one pass saved).
            hb = a.astype(jnp.bfloat16)

    # Final Linear(G, 1): VPU multiply + (segmented) cross-lane XLU reduction.
    w_row = params[2 * n_matmul][...]        # (1, F_G)  f32
    b_last = params[2 * n_matmul + 1][...]   # (1, pack) f32
    prod = a * w_row                         # (TP, F_G) f32
    if pack == 2:
        fg = prod.shape[-1]
        lane_g = jax.lax.broadcasted_iota(jnp.int32, (tp, fg), 1)
        y0 = jnp.sum(jnp.where(lane_g < fg // 2, prod, 0.0),
                     axis=-1, keepdims=True)
        y1 = jnp.sum(jnp.where(lane_g >= fg // 2, prod, 0.0),
                     axis=-1, keepdims=True)
        col = jax.lax.broadcasted_iota(jnp.int32, (tp, 2), 1)
        y = jnp.where(col == 0, y0, y1) + b_last          # (TP, 2)
    else:
        y = jnp.sum(prod, axis=-1, keepdims=True) + b_last  # (TP, 1)
    out_ref[...] = y.astype(out_ref.dtype)


# ---------------------------------------------------------------------------
# Parameter construction (deterministic, synthetic — no checkpoint loading)
# ---------------------------------------------------------------------------
def init_pairmlp_params(key, n_gauss, n_width, n_layers):
    """Returns list of (W, b) with W stored as (in_dim, out_dim), f32."""
    dims = [(n_gauss, n_gauss), (n_gauss, n_width)]
    dims += [(n_width, n_width)] * n_layers
    dims += [(n_width, n_gauss), (n_gauss, 1)]

    params = []
    for (din, dout) in dims:
        key, kw, kb = jax.random.split(key, 3)
        bound = 1.0 / (din ** 0.5)           # same init range as torch.nn.Linear
        w = jax.random.uniform(kw, (din, dout), jnp.float32, -bound, bound)
        b = jax.random.uniform(kb, (1, dout), jnp.float32, -bound, bound)
        params.append((w, b))
    return params


def _round_up(x, m):
    return ((x + m - 1) // m) * m


def _pad_params_for_kernel(params, pack):
    """Pad / block-diagonalize weights for the kernel layout.

    pack == 2: hidden weights -> block-diag (128,128) bf16, biases tiled (1,128);
               final layer -> tiled f32 row (1,128) + (1,2) bias.
    pack == 1: classic zero-pad to multiples of 128; final layer f32 row (1,Gp).
    Zero-padded rows/cols + zero biases keep the math exact (all activations
    map 0 -> 0).  Returns (flat_args, block_specs).
    """
    n_linear = len(params)
    cmap = lambda i: (0, 0)                  # grid-invariant blocks
    flat, specs = [], []
    for idx, (w, b) in enumerate(params):
        din, dout = w.shape
        last = idx == n_linear - 1
        if pack == 2:
            dinp = doutp = 64
        else:
            dinp, doutp = _round_up(din, 128), _round_up(dout, 128)
        if last:
            row = jnp.zeros((dinp,), jnp.float32).at[:din].set(w[:, 0])
            w_row = jnp.tile(row, (pack,)).reshape(1, pack * dinp)
            b_l = jnp.broadcast_to(b.reshape(1, 1).astype(jnp.float32), (1, pack))
            b_l = b_l + jnp.zeros((1, pack), jnp.float32)   # materialize
            flat += [w_row, b_l]
            specs += [pl.BlockSpec((1, pack * dinp), cmap),
                      pl.BlockSpec((1, pack), cmap)]
        else:
            wp = jnp.zeros((dinp, doutp), jnp.float32).at[:din, :dout].set(w)
            bp = jnp.zeros((1, doutp), jnp.float32).at[:, :dout].set(b)
            if pack == 2:
                w_full = jnp.zeros((2 * dinp, 2 * doutp), jnp.float32)
                w_full = w_full.at[:dinp, :doutp].set(wp).at[dinp:, doutp:].set(wp)
                b_full = jnp.concatenate([bp, bp], axis=1)
            else:
                w_full, b_full = wp, bp
            flat += [w_full.astype(jnp.bfloat16), b_full]
            specs += [pl.BlockSpec(w_full.shape, cmap),
                      pl.BlockSpec(b_full.shape, cmap)]
    return flat, specs


# ---------------------------------------------------------------------------
# Wrapper
# ---------------------------------------------------------------------------
def pairmlp_forward(r, params, *, r_start, r_end, n_gauss, nonlinear="ReLU",
                    tile_n=4096):
    """r: (N, 1) float32 distances. Returns (N, 1) float32."""
    N = r.shape[0]
    assert r.shape == (N, 1)

    n_width = int(params[1][0].shape[1])
    pack = 2 if max(n_gauss, n_width) <= 64 else 1

    # Gaussian width / coeff from Python scalars (jit-safe); value goes to SMEM.
    width = (float(r_end) - float(r_start)) / (n_gauss - 1)
    coeff = -0.5 / (width * width)
    coeff_arr = jnp.array([coeff], jnp.float32)

    # Row tile: large (amortize ~0.35us/step), multiple of 16 so packed rows
    # (tile/2) stay a multiple of 8, and capped near ceil(N/2) so the grid
    # keeps >= 2 steps and both v7x TensorCores get work.
    tile_n = max(16, (int(tile_n) // 16) * 16)
    half_n = _round_up(max((N + 1) // 2, 1), 16)
    tile_eff = min(tile_n, half_n)
    num_tiles = (N + tile_eff - 1) // tile_eff
    n_pad = num_tiles * tile_eff
    tp = tile_eff // pack

    # Offsets (padded with r_end; padded lanes are zeroed in-kernel anyway).
    gpad = 64 if pack == 2 else _round_up(n_gauss, 128)
    off = jnp.linspace(r_start, r_end, n_gauss, dtype=jnp.float32)
    off = jnp.pad(off, (0, gpad - n_gauss), constant_values=float(r_end))
    if pack == 2:
        off = jnp.concatenate([off, off])
    off = off.reshape(1, pack * gpad)

    # Pad N and pack `pack` consecutive rows per kernel row.
    r_p = jnp.pad(r, ((0, n_pad - N), (0, 0))) if n_pad != N else r
    r_in = r_p.reshape(n_pad // pack, pack)

    n_matmul = len(params) - 1
    act_fn = NLR_DICT[nonlinear]
    kernel = functools.partial(_pairmlp_kernel, n_matmul, pack, n_gauss, act_fn)

    flat_params, param_specs = _pad_params_for_kernel(params, pack)

    in_specs = (
        [pl.BlockSpec(memory_space=pltpu.MemorySpace.SMEM),       # coeff scalar
         pl.BlockSpec((tp, pack), lambda i: (i, 0)),              # packed r tile
         pl.BlockSpec((1, pack * gpad), lambda i: (0, 0))]        # offsets
        + param_specs                                             # weights/biases
    )
    out_spec = pl.BlockSpec((tp, pack), lambda i: (i, 0))

    # Advisory cost estimate (packed rows; includes activation transcendentals).
    rows = n_pad // pack
    flops = 2 * rows * sum(int(w.shape[0]) * int(w.shape[1])
                           for w in flat_params[:-2:2])
    flops += 2 * rows * int(flat_params[-2].shape[-1])
    trans = rows * pack * gpad
    if nonlinear in _TRANSCENDENTAL_ACTS:
        trans += rows * sum(int(w.shape[1]) for w in flat_params[:-2:2])
    bytes_accessed = (4 * (r_in.size + n_pad + off.size)
                      + sum(int(x.size) * x.dtype.itemsize for x in flat_params))
    cost = pl.CostEstimate(flops=int(flops), transcendentals=int(trans),
                           bytes_accessed=int(bytes_accessed))

    out = pl.pallas_call(
        kernel,
        out_shape=jax.ShapeDtypeStruct((rows, pack), jnp.float32),
        grid_spec=pltpu.PrefetchScalarGridSpec(
            num_scalar_prefetch=0,
            grid=(num_tiles,),
            in_specs=in_specs,
            out_specs=out_spec,
        ),
        compiler_params=pltpu.CompilerParams(
            dimension_semantics=("parallel",),     # row tiles shard across TCs
            vmem_limit_bytes=32 * 1024 * 1024,
        ),
        cost_estimate=cost,
    )(coeff_arr, r_in, off, *flat_params)

    return out.reshape(n_pad, 1)[:N]


# ---------------------------------------------------------------------------
# Pure-JAX reference matching the kernel's precision policy
# (bf16 matmul inputs / f32 accumulate / f32 bias+activation; final layer f32).
# ---------------------------------------------------------------------------
def pairmlp_reference(r, params, *, r_start, r_end, n_gauss, nonlinear="ReLU"):
    width = (float(r_end) - float(r_start)) / (n_gauss - 1)
    coeff = -0.5 / (width * width)
    offsets = jnp.linspace(r_start, r_end, n_gauss, dtype=jnp.float32)
    act_fn = NLR_DICT[nonlinear]

    h = jnp.exp(coeff * (r - offsets[None, :]) ** 2)
    n_linear = len(params)
    for i, (w, b) in enumerate(params):
        if i < n_linear - 1:
            h = jnp.dot(h.astype(jnp.bfloat16), w.astype(jnp.bfloat16),
                        preferred_element_type=jnp.float32) + b
            h = act_fn(h)
        else:
            h = jnp.sum(h * w[:, 0][None, :], axis=-1, keepdims=True) + b
    return h


# ---------------------------------------------------------------------------
# Demo
# ---------------------------------------------------------------------------
if __name__ == "__main__":
    # Module hyperparameters (small, consistent with pairMLP.__init__)
    n_gauss = 32
    n_width = 64
    n_layers = 2
    r_start = 0.0
    r_end = 2.5
    nonlinear = "ReLU"

    N = 2000          # pair distances; intentionally not a multiple of the tile

    key = jax.random.PRNGKey(0)
    key, kr, kp = jax.random.split(key, 3)

    # Deterministic example input: distances in (0.1, r_end)
    r = jax.random.uniform(kr, (N, 1), jnp.float32, 0.1, r_end)
    params = init_pairmlp_params(kp, n_gauss, n_width, n_layers)

    out = pairmlp_forward(
        r, params,
        r_start=r_start, r_end=r_end, n_gauss=n_gauss,
        nonlinear=nonlinear, tile_n=4096,
    )
    out = jax.block_until_ready(out)

    ref = pairmlp_reference(
        r, params,
        r_start=r_start, r_end=r_end, n_gauss=n_gauss, nonlinear=nonlinear,
    )
    assert out.shape == (N, 1)
    max_err = float(jnp.max(jnp.abs(out - ref)))
    assert jnp.allclose(out, ref, atol=2e-3, rtol=2e-3), (
        f"mismatch vs reference, max|err|={max_err}")

    print("KERNEL_OK")
</pallas_src>

<mosaic_0001>
module attributes {stable_mosaic.version = 11 : i64} {
  func.func @_pairmlp_kernel(%arg0: i32, %arg1: memref<1xf32, #tpu.memory_space<smem>>, %arg2: memref<504x2xf32, #tpu.memory_space<vmem>>, %arg3: memref<1x128xf32, #tpu.memory_space<vmem>>, %arg4: memref<128x128xbf16, #tpu.memory_space<vmem>>, %arg5: memref<1x128xf32, #tpu.memory_space<vmem>>, %arg6: memref<128x128xbf16, #tpu.memory_space<vmem>>, %arg7: memref<1x128xf32, #tpu.memory_space<vmem>>, %arg8: memref<128x128xbf16, #tpu.memory_space<vmem>>, %arg9: memref<1x128xf32, #tpu.memory_space<vmem>>, %arg10: memref<128x128xbf16, #tpu.memory_space<vmem>>, %arg11: memref<1x128xf32, #tpu.memory_space<vmem>>, %arg12: memref<128x128xbf16, #tpu.memory_space<vmem>>, %arg13: memref<1x128xf32, #tpu.memory_space<vmem>>, %arg14: memref<1x128xf32, #tpu.memory_space<vmem>>, %arg15: memref<1x2xf32, #tpu.memory_space<vmem>>, %arg16: memref<504x2xf32, #tpu.memory_space<vmem>>) attributes {dimension_semantics = [#tpu.dimension_semantics<parallel>], iteration_bounds = array<i64: 2>, scalar_prefetch = 0 : i64, scratch_operands = 0 : i64, tpu.core_type = #tpu.core_type<tc>, window_params = [{transform_indices = @transform_0, window_bounds = array<i64: 1>}, {transform_indices = @transform_1, window_bounds = array<i64: 504, 2>}, {pipeline_mode = #tpu.pipeline_mode<synchronous>, transform_indices = @transform_2, window_bounds = array<i64: 1, 128>}, {pipeline_mode = #tpu.pipeline_mode<synchronous>, transform_indices = @transform_3, window_bounds = array<i64: 128, 128>}, {pipeline_mode = #tpu.pipeline_mode<synchronous>, transform_indices = @transform_4, window_bounds = array<i64: 1, 128>}, {pipeline_mode = #tpu.pipeline_mode<synchronous>, transform_indices = @transform_5, window_bounds = array<i64: 128, 128>}, {pipeline_mode = #tpu.pipeline_mode<synchronous>, transform_indices = @transform_6, window_bounds = array<i64: 1, 128>}, {pipeline_mode = #tpu.pipeline_mode<synchronous>, transform_indices = @transform_7, window_bounds = array<i64: 128, 128>}, {pipeline_mode = #tpu.pipeline_mode<synchronous>, transform_indices = @transform_8, window_bounds = array<i64: 1, 128>}, {pipeline_mode = #tpu.pipeline_mode<synchronous>, transform_indices = @transform_9, window_bounds = array<i64: 128, 128>}, {pipeline_mode = #tpu.pipeline_mode<synchronous>, transform_indices = @transform_10, window_bounds = array<i64: 1, 128>}, {pipeline_mode = #tpu.pipeline_mode<synchronous>, transform_indices = @transform_11, window_bounds = array<i64: 128, 128>}, {pipeline_mode = #tpu.pipeline_mode<synchronous>, transform_indices = @transform_12, window_bounds = array<i64: 1, 128>}, {pipeline_mode = #tpu.pipeline_mode<synchronous>, transform_indices = @transform_13, window_bounds = array<i64: 1, 128>}, {pipeline_mode = #tpu.pipeline_mode<synchronous>, transform_indices = @transform_14, window_bounds = array<i64: 1, 2>}, {transform_indices = @transform_15, window_bounds = array<i64: 504, 2>}]} {
    %c0 = arith.constant 0 : index
    %0 = memref.load %arg1[%c0] : memref<1xf32, #tpu.memory_space<smem>>
    %c0_0 = arith.constant 0 : index
    %c0_1 = arith.constant 0 : index
    %1 = vector.load %arg2[%c0_0, %c0_1] : memref<504x2xf32, #tpu.memory_space<vmem>>, vector<504x2xf32>
    %c0_2 = arith.constant 0 : index
    %c0_3 = arith.constant 0 : index
    %2 = vector.load %arg3[%c0_2, %c0_3] : memref<1x128xf32, #tpu.memory_space<vmem>>, vector<1x128xf32>
    %3 = tpu.iota {dimensions = array<i32: 1>} : vector<504x128xi32>
    %c64_i32 = arith.constant 64 : i32
    %4 = vector.broadcast %c64_i32 : i32 to vector<504x128xi32>
    %5 = arith.cmpi slt, %3, %4 : vector<504x128xi32>
    %6 = vector.extract_strided_slice %1 {offsets = [0, 0], sizes = [504, 1], strides = [1, 1]} : vector<504x2xf32> to vector<504x1xf32>
    %7 = vector.extract_strided_slice %1 {offsets = [0, 1], sizes = [504, 1], strides = [1, 1]} : vector<504x2xf32> to vector<504x1xf32>
    %8 = vector.shape_cast %6 : vector<504x1xf32> to vector<504x1xf32>
    %9 = vector.broadcast %8 : vector<504x1xf32> to vector<504x128xf32>
    %10 = vector.shape_cast %7 : vector<504x1xf32> to vector<504x1xf32>
    %11 = vector.broadcast %10 : vector<504x1xf32> to vector<504x128xf32>
    %12 = arith.select %5, %9, %11 : vector<504x128xi1>, vector<504x128xf32>
    %c63_i32 = arith.constant 63 : i32
    %13 = vector.broadcast %c63_i32 : i32 to vector<504x128xi32>
    %14 = arith.andi %3, %13 : vector<504x128xi32>
    %c32_i32 = arith.constant 32 : i32
    %15 = vector.broadcast %c32_i32 : i32 to vector<504x128xi32>
    %16 = arith.cmpi slt, %14, %15 : vector<504x128xi32>
    %17 = vector.broadcast %2 : vector<1x128xf32> to vector<504x128xf32>
    %18 = arith.subf %12, %17 : vector<504x128xf32>
    %19 = vector.broadcast %0 : f32 to vector<504x128xf32>
    %20 = arith.mulf %19, %18 : vector<504x128xf32>
    %21 = arith.mulf %20, %18 : vector<504x128xf32>
    %22 = math.exp %21 : vector<504x128xf32>
    %cst = arith.constant 0.000000e+00 : f32
    %23 = vector.broadcast %cst : f32 to vector<504x128xf32>
    %24 = arith.select %16, %22, %23 : vector<504x128xi1>, vector<504x128xf32>
    %25 = arith.truncf %24 : vector<504x128xf32> to vector<504x128xbf16>
    %c0_4 = arith.constant 0 : index
    %c0_5 = arith.constant 0 : index
    %26 = vector.load %arg4[%c0_4, %c0_5] : memref<128x128xbf16, #tpu.memory_space<vmem>>, vector<128x128xbf16>
    %c0_6 = arith.constant 0 : index
    %c0_7 = arith.constant 0 : index
    %27 = vector.load %arg5[%c0_6, %c0_7] : memref<1x128xf32, #tpu.memory_space<vmem>>, vector<1x128xf32>
    %cst_8 = arith.constant dense<0.000000e+00> : vector<504x128xf32>
    %28 = tpu.matmul %25, %26, %cst_8 {dimension_numbers = #tpu.dot_dimension_numbers<[1], [0], [0], [1], [0, 0, 1, 1], [], []>} : vector<504x128xbf16>, vector<128x128xbf16>, vector<504x128xf32> -> vector<504x128xf32>
    %29 = vector.broadcast %27 : vector<1x128xf32> to vector<504x128xf32>
    %30 = arith.addf %28, %29 : vector<504x128xf32>
    %cst_9 = arith.constant 0.000000e+00 : f32
    %31 = vector.broadcast %cst_9 : f32 to vector<504x128xf32>
    %32 = arith.maximumf %30, %31 : vector<504x128xf32>
    %33 = arith.truncf %32 : vector<504x128xf32> to vector<504x128xbf16>
    %c0_10 = arith.constant 0 : index
    %c0_11 = arith.constant 0 : index
    %34 = vector.load %arg6[%c0_10, %c0_11] : memref<128x128xbf16, #tpu.memory_space<vmem>>, vector<128x128xbf16>
    %c0_12 = arith.constant 0 : index
    %c0_13 = arith.constant 0 : index
    %35 = vector.load %arg7[%c0_12, %c0_13] : memref<1x128xf32, #tpu.memory_space<vmem>>, vector<1x128xf32>
    %cst_14 = arith.constant dense<0.000000e+00> : vector<504x128xf32>
    %36 = tpu.matmul %33, %34, %cst_14 {dimension_numbers = #tpu.dot_dimension_numbers<[1], [0], [0], [1], [0, 0, 1, 1], [], []>} : vector<504x128xbf16>, vector<128x128xbf16>, vector<504x128xf32> -> vector<504x128xf32>
    %37 = vector.broadcast %35 : vector<1x128xf32> to vector<504x128xf32>
    %38 = arith.addf %36, %37 : vector<504x128xf32>
    %cst_15 = arith.constant 0.000000e+00 : f32
    %39 = vector.broadcast %cst_15 : f32 to vector<504x128xf32>
    %40 = arith.maximumf %38, %39 : vector<504x128xf32>
    %41 = arith.truncf %40 : vector<504x128xf32> to vector<504x128xbf16>
    %c0_16 = arith.constant 0 : index
    %c0_17 = arith.constant 0 : index
    %42 = vector.load %arg8[%c0_16, %c0_17] : memref<128x128xbf16, #tpu.memory_space<vmem>>, vector<128x128xbf16>
    %c0_18 = arith.constant 0 : index
    %c0_19 = arith.constant 0 : index
    %43 = vector.load %arg9[%c0_18, %c0_19] : memref<1x128xf32, #tpu.memory_space<vmem>>, vector<1x128xf32>
    %cst_20 = arith.constant dense<0.000000e+00> : vector<504x128xf32>
    %44 = tpu.matmul %41, %42, %cst_20 {dimension_numbers = #tpu.dot_dimension_numbers<[1], [0], [0], [1], [0, 0, 1, 1], [], []>} : vector<504x128xbf16>, vector<128x128xbf16>, vector<504x128xf32> -> vector<504x128xf32>
    %45 = vector.broadcast %43 : vector<1x128xf32> to vector<504x128xf32>
    %46 = arith.addf %44, %45 : vector<504x128xf32>
    %cst_21 = arith.constant 0.000000e+00 : f32
    %47 = vector.broadcast %cst_21 : f32 to vector<504x128xf32>
    %48 = arith.maximumf %46, %47 : vector<504x128xf32>
    %49 = arith.truncf %48 : vector<504x128xf32> to vector<504x128xbf16>
    %c0_22 = arith.constant 0 : index
    %c0_23 = arith.constant 0 : index
    %50 = vector.load %arg10[%c0_22, %c0_23] : memref<128x128xbf16, #tpu.memory_space<vmem>>, vector<128x128xbf16>
    %c0_24 = arith.constant 0 : index
    %c0_25 = arith.constant 0 : index
    %51 = vector.load %arg11[%c0_24, %c0_25] : memref<1x128xf32, #tpu.memory_space<vmem>>, vector<1x128xf32>
    %cst_26 = arith.constant dense<0.000000e+00> : vector<504x128xf32>
    %52 = tpu.matmul %49, %50, %cst_26 {dimension_numbers = #tpu.dot_dimension_numbers<[1], [0], [0], [1], [0, 0, 1, 1], [], []>} : vector<504x128xbf16>, vector<128x128xbf16>, vector<504x128xf32> -> vector<504x128xf32>
    %53 = vector.broadcast %51 : vector<1x128xf32> to vector<504x128xf32>
    %54 = arith.addf %52, %53 : vector<504x128xf32>
    %cst_27 = arith.constant 0.000000e+00 : f32
    %55 = vector.broadcast %cst_27 : f32 to vector<504x128xf32>
    %56 = arith.maximumf %54, %55 : vector<504x128xf32>
    %57 = arith.truncf %56 : vector<504x128xf32> to vector<504x128xbf16>
    %c0_28 = arith.constant 0 : index
    %c0_29 = arith.constant 0 : index
    %58 = vector.load %arg12[%c0_28, %c0_29] : memref<128x128xbf16, #tpu.memory_space<vmem>>, vector<128x128xbf16>
    %c0_30 = arith.constant 0 : index
    %c0_31 = arith.constant 0 : index
    %59 = vector.load %arg13[%c0_30, %c0_31] : memref<1x128xf32, #tpu.memory_space<vmem>>, vector<1x128xf32>
    %cst_32 = arith.constant dense<0.000000e+00> : vector<504x128xf32>
    %60 = tpu.matmul %57, %58, %cst_32 {dimension_numbers = #tpu.dot_dimension_numbers<[1], [0], [0], [1], [0, 0, 1, 1], [], []>} : vector<504x128xbf16>, vector<128x128xbf16>, vector<504x128xf32> -> vector<504x128xf32>
    %61 = vector.broadcast %59 : vector<1x128xf32> to vector<504x128xf32>
    %62 = arith.addf %60, %61 : vector<504x128xf32>
    %cst_33 = arith.constant 0.000000e+00 : f32
    %63 = vector.broadcast %cst_33 : f32 to vector<504x128xf32>
    %64 = arith.maximumf %62, %63 : vector<504x128xf32>
    %c0_34 = arith.constant 0 : index
    %c0_35 = arith.constant 0 : index
    %65 = vector.load %arg14[%c0_34, %c0_35] : memref<1x128xf32, #tpu.memory_space<vmem>>, vector<1x128xf32>
    %c0_36 = arith.constant 0 : index
    %c0_37 = arith.constant 0 : index
    %66 = vector.load %arg15[%c0_36, %c0_37] : memref<1x2xf32, #tpu.memory_space<vmem>>, vector<1x2xf32>
    %67 = vector.broadcast %65 : vector<1x128xf32> to vector<504x128xf32>
    %68 = arith.mulf %64, %67 : vector<504x128xf32>
    %69 = tpu.iota {dimensions = array<i32: 1>} : vector<504x128xi32>
    %c64_i32_38 = arith.constant 64 : i32
    %70 = vector.broadcast %c64_i32_38 : i32 to vector<504x128xi32>
    %71 = arith.cmpi slt, %69, %70 : vector<504x128xi32>
    %cst_39 = arith.constant 0.000000e+00 : f32
    %72 = vector.broadcast %cst_39 : f32 to vector<504x128xf32>
    %73 = arith.select %71, %68, %72 : vector<504x128xi1>, vector<504x128xf32>
    %cst_40 = arith.constant dense<0.000000e+00> : vector<504xf32>
    %74 = vector.multi_reduction <add>, %73, %cst_40 [1] : vector<504x128xf32> to vector<504xf32>
    %75 = vector.shape_cast %74 : vector<504xf32> to vector<504x1xf32>
    %c64_i32_41 = arith.constant 64 : i32
    %76 = vector.broadcast %c64_i32_41 : i32 to vector<504x128xi32>
    %77 = arith.cmpi sge, %69, %76 : vector<504x128xi32>
    %cst_42 = arith.constant 0.000000e+00 : f32
    %78 = vector.broadcast %cst_42 : f32 to vector<504x128xf32>
    %79 = arith.select %77, %68, %78 : vector<504x128xi1>, vector<504x128xf32>
    %cst_43 = arith.constant dense<0.000000e+00> : vector<504xf32>
    %80 = vector.multi_reduction <add>, %79, %cst_43 [1] : vector<504x128xf32> to vector<504xf32>
    %81 = vector.shape_cast %80 : vector<504xf32> to vector<504x1xf32>
    %82 = tpu.iota {dimensions = array<i32: 1>} : vector<504x2xi32>
    %c0_i32 = arith.constant 0 : i32
    %83 = vector.broadcast %c0_i32 : i32 to vector<504x2xi32>
    %84 = arith.cmpi eq, %82, %83 : vector<504x2xi32>
    %85 = vector.shape_cast %75 : vector<504x1xf32> to vector<504x1xf32>
    %86 = vector.broadcast %85 : vector<504x1xf32> to vector<504x2xf32>
    %87 = vector.shape_cast %81 : vector<504x1xf32> to vector<504x1xf32>
    %88 = vector.broadcast %87 : vector<504x1xf32> to vector<504x2xf32>
    %89 = arith.select %84, %86, %88 : vector<504x2xi1>, vector<504x2xf32>
    %90 = vector.broadcast %66 : vector<1x2xf32> to vector<504x2xf32>
    %91 = arith.addf %89, %90 : vector<504x2xf32>
    %c0_44 = arith.constant 0 : index
    %c0_45 = arith.constant 0 : index
    %92 = vector.load %arg16[%c0_44, %c0_45] : memref<504x2xf32, #tpu.memory_space<vmem>>, vector<504x2xf32>
    tpu.vector_store %arg16[%c0_44, %c0_45], %91 {strides = array<i32>} : memref<504x2xf32, #tpu.memory_space<vmem>>, vector<504x2xf32>,
    return
  }
  func.func @transform_0(%arg0: i32) -> i32 {
    %c0_i32 = arith.constant 0 : i32
    %c0_i32_0 = arith.constant 0 : i32
    return %c0_i32 : i32
  }
  func.func @transform_1(%arg0: i32) -> (i32, i32) {
    %c0_i32 = arith.constant 0 : i32
    %c0_i32_0 = arith.constant 0 : i32
    return %arg0, %c0_i32 : i32, i32
  }
  func.func @transform_2(%arg0: i32) -> (i32, i32) {
    %c0_i32 = arith.constant 0 : i32
    %c0_i32_0 = arith.constant 0 : i32
    %c0_i32_1 = arith.constant 0 : i32
    return %c0_i32, %c0_i32_0 : i32, i32
  }
  func.func @transform_3(%arg0: i32) -> (i32, i32) {
    %c0_i32 = arith.constant 0 : i32
    %c0_i32_0 = arith.constant 0 : i32
    %c0_i32_1 = arith.constant 0 : i32
    return %c0_i32, %c0_i32_0 : i32, i32
  }
  func.func @transform_4(%arg0: i32) -> (i32, i32) {
    %c0_i32 = arith.constant 0 : i32
    %c0_i32_0 = arith.constant 0 : i32
    %c0_i32_1 = arith.constant 0 : i32
    return %c0_i32, %c0_i32_0 : i32, i32
  }
  func.func @transform_5(%arg0: i32) -> (i32, i32) {
    %c0_i32 = arith.constant 0 : i32
    %c0_i32_0 = arith.constant 0 : i32
    %c0_i32_1 = arith.constant 0 : i32
    return %c0_i32, %c0_i32_0 : i32, i32
  }
  func.func @transform_6(%arg0: i32) -> (i32, i32) {
    %c0_i32 = arith.constant 0 : i32
    %c0_i32_0 = arith.constant 0 : i32
    %c0_i32_1 = arith.constant 0 : i32
    return %c0_i32, %c0_i32_0 : i32, i32
  }
  func.func @transform_7(%arg0: i32) -> (i32, i32) {
    %c0_i32 = arith.constant 0 : i32
    %c0_i32_0 = arith.constant 0 : i32
    %c0_i32_1 = arith.constant 0 : i32
    return %c0_i32, %c0_i32_0 : i32, i32
  }
  func.func @transform_8(%arg0: i32) -> (i32, i32) {
    %c0_i32 = arith.constant 0 : i32
    %c0_i32_0 = arith.constant 0 : i32
    %c0_i32_1 = arith.constant 0 : i32
    return %c0_i32, %c0_i32_0 : i32, i32
  }
  func.func @transform_9(%arg0: i32) -> (i32, i32) {
    %c0_i32 = arith.constant 0 : i32
    %c0_i32_0 = arith.constant 0 : i32
    %c0_i32_1 = arith.constant 0 : i32
    return %c0_i32, %c0_i32_0 : i32, i32
  }
  func.func @transform_10(%arg0: i32) -> (i32, i32) {
    %c0_i32 = arith.constant 0 : i32
    %c0_i32_0 = arith.constant 0 : i32
    %c0_i32_1 = arith.constant 0 : i32
    return %c0_i32, %c0_i32_0 : i32, i32
  }
  func.func @transform_11(%arg0: i32) -> (i32, i32) {
    %c0_i32 = arith.constant 0 : i32
    %c0_i32_0 = arith.constant 0 : i32
    %c0_i32_1 = arith.constant 0 : i32
    return %c0_i32, %c0_i32_0 : i32, i32
  }
  func.func @transform_12(%arg0: i32) -> (i32, i32) {
    %c0_i32 = arith.constant 0 : i32
    %c0_i32_0 = arith.constant 0 : i32
    %c0_i32_1 = arith.constant 0 : i32
    return %c0_i32, %c0_i32_0 : i32, i32
  }
  func.func @transform_13(%arg0: i32) -> (i32, i32) {
    %c0_i32 = arith.constant 0 : i32
    %c0_i32_0 = arith.constant 0 : i32
    %c0_i32_1 = arith.constant 0 : i32
    return %c0_i32, %c0_i32_0 : i32, i32
  }
  func.func @transform_14(%arg0: i32) -> (i32, i32) {
    %c0_i32 = arith.constant 0 : i32
    %c0_i32_0 = arith.constant 0 : i32
    %c0_i32_1 = arith.constant 0 : i32
    return %c0_i32, %c0_i32_0 : i32, i32
  }
  func.func @transform_15(%arg0: i32) -> (i32, i32) {
    %c0_i32 = arith.constant 0 : i32
    %c0_i32_0 = arith.constant 0 : i32
    return %arg0, %c0_i32 : i32, i32
  }
}

</mosaic_0001>

<llo_original>
// kernel: tpu_custom_call.1
$region0: #{tpu_custom_call.1}
  #allocation0 [shape = 'u32[]', space=smem, size = 0x4, offset = 0x4, fixed_abs, tag = 'smem constant byte address 0x4 - core index']
  #allocation1 [shape = 'u32[144,128]{1,0:T(1,128)}', space=vmem, size = 0x12000, scoped, tag = 'internal scratch']
  #allocation2 [shape = 'f32[1]{0:T(128)S(6)}', space=smem, size = 0x200, scoped, tag = 'scoped memory for tpu_custom_call.1']
  %s0 = inlined_call_operand.<no memory space> [shape: f32[1], index: 0, kind: input, shape index: {}]
  %s1 = inlined_call_operand.vmem [shape: f32[1008,2], index: 1, kind: input, shape index: {}]
  %s2 = inlined_call_operand.vmem [shape: f32[1,128], index: 2, kind: input, shape index: {}]
  %s3 = inlined_call_operand.vmem [shape: bf16[128,128], index: 3, kind: input, shape index: {}]
  %s4 = inlined_call_operand.vmem [shape: f32[1,128], index: 4, kind: input, shape index: {}]
  %s5 = inlined_call_operand.vmem [shape: bf16[128,128], index: 5, kind: input, shape index: {}]
  %s6 = inlined_call_operand.vmem [shape: f32[1,128], index: 6, kind: input, shape index: {}]
  %s7 = inlined_call_operand.vmem [shape: bf16[128,128], index: 7, kind: input, shape index: {}]
  %s8 = inlined_call_operand.vmem [shape: f32[1,128], index: 8, kind: input, shape index: {}]
  %s9 = inlined_call_operand.vmem [shape: bf16[128,128], index: 9, kind: input, shape index: {}]
  %s10 = inlined_call_operand.vmem [shape: f32[1,128], index: 10, kind: input, shape index: {}]
  %s11 = inlined_call_operand.vmem [shape: bf16[128,128], index: 11, kind: input, shape index: {}]
  %s12 = inlined_call_operand.vmem [shape: f32[1,128], index: 12, kind: input, shape index: {}]
  %s13 = inlined_call_operand.vmem [shape: f32[1,128], index: 13, kind: input, shape index: {}]
  %s14 = inlined_call_operand.vmem [shape: f32[1,2], index: 14, kind: input, shape index: {}]
  %s15 = inlined_call_operand.vmem [shape: f32[1008,2], index: 15, kind: output, shape index: {}]
  %s16 = sld [smem:[#allocation0]]
  $region93: #{tpu_custom_call.1} parent=0
    _
  %s18 = ssub.s32 1, %s16
  %s19 = scalar_select 0, %s18, %s16
  %20 = sst [smem:[#allocation2]] %s0
  loop: start=0, step=1, limit=4
  $region2: #{tpu_custom_call.1} parent=0 // loop_pre_header
    _
  $region3: #{tpu_custom_call.1} parent=0 // loop_header
    %s22 = sphi 0, %s26
    %p23 = scmp.ge.s32.totalorder %s22, 4
    %s30 = sphi 0, %s30
    %s32 = sphi 0, %s30
    %s33 = sphi 0, %s32
    %s47 = sphi 0, %s33
    %s53 = sphi 0, %s55
    %s56 = sphi 0, %s53
    %s57 = sphi 0, %s56
    %s73 = sphi 0, %s57
    %s77 = sphi 0, %s77
    %s79 = sphi 0, %s77
    %s80 = sphi 0, %s79
    %s94 = sphi 0, %s80
    %s98 = sphi 0, %s98
    %s100 = sphi 0, %s98
    %s101 = sphi 0, %s100
    %s115 = sphi 0, %s101
    %s119 = sphi 0, %s119
    %s121 = sphi 0, %s119
    %s122 = sphi 0, %s121
    %s136 = sphi 0, %s122
    %s140 = sphi 0, %s140
    %s142 = sphi 0, %s140
    %s143 = sphi 0, %s142
    %s157 = sphi 0, %s143
    %s161 = sphi 0, %s161
    %s163 = sphi 0, %s161
    %s164 = sphi 0, %s163
    %s178 = sphi 0, %s164
    %s182 = sphi 0, %s182
    %s184 = sphi 0, %s182
    %s185 = sphi 0, %s184
    %s199 = sphi 0, %s185
    %s203 = sphi 0, %s203
    %s205 = sphi 0, %s203
    %s206 = sphi 0, %s205
    %s220 = sphi 0, %s206
    %s224 = sphi 0, %s224
    %s226 = sphi 0, %s224
    %s227 = sphi 0, %s226
    %s241 = sphi 0, %s227
    %s245 = sphi 0, %s245
    %s247 = sphi 0, %s245
    %s248 = sphi 0, %s247
    %s262 = sphi 0, %s248
    %s266 = sphi 0, %s266
    %s268 = sphi 0, %s266
    %s269 = sphi 0, %s268
    %s283 = sphi 0, %s269
    %s287 = sphi 0, %s287
    %s289 = sphi 0, %s287
    %s290 = sphi 0, %s289
    %s304 = sphi 0, %s290
    %s308 = sphi 0, %s308
    %s310 = sphi 0, %s308
    %s311 = sphi 0, %s310
    %s325 = sphi 0, %s311
    %s329 = sphi 0, %s329
    %s331 = sphi 0, %s329
    %s332 = sphi 0, %s331
    %s346 = sphi 0, %s332
    %s352 = sphi 0, %s354
    %s355 = sphi 0, %s352
    %s356 = sphi 0, %s355
    %s372 = sphi 0, %s356
  $region4: #{tpu_custom_call.1} parent=0 // loop_header_branch
    %25 = sbr.rel (%p23) target = $region8
  $region5: #{tpu_custom_call.1} parent=0 // loop_body
    %s27 = ssub.s32 %s22, 1
    %s28 = ssub.s32 %s22, 2
    %s29 = sadd.s32 %s22, 1
    %s31 = sadd.s32 %s30, 1
    %p34 = scmp.eq.s32.totalorder %s22, 1
    %p35 = scmp.ne.s32.totalorder %s30, %s32
    %p36 = scmp.eq.s32.totalorder %s22, 0
    %p37 = por %p35, %p36
    %p38 = scmp.ne.s32.totalorder %s30, %s32
    %p39 = scmp.eq.s32.totalorder %s27, 1
    %p40 = por %p38, %p39
    %p41 = scmp.ne.s32.totalorder %s32, %s33
    %p42 = scmp.eq.s32.totalorder %s27, 0
    %p43 = por %p41, %p42
    %p44 = scmp.ne.s32.totalorder %s32, %s33
    %p45 = scmp.eq.s32.totalorder %s28, 1
    %p46 = por %p44, %p45
    %p48 = scmp.ne.s32.totalorder %s33, %s47
    %p49 = scmp.eq.s32.totalorder %s28, 0
    %p50 = por %p48, %p49
    %s51 = ssub.s32 %s22, %s29
    %p52 = scmp.eq.s32.totalorder %s51, 0
    %s54 = sadd.s32 %s53, 1
    %s55 = scalar_select %p52, %s53, %s54
    %p58 = pneg %p52
    %p59 = scmp.eq.s32.totalorder %s22, 1
    %p60 = por %p58, %p59
    %p61 = scmp.ne.s32.totalorder %s53, %s56
    %p62 = scmp.eq.s32.totalorder %s22, 0
    %p63 = por %p61, %p62
    %p64 = scmp.ne.s32.totalorder %s53, %s56
    %p65 = scmp.eq.s32.totalorder %s27, 1
    %p66 = por %p64, %p65
    %p67 = scmp.ne.s32.totalorder %s56, %s57
    %p68 = scmp.eq.s32.totalorder %s27, 0
    %p69 = por %p67, %p68
    %p70 = scmp.ne.s32.totalorder %s56, %s57
    %p71 = scmp.eq.s32.totalorder %s28, 1
    %p72 = por %p70, %p71
    %p74 = scmp.ne.s32.totalorder %s57, %s73
    %p75 = scmp.eq.s32.totalorder %s28, 0
    %p76 = por %p74, %p75
    %s78 = sadd.s32 %s77, 1
    %p81 = scmp.eq.s32.totalorder %s22, 1
    %p82 = scmp.ne.s32.totalorder %s77, %s79
    %p83 = scmp.eq.s32.totalorder %s22, 0
    %p84 = por %p82, %p83
    %p85 = scmp.ne.s32.totalorder %s77, %s79
    %p86 = scmp.eq.s32.totalorder %s27, 1
    %p87 = por %p85, %p86
    %p88 = scmp.ne.s32.totalorder %s79, %s80
    %p89 = scmp.eq.s32.totalorder %s27, 0
    %p90 = por %p88, %p89
    %p91 = scmp.ne.s32.totalorder %s79, %s80
    %p92 = scmp.eq.s32.totalorder %s28, 1
    %p93 = por %p91, %p92
    %p95 = scmp.ne.s32.totalorder %s80, %s94
    %p96 = scmp.eq.s32.totalorder %s28, 0
    %p97 = por %p95, %p96
    %s99 = sadd.s32 %s98, 1
    %p102 = scmp.eq.s32.totalorder %s22, 1
    %p103 = scmp.ne.s32.totalorder %s98, %s100
    %p104 = scmp.eq.s32.totalorder %s22, 0
    %p105 = por %p103, %p104
    %p106 = scmp.ne.s32.totalorder %s98, %s100
    %p107 = scmp.eq.s32.totalorder %s27, 1
    %p108 = por %p106, %p107
    %p109 = scmp.ne.s32.totalorder %s100, %s101
    %p110 = scmp.eq.s32.totalorder %s27, 0
    %p111 = por %p109, %p110
    %p112 = scmp.ne.s32.totalorder %s100, %s101
    %p113 = scmp.eq.s32.totalorder %s28, 1
    %p114 = por %p112, %p113
    %p116 = scmp.ne.s32.totalorder %s101, %s115
    %p117 = scmp.eq.s32.totalorder %s28, 0
    %p118 = por %p116, %p117
    %s120 = sadd.s32 %s119, 1
    %p123 = scmp.eq.s32.totalorder %s22, 1
    %p124 = scmp.ne.s32.totalorder %s119, %s121
    %p125 = scmp.eq.s32.totalorder %s22, 0
    %p126 = por %p124, %p125
    %p127 = scmp.ne.s32.totalorder %s119, %s121
    %p128 = scmp.eq.s32.totalorder %s27, 1
    %p129 = por %p127, %p128
    %p130 = scmp.ne.s32.totalorder %s121, %s122
    %p131 = scmp.eq.s32.totalorder %s27, 0
    %p132 = por %p130, %p131
    %p133 = scmp.ne.s32.totalorder %s121, %s122
    %p134 = scmp.eq.s32.totalorder %s28, 1
    %p135 = por %p133, %p134
    %p137 = scmp.ne.s32.totalorder %s122, %s136
    %p138 = scmp.eq.s32.totalorder %s28, 0
    %p139 = por %p137, %p138
    %s141 = sadd.s32 %s140, 1
    %p144 = scmp.eq.s32.totalorder %s22, 1
    %p145 = scmp.ne.s32.totalorder %s140, %s142
    %p146 = scmp.eq.s32.totalorder %s22, 0
    %p147 = por %p145, %p146
    %p148 = scmp.ne.s32.totalorder %s140, %s142
    %p149 = scmp.eq.s32.totalorder %s27, 1
    %p150 = por %p148, %p149
    %p151 = scmp.ne.s32.totalorder %s142, %s143
    %p152 = scmp.eq.s32.totalorder %s27, 0
    %p153 = por %p151, %p152
    %p154 = scmp.ne.s32.totalorder %s142, %s143
    %p155 = scmp.eq.s32.totalorder %s28, 1
    %p156 = por %p154, %p155
    %p158 = scmp.ne.s32.totalorder %s143, %s157
    %p159 = scmp.eq.s32.totalorder %s28, 0
    %p160 = por %p158, %p159
    %s162 = sadd.s32 %s161, 1
    %p165 = scmp.eq.s32.totalorder %s22, 1
    %p166 = scmp.ne.s32.totalorder %s161, %s163
    %p167 = scmp.eq.s32.totalorder %s22, 0
    %p168 = por %p166, %p167
    %p169 = scmp.ne.s32.totalorder %s161, %s163
    %p170 = scmp.eq.s32.totalorder %s27, 1
    %p171 = por %p169, %p170
    %p172 = scmp.ne.s32.totalorder %s163, %s164
    %p173 = scmp.eq.s32.totalorder %s27, 0
    %p174 = por %p172, %p173
    %p175 = scmp.ne.s32.totalorder %s163, %s164
    %p176 = scmp.eq.s32.totalorder %s28, 1
    %p177 = por %p175, %p176
    %p179 = scmp.ne.s32.totalorder %s164, %s178
    %p180 = scmp.eq.s32.totalorder %s28, 0
    %p181 = por %p179, %p180
    %s183 = sadd.s32 %s182, 1
    %p186 = scmp.eq.s32.totalorder %s22, 1
    %p187 = scmp.ne.s32.totalorder %s182, %s184
    %p188 = scmp.eq.s32.totalorder %s22, 0
    %p189 = por %p187, %p188
    %p190 = scmp.ne.s32.totalorder %s182, %s184
    %p191 = scmp.eq.s32.totalorder %s27, 1
    %p192 = por %p190, %p191
    %p193 = scmp.ne.s32.totalorder %s184, %s185
    %p194 = scmp.eq.s32.totalorder %s27, 0
    %p195 = por %p193, %p194
    %p196 = scmp.ne.s32.totalorder %s184, %s185
    %p197 = scmp.eq.s32.totalorder %s28, 1
    %p198 = por %p196, %p197
    %p200 = scmp.ne.s32.totalorder %s185, %s199
    %p201 = scmp.eq.s32.totalorder %s28, 0
    %p202 = por %p200, %p201
    %s204 = sadd.s32 %s203, 1
    %p207 = scmp.eq.s32.totalorder %s22, 1
    %p208 = scmp.ne.s32.totalorder %s203, %s205
    %p209 = scmp.eq.s32.totalorder %s22, 0
    %p210 = por %p208, %p209
    %p211 = scmp.ne.s32.totalorder %s203, %s205
    %p212 = scmp.eq.s32.totalorder %s27, 1
    %p213 = por %p211, %p212
    %p214 = scmp.ne.s32.totalorder %s205, %s206
    %p215 = scmp.eq.s32.totalorder %s27, 0
    %p216 = por %p214, %p215
    %p217 = scmp.ne.s32.totalorder %s205, %s206
    %p218 = scmp.eq.s32.totalorder %s28, 1
    %p219 = por %p217, %p218
    %p221 = scmp.ne.s32.totalorder %s206, %s220
    %p222 = scmp.eq.s32.totalorder %s28, 0
    %p223 = por %p221, %p222
    %s225 = sadd.s32 %s224, 1
    %p228 = scmp.eq.s32.totalorder %s22, 1
    %p229 = scmp.ne.s32.totalorder %s224, %s226
    %p230 = scmp.eq.s32.totalorder %s22, 0
    %p231 = por %p229, %p230
    %p232 = scmp.ne.s32.totalorder %s224, %s226
    %p233 = scmp.eq.s32.totalorder %s27, 1
    %p234 = por %p232, %p233
    %p235 = scmp.ne.s32.totalorder %s226, %s227
    %p236 = scmp.eq.s32.totalorder %s27, 0
    %p237 = por %p235, %p236
    %p238 = scmp.ne.s32.totalorder %s226, %s227
    %p239 = scmp.eq.s32.totalorder %s28, 1
    %p240 = por %p238, %p239
    %p242 = scmp.ne.s32.totalorder %s227, %s241
    %p243 = scmp.eq.s32.totalorder %s28, 0
    %p244 = por %p242, %p243
    %s246 = sadd.s32 %s245, 1
    %p249 = scmp.eq.s32.totalorder %s22, 1
    %p250 = scmp.ne.s32.totalorder %s245, %s247
    %p251 = scmp.eq.s32.totalorder %s22, 0
    %p252 = por %p250, %p251
    %p253 = scmp.ne.s32.totalorder %s245, %s247
    %p254 = scmp.eq.s32.totalorder %s27, 1
    %p255 = por %p253, %p254
    %p256 = scmp.ne.s32.totalorder %s247, %s248
    %p257 = scmp.eq.s32.totalorder %s27, 0
    %p258 = por %p256, %p257
    %p259 = scmp.ne.s32.totalorder %s247, %s248
    %p260 = scmp.eq.s32.totalorder %s28, 1
    %p261 = por %p259, %p260
    %p263 = scmp.ne.s32.totalorder %s248, %s262
    %p264 = scmp.eq.s32.totalorder %s28, 0
    %p265 = por %p263, %p264
    %s267 = sadd.s32 %s266, 1
    %p270 = scmp.eq.s32.totalorder %s22, 1
    %p271 = scmp.ne.s32.totalorder %s266, %s268
    %p272 = scmp.eq.s32.totalorder %s22, 0
    %p273 = por %p271, %p272
    %p274 = scmp.ne.s32.totalorder %s266, %s268
    %p275 = scmp.eq.s32.totalorder %s27, 1
    %p276 = por %p274, %p275
    %p277 = scmp.ne.s32.totalorder %s268, %s269
    %p278 = scmp.eq.s32.totalorder %s27, 0
    %p279 = por %p277, %p278
    %p280 = scmp.ne.s32.totalorder %s268, %s269
    %p281 = scmp.eq.s32.totalorder %s28, 1
    %p282 = por %p280, %p281
    %p284 = scmp.ne.s32.totalorder %s269, %s283
    %p285 = scmp.eq.s32.totalorder %s28, 0
    %p286 = por %p284, %p285
    %s288 = sadd.s32 %s287, 1
    %p291 = scmp.eq.s32.totalorder %s22, 1
    %p292 = scmp.ne.s32.totalorder %s287, %s289
    %p293 = scmp.eq.s32.totalorder %s22, 0
    %p294 = por %p292, %p293
    %p295 = scmp.ne.s32.totalorder %s287, %s289
    %p296 = scmp.eq.s32.totalorder %s27, 1
    %p297 = por %p295, %p296
    %p298 = scmp.ne.s32.totalorder %s289, %s290
    %p299 = scmp.eq.s32.totalorder %s27, 0
    %p300 = por %p298, %p299
    %p301 = scmp.ne.s32.totalorder %s289, %s290
    %p302 = scmp.eq.s32.totalorder %s28, 1
    %p303 = por %p301, %p302
    %p305 = scmp.ne.s32.totalorder %s290, %s304
    %p306 = scmp.eq.s32.totalorder %s28, 0
    %p307 = por %p305, %p306
    %s309 = sadd.s32 %s308, 1
    %p312 = scmp.eq.s32.totalorder %s22, 1
    %p313 = scmp.ne.s32.totalorder %s308, %s310
    %p314 = scmp.eq.s32.totalorder %s22, 0
    %p315 = por %p313, %p314
    %p316 = scmp.ne.s32.totalorder %s308, %s310
    %p317 = scmp.eq.s32.totalorder %s27, 1
    %p318 = por %p316, %p317
    %p319 = scmp.ne.s32.totalorder %s310, %s311
    %p320 = scmp.eq.s32.totalorder %s27, 0
    %p321 = por %p319, %p320
    %p322 = scmp.ne.s32.totalorder %s310, %s311
    %p323 = scmp.eq.s32.totalorder %s28, 1
    %p324 = por %p322, %p323
    %p326 = scmp.ne.s32.totalorder %s311, %s325
    %p327 = scmp.eq.s32.totalorder %s28, 0
    %p328 = por %p326, %p327
    %s330 = sadd.s32 %s329, 1
    %p333 = scmp.eq.s32.totalorder %s22, 1
    %p334 = scmp.ne.s32.totalorder %s329, %s331
    %p335 = scmp.eq.s32.totalorder %s22, 0
    %p336 = por %p334, %p335
    %p337 = scmp.ne.s32.totalorder %s329, %s331
    %p338 = scmp.eq.s32.totalorder %s27, 1
    %p339 = por %p337, %p338
    %p340 = scmp.ne.s32.totalorder %s331, %s332
    %p341 = scmp.eq.s32.totalorder %s27, 0
    %p342 = por %p340, %p341
    %p343 = scmp.ne.s32.totalorder %s331, %s332
    %p344 = scmp.eq.s32.totalorder %s28, 1
    %p345 = por %p343, %p344
    %p347 = scmp.ne.s32.totalorder %s332, %s346
    %p348 = scmp.eq.s32.totalorder %s28, 0
    %p349 = por %p347, %p348
    %s350 = ssub.s32 %s22, %s29
    %p351 = scmp.eq.s32.totalorder %s350, 0
    %s353 = sadd.s32 %s352, 1
    %s354 = scalar_select %p351, %s352, %s353
    %p357 = pneg %p351
    %p358 = scmp.eq.s32.totalorder %s22, 1
    %p359 = por %p357, %p358
    %p360 = scmp.ne.s32.totalorder %s352, %s355
    %p361 = scmp.eq.s32.totalorder %s22, 0
    %p362 = por %p360, %p361
    %p363 = scmp.ne.s32.totalorder %s352, %s355
    %p364 = scmp.eq.s32.totalorder %s27, 1
    %p365 = por %p363, %p364
    %p366 = scmp.ne.s32.totalorder %s355, %s356
    %p367 = scmp.eq.s32.totalorder %s27, 0
    %p368 = por %p366, %p367
    %p369 = scmp.ne.s32.totalorder %s355, %s356
    %p370 = scmp.eq.s32.totalorder %s28, 1
    %p371 = por %p369, %p370
    %p373 = scmp.ne.s32.totalorder %s356, %s372
    %p374 = scmp.eq.s32.totalorder %s28, 0
    %p375 = por %p373, %p374
    %p376 = scmp.le.s32.totalorder 1, %s22
    %p377 = scmp.lt.s32.totalorder %s22, 3
    %p378 = pnand %p376, %p377
    %p379 = pneg %p378
    // Predicated region
    $region9: #{tpu_custom_call.1} parent=5 // pred_check
      _
    $region10: #{tpu_custom_call.1} parent=5 // pred_check_branch
      %381 = sbr.rel (%p378) target = $region12
    $region11: #{tpu_custom_call.1} parent=5 // pred_region
      %s382 = ssub.s32 %s22, 1
      // Predicated region
      $region13: #{tpu_custom_call.1} parent=11 // pred_check
        %p383 = pneg %p43
      $region14: #{tpu_custom_call.1} parent=11 // pred_check_branch
        %385 = sbr.rel (%p383) target = $region16
      $region15: #{tpu_custom_call.1} parent=11 // pred_region
        _
      $region16: #{tpu_custom_call.1} parent=11 // pred_fallthru
        _
      // Predicated region
      $region17: #{tpu_custom_call.1} parent=11 // pred_check
        %p386 = pneg %p90
      $region18: #{tpu_custom_call.1} parent=11 // pred_check_branch
        %388 = sbr.rel (%p386) target = $region20
      $region19: #{tpu_custom_call.1} parent=11 // pred_region
        _
      $region20: #{tpu_custom_call.1} parent=11 // pred_fallthru
        _
      // Predicated region
      $region21: #{tpu_custom_call.1} parent=11 // pred_check
        %p389 = pneg %p111
      $region22: #{tpu_custom_call.1} parent=11 // pred_check_branch
        %391 = sbr.rel (%p389) target = $region24
      $region23: #{tpu_custom_call.1} parent=11 // pred_region
        _
      $region24: #{tpu_custom_call.1} parent=11 // pred_fallthru
        _
      // Predicated region
      $region25: #{tpu_custom_call.1} parent=11 // pred_check
        %p392 = pneg %p132
      $region26: #{tpu_custom_call.1} parent=11 // pred_check_branch
        %394 = sbr.rel (%p392) target = $region28
      $region27: #{tpu_custom_call.1} parent=11 // pred_region
        _
      $region28: #{tpu_custom_call.1} parent=11 // pred_fallthru
        _
      // Predicated region
      $region29: #{tpu_custom_call.1} parent=11 // pred_check
        %p395 = pneg %p153
      $region30: #{tpu_custom_call.1} parent=11 // pred_check_branch
        %397 = sbr.rel (%p395) target = $region32
      $region31: #{tpu_custom_call.1} parent=11 // pred_region
        _
      $region32: #{tpu_custom_call.1} parent=11 // pred_fallthru
        _
      // Predicated region
      $region33: #{tpu_custom_call.1} parent=11 // pred_check
        %p398 = pneg %p174
      $region34: #{tpu_custom_call.1} parent=11 // pred_check_branch
        %400 = sbr.rel (%p398) target = $region36
      $region35: #{tpu_custom_call.1} parent=11 // pred_region
        _
      $region36: #{tpu_custom_call.1} parent=11 // pred_fallthru
        _
      // Predicated region
      $region37: #{tpu_custom_call.1} parent=11 // pred_check
        %p401 = pneg %p195
      $region38: #{tpu_custom_call.1} parent=11 // pred_check_branch
        %403 = sbr.rel (%p401) target = $region40
      $region39: #{tpu_custom_call.1} parent=11 // pred_region
        _
      $region40: #{tpu_custom_call.1} parent=11 // pred_fallthru
        _
      // Predicated region
      $region41: #{tpu_custom_call.1} parent=11 // pred_check
        %p404 = pneg %p216
      $region42: #{tpu_custom_call.1} parent=11 // pred_check_branch
        %406 = sbr.rel (%p404) target = $region44
      $region43: #{tpu_custom_call.1} parent=11 // pred_region
        _
      $region44: #{tpu_custom_call.1} parent=11 // pred_fallthru
        _
      // Predicated region
      $region45: #{tpu_custom_call.1} parent=11 // pred_check
        %p407 = pneg %p237
      $region46: #{tpu_custom_call.1} parent=11 // pred_check_branch
        %409 = sbr.rel (%p407) target = $region48
      $region47: #{tpu_custom_call.1} parent=11 // pred_region
        _
      $region48: #{tpu_custom_call.1} parent=11 // pred_fallthru
        _
      // Predicated region
      $region49: #{tpu_custom_call.1} parent=11 // pred_check
        %p410 = pneg %p258
      $region50: #{tpu_custom_call.1} parent=11 // pred_check_branch
        %412 = sbr.rel (%p410) target = $region52
      $region51: #{tpu_custom_call.1} parent=11 // pred_region
        _
      $region52: #{tpu_custom_call.1} parent=11 // pred_fallthru
        _
      // Predicated region
      $region53: #{tpu_custom_call.1} parent=11 // pred_check
        %p413 = pneg %p279
      $region54: #{tpu_custom_call.1} parent=11 // pred_check_branch
        %415 = sbr.rel (%p413) target = $region56
      $region55: #{tpu_custom_call.1} parent=11 // pred_region
        _
      $region56: #{tpu_custom_call.1} parent=11 // pred_fallthru
        _
      // Predicated region
      $region57: #{tpu_custom_call.1} parent=11 // pred_check
        %p416 = pneg %p300
      $region58: #{tpu_custom_call.1} parent=11 // pred_check_branch
        %418 = sbr.rel (%p416) target = $region60
      $region59: #{tpu_custom_call.1} parent=11 // pred_region
        _
      $region60: #{tpu_custom_call.1} parent=11 // pred_fallthru
        _
      // Predicated region
      $region61: #{tpu_custom_call.1} parent=11 // pred_check
        %p419 = pneg %p321
      $region62: #{tpu_custom_call.1} parent=11 // pred_check_branch
        %421 = sbr.rel (%p419) target = $region64
      $region63: #{tpu_custom_call.1} parent=11 // pred_region
        _
      $region64: #{tpu_custom_call.1} parent=11 // pred_fallthru
        _
      // Predicated region
      $region65: #{tpu_custom_call.1} parent=11 // pred_check
        %p422 = pneg %p342
      $region66: #{tpu_custom_call.1} parent=11 // pred_check_branch
        %424 = sbr.rel (%p422) target = $region68
      $region67: #{tpu_custom_call.1} parent=11 // pred_region
        _
      $region68: #{tpu_custom_call.1} parent=11 // pred_fallthru
        _
    $region12: #{tpu_custom_call.1} parent=5 // pred_fallthru
      _
    %p425 = scmp.lt.s32.totalorder %s22, 2
    // Predicated region
    $region69: #{tpu_custom_call.1} parent=5 // pred_check
      %p426 = pneg %p425
    $region70: #{tpu_custom_call.1} parent=5 // pred_check_branch
      %428 = sbr.rel (%p426) target = $region72
    $region71: #{tpu_custom_call.1} parent=5 // pred_region
      // Predicated region
      $region73: #{tpu_custom_call.1} parent=71 // pred_check
        %p429 = pneg %p63
      $region74: #{tpu_custom_call.1} parent=71 // pred_check_branch
        %431 = sbr.rel (%p429) target = $region76
      $region75: #{tpu_custom_call.1} parent=71 // pred_region
        %s432 = smul.u32 63, %s22
        %p433 = scmp.lt.s32.totalorder %s432, 125
        %s434 = scalar_select %p433, %s432, 125
        %s435 = smul.addr %s434, 8
        %s436 = scalar_lea.vmem %s1, %s435
        %s437 = smul.u32 63, %s22
      $region76: #{tpu_custom_call.1} parent=71 // pred_fallthru
        _
    $region72: #{tpu_custom_call.1} parent=5 // pred_fallthru
      _
    %p438 = scmp.le.s32.totalorder 1, %s22
    %p439 = scmp.lt.s32.totalorder %s22, 3
    %p440 = pnand %p438, %p439
    %p441 = pneg %p440
    // Predicated region
    $region77: #{tpu_custom_call.1} parent=5 // pred_check
      _
    $region78: #{tpu_custom_call.1} parent=5 // pred_check_branch
      %443 = sbr.rel (%p440) target = $region80
    $region79: #{tpu_custom_call.1} parent=5 // pred_region
      %s444 = ssub.s32 %s22, 1
      %p445 = pneg %p43
      %p446 = pneg %p40
      %s447 = smul.u32 63, %s27
      %p448 = scmp.lt.s32.totalorder %s447, 125
      %s449 = scalar_select %p448, %s447, 125
      %s450 = smul.addr %s449, 8
      %s451 = scalar_lea.vmem %s1, %s450
      %p452 = pneg %p69
      %p453 = pneg %p66
      %p454 = pneg %p90
      %p455 = pneg %p87
      %p456 = pneg %p111
      %p457 = pneg %p108
      %p458 = pneg %p132
      %p459 = pneg %p129
      %p460 = pneg %p153
      %p461 = pneg %p150
      %p462 = pneg %p174
      %p463 = pneg %p171
      %p464 = pneg %p195
      %p465 = pneg %p192
      %p466 = pneg %p216
      %p467 = pneg %p213
      %p468 = pneg %p237
      %p469 = pneg %p234
      %p470 = pneg %p258
      %p471 = pneg %p255
      %p472 = pneg %p279
      %p473 = pneg %p276
      %p474 = pneg %p300
      %p475 = pneg %p297
      %p476 = pneg %p321
      %p477 = pneg %p318
      %p478 = pneg %p342
      %p479 = pneg %p339
      %p480 = pneg %p368
      %p481 = pneg %p365
      %s482 = smul.u32 63, %s27
      %p483 = scmp.lt.s32.totalorder %s482, 125
      %s484 = scalar_select %p483, %s482, 125
      %s485 = smul.addr %s484, 8
      %s486 = scalar_lea.vmem %s15, %s485
      %s487 = smul.u32 63, %s27
      %p488 = scmp.lt.s32.totalorder %s487, 125
      %s489 = scalar_select %p488, %s487, 125
      %s490 = smul.addr %s489, 8
      %s491 = scalar_lea.vmem %s1, %s490
      %s492 = smul.u32 63, %s27
      %s493 = smul.u32 63, %s27
      %p494 = scmp.lt.s32.totalorder %s493, 125
      %s495 = scalar_select %p494, %s493, 125
      %s496 = smul.addr %s495, 8
      %s497 = scalar_lea.vmem %s15, %s496
      %s498 = smul.u32 63, %s27
      %s500 = sld [smem:[#allocation2]]
      %v501 = vld [vmem:[%s491] sm:$0xff]
      %v502 = vld [vmem:[%s491 + $0x8] sm:$0xff]
      %v503 = vld [vmem:[%s491 + $0x10] sm:$0xff]
      %v504 = vld [vmem:[%s491 + $0x18] sm:$0xff]
      %v505 = vld [vmem:[%s491 + $0x20] sm:$0xff]
      %v506 = vld [vmem:[%s491 + $0x28] sm:$0xff]
      %v507 = vld [vmem:[%s491 + $0x30] sm:$0xff]
      %v508 = vld [vmem:[%s491 + $0x38] sm:$0xff]
      %v509 = vld [vmem:[%s491 + $0x40] sm:$0xff]
      %v510 = vld [vmem:[%s491 + $0x48] sm:$0xff]
      %v511 = vld [vmem:[%s491 + $0x50] sm:$0xff]
      %v512 = vld [vmem:[%s491 + $0x58] sm:$0xff]
      %v513 = vld [vmem:[%s491 + $0x60] sm:$0xff]
      %v514 = vld [vmem:[%s491 + $0x68] sm:$0xff]
      %v515 = vld [vmem:[%s491 + $0x70] sm:$0xff]
      %v516 = vld [vmem:[%s491 + $0x78] sm:$0xff]
      %v517 = vld [vmem:[%s491 + $0x80] sm:$0xff]
      %v518 = vld [vmem:[%s491 + $0x88] sm:$0xff]
      %v519 = vld [vmem:[%s491 + $0x90] sm:$0xff]
      %v520 = vld [vmem:[%s491 + $0x98] sm:$0xff]
      %v521 = vld [vmem:[%s491 + $0xa0] sm:$0xff]
      %v522 = vld [vmem:[%s491 + $0xa8] sm:$0xff]
      %v523 = vld [vmem:[%s491 + $0xb0] sm:$0xff]
      %v524 = vld [vmem:[%s491 + $0xb8] sm:$0xff]
      %v525 = vld [vmem:[%s491 + $0xc0] sm:$0xff]
      %v526 = vld [vmem:[%s491 + $0xc8] sm:$0xff]
      %v527 = vld [vmem:[%s491 + $0xd0] sm:$0xff]
      %v528 = vld [vmem:[%s491 + $0xd8] sm:$0xff]
      %v529 = vld [vmem:[%s491 + $0xe0] sm:$0xff]
      %v530 = vld [vmem:[%s491 + $0xe8] sm:$0xff]
      %v531 = vld [vmem:[%s491 + $0xf0] sm:$0xff]
      %v532 = vld [vmem:[%s491 + $0xf8] sm:$0xff]
      %v533 = vld [vmem:[%s491 + $0x100] sm:$0xff]
      %v534 = vld [vmem:[%s491 + $0x108] sm:$0xff]
      %v535 = vld [vmem:[%s491 + $0x110] sm:$0xff]
      %v536 = vld [vmem:[%s491 + $0x118] sm:$0xff]
      %v537 = vld [vmem:[%s491 + $0x120] sm:$0xff]
      %v538 = vld [vmem:[%s491 + $0x128] sm:$0xff]
      %v539 = vld [vmem:[%s491 + $0x130] sm:$0xff]
      %v540 = vld [vmem:[%s491 + $0x138] sm:$0xff]
      %v541 = vld [vmem:[%s491 + $0x140] sm:$0xff]
      %v542 = vld [vmem:[%s491 + $0x148] sm:$0xff]
      %v543 = vld [vmem:[%s491 + $0x150] sm:$0xff]
      %v544 = vld [vmem:[%s491 + $0x158] sm:$0xff]
      %v545 = vld [vmem:[%s491 + $0x160] sm:$0xff]
      %v546 = vld [vmem:[%s491 + $0x168] sm:$0xff]
      %v547 = vld [vmem:[%s491 + $0x170] sm:$0xff]
      %v548 = vld [vmem:[%s491 + $0x178] sm:$0xff]
      %v549 = vld [vmem:[%s491 + $0x180] sm:$0xff]
      %v550 = vld [vmem:[%s491 + $0x188] sm:$0xff]
      %v551 = vld [vmem:[%s491 + $0x190] sm:$0xff]
      %v552 = vld [vmem:[%s491 + $0x198] sm:$0xff]
      %v553 = vld [vmem:[%s491 + $0x1a0] sm:$0xff]
      %v554 = vld [vmem:[%s491 + $0x1a8] sm:$0xff]
      %v555 = vld [vmem:[%s491 + $0x1b0] sm:$0xff]
      %v556 = vld [vmem:[%s491 + $0x1b8] sm:$0xff]
      %v557 = vld [vmem:[%s491 + $0x1c0] sm:$0xff]
      %v558 = vld [vmem:[%s491 + $0x1c8] sm:$0xff]
      %v559 = vld [vmem:[%s491 + $0x1d0] sm:$0xff]
      %v560 = vld [vmem:[%s491 + $0x1d8] sm:$0xff]
      %v561 = vld [vmem:[%s491 + $0x1e0] sm:$0xff]
      %v562 = vld [vmem:[%s491 + $0x1e8] sm:$0xff]
      %v563 = vld [vmem:[%s491 + $0x1f0] sm:$0xff]
      %v564 = vld [vmem:[%s2] sm:$0x1]
      %v565 = vlaneseq
      %v566 = vand.u32 %v565, 127
      %vm567 = vcmp.lt.s32.totalorder %v566, 64
      %569 = vset.pattern.permute.xlu0 0
      %570 = vperm.xlu0 %569, %v501
      %v571 = vpop.permute.xlu0 %570
      %574 = vset.pattern.permute.xlu0 0
      %575 = vperm.xlu0 %574, %v502
      %v576 = vpop.permute.xlu0 %575
      %579 = vset.pattern.permute.xlu0 0
      %580 = vperm.xlu0 %579, %v503
      %v581 = vpop.permute.xlu0 %580
      %584 = vset.pattern.permute.xlu0 0
      %585 = vperm.xlu0 %584, %v504
      %v586 = vpop.permute.xlu0 %585
      %589 = vset.pattern.permute.xlu0 0
      %590 = vperm.xlu0 %589, %v505
      %v591 = vpop.permute.xlu0 %590
      %594 = vset.pattern.permute.xlu0 0
      %595 = vperm.xlu0 %594, %v506
      %v596 = vpop.permute.xlu0 %595
      %599 = vset.pattern.permute.xlu0 0
      %600 = vperm.xlu0 %599, %v507
      %v601 = vpop.permute.xlu0 %600
      %604 = vset.pattern.permute.xlu0 0
      %605 = vperm.xlu0 %604, %v508
      %v606 = vpop.permute.xlu0 %605
      %609 = vset.pattern.permute.xlu0 0
      %610 = vperm.xlu0 %609, %v509
      %v611 = vpop.permute.xlu0 %610
      %614 = vset.pattern.permute.xlu0 0
      %615 = vperm.xlu0 %614, %v510
      %v616 = vpop.permute.xlu0 %615
      %619 = vset.pattern.permute.xlu0 0
      %620 = vperm.xlu0 %619, %v511
      %v621 = vpop.permute.xlu0 %620
      %624 = vset.pattern.permute.xlu0 0
      %625 = vperm.xlu0 %624, %v512
      %v626 = vpop.permute.xlu0 %625
      %629 = vset.pattern.permute.xlu0 0
      %630 = vperm.xlu0 %629, %v513
      %v631 = vpop.permute.xlu0 %630
      %634 = vset.pattern.permute.xlu0 0
      %635 = vperm.xlu0 %634, %v514
      %v636 = vpop.permute.xlu0 %635
      %639 = vset.pattern.permute.xlu0 0
      %640 = vperm.xlu0 %639, %v515
      %v641 = vpop.permute.xlu0 %640
      %644 = vset.pattern.permute.xlu0 0
      %645 = vperm.xlu0 %644, %v516
      %v646 = vpop.permute.xlu0 %645
      %649 = vset.pattern.permute.xlu0 0
      %650 = vperm.xlu0 %649, %v517
      %v651 = vpop.permute.xlu0 %650
      %654 = vset.pattern.permute.xlu0 0
      %655 = vperm.xlu0 %654, %v518
      %v656 = vpop.permute.xlu0 %655
      %659 = vset.pattern.permute.xlu0 0
      %660 = vperm.xlu0 %659, %v519
      %v661 = vpop.permute.xlu0 %660
      %664 = vset.pattern.permute.xlu0 0
      %665 = vperm.xlu0 %664, %v520
      %v666 = vpop.permute.xlu0 %665
      %669 = vset.pattern.permute.xlu0 0
      %670 = vperm.xlu0 %669, %v521
      %v671 = vpop.permute.xlu0 %670
      %674 = vset.pattern.permute.xlu0 0
      %675 = vperm.xlu0 %674, %v522
      %v676 = vpop.permute.xlu0 %675
      %679 = vset.pattern.permute.xlu0 0
      %680 = vperm.xlu0 %679, %v523
      %v681 = vpop.permute.xlu0 %680
      %684 = vset.pattern.permute.xlu0 0
      %685 = vperm.xlu0 %684, %v524
      %v686 = vpop.permute.xlu0 %685
      %689 = vset.pattern.permute.xlu0 0
      %690 = vperm.xlu0 %689, %v525
      %v691 = vpop.permute.xlu0 %690
      %694 = vset.pattern.permute.xlu0 0
      %695 = vperm.xlu0 %694, %v526
      %v696 = vpop.permute.xlu0 %695
      %699 = vset.pattern.permute.xlu0 0
      %700 = vperm.xlu0 %699, %v527
      %v701 = vpop.permute.xlu0 %700
      %704 = vset.pattern.permute.xlu0 0
      %705 = vperm.xlu0 %704, %v528
      %v706 = vpop.permute.xlu0 %705
      %709 = vset.pattern.permute.xlu0 0
      %710 = vperm.xlu0 %709, %v529
      %v711 = vpop.permute.xlu0 %710
      %714 = vset.pattern.permute.xlu0 0
      %715 = vperm.xlu0 %714, %v530
      %v716 = vpop.permute.xlu0 %715
      %719 = vset.pattern.permute.xlu0 0
      %720 = vperm.xlu0 %719, %v531
      %v721 = vpop.permute.xlu0 %720
      %724 = vset.pattern.permute.xlu0 0
      %725 = vperm.xlu0 %724, %v532
      %v726 = vpop.permute.xlu0 %725
      %729 = vset.pattern.permute.xlu0 0
      %730 = vperm.xlu0 %729, %v533
      %v731 = vpop.permute.xlu0 %730
      %734 = vset.pattern.permute.xlu0 0
      %735 = vperm.xlu0 %734, %v534
      %v736 = vpop.permute.xlu0 %735
      %739 = vset.pattern.permute.xlu0 0
      %740 = vperm.xlu0 %739, %v535
      %v741 = vpop.permute.xlu0 %740
      %744 = vset.pattern.permute.xlu0 0
      %745 = vperm.xlu0 %744, %v536
      %v746 = vpop.permute.xlu0 %745
      %749 = vset.pattern.permute.xlu0 0
      %750 = vperm.xlu0 %749, %v537
      %v751 = vpop.permute.xlu0 %750
      %754 = vset.pattern.permute.xlu0 0
      %755 = vperm.xlu0 %754, %v538
      %v756 = vpop.permute.xlu0 %755
      %759 = vset.pattern.permute.xlu0 0
      %760 = vperm.xlu0 %759, %v539
      %v761 = vpop.permute.xlu0 %760
      %764 = vset.pattern.permute.xlu0 0
      %765 = vperm.xlu0 %764, %v540
      %v766 = vpop.permute.xlu0 %765
      %769 = vset.pattern.permute.xlu0 0
      %770 = vperm.xlu0 %769, %v541
      %v771 = vpop.permute.xlu0 %770
      %774 = vset.pattern.permute.xlu0 0
      %775 = vperm.xlu0 %774, %v542
      %v776 = vpop.permute.xlu0 %775
      %779 = vset.pattern.permute.xlu0 0
      %780 = vperm.xlu0 %779, %v543
      %v781 = vpop.permute.xlu0 %780
      %784 = vset.pattern.permute.xlu0 0
      %785 = vperm.xlu0 %784, %v544
      %v786 = vpop.permute.xlu0 %785
      %789 = vset.pattern.permute.xlu0 0
      %790 = vperm.xlu0 %789, %v545
      %v791 = vpop.permute.xlu0 %790
      %794 = vset.pattern.permute.xlu0 0
      %795 = vperm.xlu0 %794, %v546
      %v796 = vpop.permute.xlu0 %795
      %799 = vset.pattern.permute.xlu0 0
      %800 = vperm.xlu0 %799, %v547
      %v801 = vpop.permute.xlu0 %800
      %804 = vset.pattern.permute.xlu0 0
      %805 = vperm.xlu0 %804, %v548
      %v806 = vpop.permute.xlu0 %805
      %809 = vset.pattern.permute.xlu0 0
      %810 = vperm.xlu0 %809, %v549
      %v811 = vpop.permute.xlu0 %810
      %814 = vset.pattern.permute.xlu0 0
      %815 = vperm.xlu0 %814, %v550
      %v816 = vpop.permute.xlu0 %815
      %819 = vset.pattern.permute.xlu0 0
      %820 = vperm.xlu0 %819, %v551
      %v821 = vpop.permute.xlu0 %820
      %824 = vset.pattern.permute.xlu0 0
      %825 = vperm.xlu0 %824, %v552
      %v826 = vpop.permute.xlu0 %825
      %829 = vset.pattern.permute.xlu0 0
      %830 = vperm.xlu0 %829, %v553
      %v831 = vpop.permute.xlu0 %830
      %834 = vset.pattern.permute.xlu0 0
      %835 = vperm.xlu0 %834, %v554
      %v836 = vpop.permute.xlu0 %835
      %839 = vset.pattern.permute.xlu0 0
      %840 = vperm.xlu0 %839, %v555
      %v841 = vpop.permute.xlu0 %840
      %844 = vset.pattern.permute.xlu0 0
      %845 = vperm.xlu0 %844, %v556
      %v846 = vpop.permute.xlu0 %845
      %849 = vset.pattern.permute.xlu0 0
      %850 = vperm.xlu0 %849, %v557
      %v851 = vpop.permute.xlu0 %850
      %854 = vset.pattern.permute.xlu0 0
      %855 = vperm.xlu0 %854, %v558
      %v856 = vpop.permute.xlu0 %855
      %859 = vset.pattern.permute.xlu0 0
      %860 = vperm.xlu0 %859, %v559
      %v861 = vpop.permute.xlu0 %860
      %864 = vset.pattern.permute.xlu0 0
      %865 = vperm.xlu0 %864, %v560
      %v866 = vpop.permute.xlu0 %865
      %869 = vset.pattern.permute.xlu0 0
      %870 = vperm.xlu0 %869, %v561
      %v871 = vpop.permute.xlu0 %870
      %874 = vset.pattern.permute.xlu0 0
      %875 = vperm.xlu0 %874, %v562
      %v876 = vpop.permute.xlu0 %875
      %879 = vset.pattern.permute.xlu0 0
      %880 = vperm.xlu0 %879, %v563
      %v881 = vpop.permute.xlu0 %880
      %883 = vset.pattern.permute.xlu0 1
      %884 = vperm.xlu0 %883, %v501
      %v885 = vpop.permute.xlu0 %884
      %887 = vset.pattern.permute.xlu0 1
      %888 = vperm.xlu0 %887, %v502
      %v889 = vpop.permute.xlu0 %888
      %891 = vset.pattern.permute.xlu0 1
      %892 = vperm.xlu0 %891, %v503
      %v893 = vpop.permute.xlu0 %892
      %895 = vset.pattern.permute.xlu0 1
      %896 = vperm.xlu0 %895, %v504
      %v897 = vpop.permute.xlu0 %896
      %899 = vset.pattern.permute.xlu0 1
      %900 = vperm.xlu0 %899, %v505
      %v901 = vpop.permute.xlu0 %900
      %903 = vset.pattern.permute.xlu0 1
      %904 = vperm.xlu0 %903, %v506
      %v905 = vpop.permute.xlu0 %904
      %907 = vset.pattern.permute.xlu0 1
      %908 = vperm.xlu0 %907, %v507
      %v909 = vpop.permute.xlu0 %908
      %911 = vset.pattern.permute.xlu0 1
      %912 = vperm.xlu0 %911, %v508
      %v913 = vpop.permute.xlu0 %912
      %915 = vset.pattern.permute.xlu0 1
      %916 = vperm.xlu0 %915, %v509
      %v917 = vpop.permute.xlu0 %916
      %919 = vset.pattern.permute.xlu0 1
      %920 = vperm.xlu0 %919, %v510
      %v921 = vpop.permute.xlu0 %920
      %923 = vset.pattern.permute.xlu0 1
      %924 = vperm.xlu0 %923, %v511
      %v925 = vpop.permute.xlu0 %924
      %927 = vset.pattern.permute.xlu0 1
      %928 = vperm.xlu0 %927, %v512
      %v929 = vpop.permute.xlu0 %928
      %931 = vset.pattern.permute.xlu0 1
      %932 = vperm.xlu0 %931, %v513
      %v933 = vpop.permute.xlu0 %932
      %935 = vset.pattern.permute.xlu0 1
      %936 = vperm.xlu0 %935, %v514
      %v937 = vpop.permute.xlu0 %936
      %939 = vset.pattern.permute.xlu0 1
      %940 = vperm.xlu0 %939, %v515
      %v941 = vpop.permute.xlu0 %940
      %943 = vset.pattern.permute.xlu0 1
      %944 = vperm.xlu0 %943, %v516
      %v945 = vpop.permute.xlu0 %944
      %947 = vset.pattern.permute.xlu0 1
      %948 = vperm.xlu0 %947, %v517
      %v949 = vpop.permute.xlu0 %948
      %951 = vset.pattern.permute.xlu0 1
      %952 = vperm.xlu0 %951, %v518
      %v953 = vpop.permute.xlu0 %952
      %955 = vset.pattern.permute.xlu0 1
      %956 = vperm.xlu0 %955, %v519
      %v957 = vpop.permute.xlu0 %956
      %959 = vset.pattern.permute.xlu0 1
      %960 = vperm.xlu0 %959, %v520
      %v961 = vpop.permute.xlu0 %960
      %963 = vset.pattern.permute.xlu0 1
      %964 = vperm.xlu0 %963, %v521
      %v965 = vpop.permute.xlu0 %964
      %967 = vset.pattern.permute.xlu0 1
      %968 = vperm.xlu0 %967, %v522
      %v969 = vpop.permute.xlu0 %968
      %971 = vset.pattern.permute.xlu0 1
      %972 = vperm.xlu0 %971, %v523
      %v973 = vpop.permute.xlu0 %972
      %975 = vset.pattern.permute.xlu0 1
      %976 = vperm.xlu0 %975, %v524
      %v977 = vpop.permute.xlu0 %976
      %979 = vset.pattern.permute.xlu0 1
      %980 = vperm.xlu0 %979, %v525
      %v981 = vpop.permute.xlu0 %980
      %983 = vset.pattern.permute.xlu0 1
      %984 = vperm.xlu0 %983, %v526
      %v985 = vpop.permute.xlu0 %984
      %987 = vset.pattern.permute.xlu0 1
      %988 = vperm.xlu0 %987, %v527
      %v989 = vpop.permute.xlu0 %988
      %991 = vset.pattern.permute.xlu0 1
      %992 = vperm.xlu0 %991, %v528
      %v993 = vpop.permute.xlu0 %992
      %995 = vset.pattern.permute.xlu0 1
      %996 = vperm.xlu0 %995, %v529
      %v997 = vpop.permute.xlu0 %996
      %999 = vset.pattern.permute.xlu0 1
      %1000 = vperm.xlu0 %999, %v530
      %v1001 = vpop.permute.xlu0 %1000
      %1003 = vset.pattern.permute.xlu0 1
      %1004 = vperm.xlu0 %1003, %v531
      %v1005 = vpop.permute.xlu0 %1004
      %1007 = vset.pattern.permute.xlu0 1
      %1008 = vperm.xlu0 %1007, %v532
      %v1009 = vpop.permute.xlu0 %1008
      %1011 = vset.pattern.permute.xlu0 1
      %1012 = vperm.xlu0 %1011, %v533
      %v1013 = vpop.permute.xlu0 %1012
      %1015 = vset.pattern.permute.xlu0 1
      %1016 = vperm.xlu0 %1015, %v534
      %v1017 = vpop.permute.xlu0 %1016
      %1019 = vset.pattern.permute.xlu0 1
      %1020 = vperm.xlu0 %1019, %v535
      %v1021 = vpop.permute.xlu0 %1020
      %1023 = vset.pattern.permute.xlu0 1
      %1024 = vperm.xlu0 %1023, %v536
      %v1025 = vpop.permute.xlu0 %1024
      %1027 = vset.pattern.permute.xlu0 1
      %1028 = vperm.xlu0 %1027, %v537
      %v1029 = vpop.permute.xlu0 %1028
      %1031 = vset.pattern.permute.xlu0 1
      %1032 = vperm.xlu0 %1031, %v538
      %v1033 = vpop.permute.xlu0 %1032
      %1035 = vset.pattern.permute.xlu0 1
      %1036 = vperm.xlu0 %1035, %v539
      %v1037 = vpop.permute.xlu0 %1036
      %1039 = vset.pattern.permute.xlu0 1
      %1040 = vperm.xlu0 %1039, %v540
      %v1041 = vpop.permute.xlu0 %1040
      %1043 = vset.pattern.permute.xlu0 1
      %1044 = vperm.xlu0 %1043, %v541
      %v1045 = vpop.permute.xlu0 %1044
      %1047 = vset.pattern.permute.xlu0 1
      %1048 = vperm.xlu0 %1047, %v542
      %v1049 = vpop.permute.xlu0 %1048
      %1051 = vset.pattern.permute.xlu0 1
      %1052 = vperm.xlu0 %1051, %v543
      %v1053 = vpop.permute.xlu0 %1052
      %1055 = vset.pattern.permute.xlu0 1
      %1056 = vperm.xlu0 %1055, %v544
      %v1057 = vpop.permute.xlu0 %1056
      %1059 = vset.pattern.permute.xlu0 1
      %1060 = vperm.xlu0 %1059, %v545
      %v1061 = vpop.permute.xlu0 %1060
      %1063 = vset.pattern.permute.xlu0 1
      %1064 = vperm.xlu0 %1063, %v546
      %v1065 = vpop.permute.xlu0 %1064
      %1067 = vset.pattern.permute.xlu0 1
      %1068 = vperm.xlu0 %1067, %v547
      %v1069 = vpop.permute.xlu0 %1068
      %1071 = vset.pattern.permute.xlu0 1
      %1072 = vperm.xlu0 %1071, %v548
      %v1073 = vpop.permute.xlu0 %1072
      %1075 = vset.pattern.permute.xlu0 1
      %1076 = vperm.xlu0 %1075, %v549
      %v1077 = vpop.permute.xlu0 %1076
      %1079 = vset.pattern.permute.xlu0 1
      %1080 = vperm.xlu0 %1079, %v550
      %v1081 = vpop.permute.xlu0 %1080
      %1083 = vset.pattern.permute.xlu0 1
      %1084 = vperm.xlu0 %1083, %v551
      %v1085 = vpop.permute.xlu0 %1084
      %1087 = vset.pattern.permute.xlu0 1
      %1088 = vperm.xlu0 %1087, %v552
      %v1089 = vpop.permute.xlu0 %1088
      %1091 = vset.pattern.permute.xlu0 1
      %1092 = vperm.xlu0 %1091, %v553
      %v1093 = vpop.permute.xlu0 %1092
      %1095 = vset.pattern.permute.xlu0 1
      %1096 = vperm.xlu0 %1095, %v554
      %v1097 = vpop.permute.xlu0 %1096
      %1099 = vset.pattern.permute.xlu0 1
      %1100 = vperm.xlu0 %1099, %v555
      %v1101 = vpop.permute.xlu0 %1100
      %1103 = vset.pattern.permute.xlu0 1
      %1104 = vperm.xlu0 %1103, %v556
      %v1105 = vpop.permute.xlu0 %1104
      %1107 = vset.pattern.permute.xlu0 1
      %1108 = vperm.xlu0 %1107, %v557
      %v1109 = vpop.permute.xlu0 %1108
      %1111 = vset.pattern.permute.xlu0 1
      %1112 = vperm.xlu0 %1111, %v558
      %v1113 = vpop.permute.xlu0 %1112
      %1115 = vset.pattern.permute.xlu0 1
      %1116 = vperm.xlu0 %1115, %v559
      %v1117 = vpop.permute.xlu0 %1116
      %1119 = vset.pattern.permute.xlu0 1
      %1120 = vperm.xlu0 %1119, %v560
      %v1121 = vpop.permute.xlu0 %1120
      %1123 = vset.pattern.permute.xlu0 1
      %1124 = vperm.xlu0 %1123, %v561
      %v1125 = vpop.permute.xlu0 %1124
      %1127 = vset.pattern.permute.xlu0 1
      %1128 = vperm.xlu0 %1127, %v562
      %v1129 = vpop.permute.xlu0 %1128
      %1131 = vset.pattern.permute.xlu0 1
      %1132 = vperm.xlu0 %1131, %v563
      %v1133 = vpop.permute.xlu0 %1132
      %v1135 = vsel %vm567, %v571, %v885
      %v1136 = vsel %vm567, %v576, %v889
      %v1137 = vsel %vm567, %v581, %v893
      %v1138 = vsel %vm567, %v586, %v897
      %v1139 = vsel %vm567, %v591, %v901
      %v1140 = vsel %vm567, %v596, %v905
      %v1141 = vsel %vm567, %v601, %v909
      %v1142 = vsel %vm567, %v606, %v913
      %v1143 = vsel %vm567, %v611, %v917
      %v1144 = vsel %vm567, %v616, %v921
      %v1145 = vsel %vm567, %v621, %v925
      %v1146 = vsel %vm567, %v626, %v929
      %v1147 = vsel %vm567, %v631, %v933
      %v1148 = vsel %vm567, %v636, %v937
      %v1149 = vsel %vm567, %v641, %v941
      %v1150 = vsel %vm567, %v646, %v945
      %v1151 = vsel %vm567, %v651, %v949
      %v1152 = vsel %vm567, %v656, %v953
      %v1153 = vsel %vm567, %v661, %v957
      %v1154 = vsel %vm567, %v666, %v961
      %v1155 = vsel %vm567, %v671, %v965
      %v1156 = vsel %vm567, %v676, %v969
      %v1157 = vsel %vm567, %v681, %v973
      %v1158 = vsel %vm567, %v686, %v977
      %v1159 = vsel %vm567, %v691, %v981
      %v1160 = vsel %vm567, %v696, %v985
      %v1161 = vsel %vm567, %v701, %v989
      %v1162 = vsel %vm567, %v706, %v993
      %v1163 = vsel %vm567, %v711, %v997
      %v1164 = vsel %vm567, %v716, %v1001
      %v1165 = vsel %vm567, %v721, %v1005
      %v1166 = vsel %vm567, %v726, %v1009
      %v1167 = vsel %vm567, %v731, %v1013
      %v1168 = vsel %vm567, %v736, %v1017
      %v1169 = vsel %vm567, %v741, %v1021
      %v1170 = vsel %vm567, %v746, %v1025
      %v1171 = vsel %vm567, %v751, %v1029
      %v1172 = vsel %vm567, %v756, %v1033
      %v1173 = vsel %vm567, %v761, %v1037
      %v1174 = vsel %vm567, %v766, %v1041
      %v1175 = vsel %vm567, %v771, %v1045
      %v1176 = vsel %vm567, %v776, %v1049
      %v1177 = vsel %vm567, %v781, %v1053
      %v1178 = vsel %vm567, %v786, %v1057
      %v1179 = vsel %vm567, %v791, %v1061
      %v1180 = vsel %vm567, %v796, %v1065
      %v1181 = vsel %vm567, %v801, %v1069
      %v1182 = vsel %vm567, %v806, %v1073
      %v1183 = vsel %vm567, %v811, %v1077
      %v1184 = vsel %vm567, %v816, %v1081
      %v1185 = vsel %vm567, %v821, %v1085
      %v1186 = vsel %vm567, %v826, %v1089
      %v1187 = vsel %vm567, %v831, %v1093
      %v1188 = vsel %vm567, %v836, %v1097
      %v1189 = vsel %vm567, %v841, %v1101
      %v1190 = vsel %vm567, %v846, %v1105
      %v1191 = vsel %vm567, %v851, %v1109
      %v1192 = vsel %vm567, %v856, %v1113
      %v1193 = vsel %vm567, %v861, %v1117
      %v1194 = vsel %vm567, %v866, %v1121
      %v1195 = vsel %vm567, %v871, %v1125
      %v1196 = vsel %vm567, %v876, %v1129
      %v1197 = vsel %vm567, %v881, %v1133
      %v1198 = vand.u32 %v566, 63
      %vm1199 = vcmp.lt.s32.totalorder %v1198, 32
      %v1201 = vlaneseq
      %v1202 = vshrl.u32 %v1201, 7
      %v1203 = vsub.s32 0, %v1202
      %v1204 = vrot.slane %v564, %v1203
      %v1206 = vsub.f32 %v1135, %v1204
      %v1207 = vsub.f32 %v1136, %v1204
      %v1208 = vsub.f32 %v1137, %v1204
      %v1209 = vsub.f32 %v1138, %v1204
      %v1210 = vsub.f32 %v1139, %v1204
      %v1211 = vsub.f32 %v1140, %v1204
      %v1212 = vsub.f32 %v1141, %v1204
      %v1213 = vsub.f32 %v1142, %v1204
      %v1214 = vsub.f32 %v1143, %v1204
      %v1215 = vsub.f32 %v1144, %v1204
      %v1216 = vsub.f32 %v1145, %v1204
      %v1217 = vsub.f32 %v1146, %v1204
      %v1218 = vsub.f32 %v1147, %v1204
      %v1219 = vsub.f32 %v1148, %v1204
      %v1220 = vsub.f32 %v1149, %v1204
      %v1221 = vsub.f32 %v1150, %v1204
      %v1222 = vsub.f32 %v1151, %v1204
      %v1223 = vsub.f32 %v1152, %v1204
      %v1224 = vsub.f32 %v1153, %v1204
      %v1225 = vsub.f32 %v1154, %v1204
      %v1226 = vsub.f32 %v1155, %v1204
      %v1227 = vsub.f32 %v1156, %v1204
      %v1228 = vsub.f32 %v1157, %v1204
      %v1229 = vsub.f32 %v1158, %v1204
      %v1230 = vsub.f32 %v1159, %v1204
      %v1231 = vsub.f32 %v1160, %v1204
      %v1232 = vsub.f32 %v1161, %v1204
      %v1233 = vsub.f32 %v1162, %v1204
      %v1234 = vsub.f32 %v1163, %v1204
      %v1235 = vsub.f32 %v1164, %v1204
      %v1236 = vsub.f32 %v1165, %v1204
      %v1237 = vsub.f32 %v1166, %v1204
      %v1238 = vsub.f32 %v1167, %v1204
      %v1239 = vsub.f32 %v1168, %v1204
      %v1240 = vsub.f32 %v1169, %v1204
      %v1241 = vsub.f32 %v1170, %v1204
      %v1242 = vsub.f32 %v1171, %v1204
      %v1243 = vsub.f32 %v1172, %v1204
      %v1244 = vsub.f32 %v1173, %v1204
      %v1245 = vsub.f32 %v1174, %v1204
      %v1246 = vsub.f32 %v1175, %v1204
      %v1247 = vsub.f32 %v1176, %v1204
      %v1248 = vsub.f32 %v1177, %v1204
      %v1249 = vsub.f32 %v1178, %v1204
      %v1250 = vsub.f32 %v1179, %v1204
      %v1251 = vsub.f32 %v1180, %v1204
      %v1252 = vsub.f32 %v1181, %v1204
      %v1253 = vsub.f32 %v1182, %v1204
      %v1254 = vsub.f32 %v1183, %v1204
      %v1255 = vsub.f32 %v1184, %v1204
      %v1256 = vsub.f32 %v1185, %v1204
      %v1257 = vsub.f32 %v1186, %v1204
      %v1258 = vsub.f32 %v1187, %v1204
      %v1259 = vsub.f32 %v1188, %v1204
      %v1260 = vsub.f32 %v1189, %v1204
      %v1261 = vsub.f32 %v1190, %v1204
      %v1262 = vsub.f32 %v1191, %v1204
      %v1263 = vsub.f32 %v1192, %v1204
      %v1264 = vsub.f32 %v1193, %v1204
      %v1265 = vsub.f32 %v1194, %v1204
      %v1266 = vsub.f32 %v1195, %v1204
      %v1267 = vsub.f32 %v1196, %v1204
      %v1268 = vsub.f32 %v1197, %v1204
      %v1269 = vstv %s500
      %v1270 = vmul.f32 %v1269, %v1206
      %v1271 = vmul.f32 %v1269, %v1207
      %v1272 = vmul.f32 %v1269, %v1208
      %v1273 = vmul.f32 %v1269, %v1209
      %v1274 = vmul.f32 %v1269, %v1210
      %v1275 = vmul.f32 %v1269, %v1211
      %v1276 = vmul.f32 %v1269, %v1212
      %v1277 = vmul.f32 %v1269, %v1213
      %v1278 = vmul.f32 %v1269, %v1214
      %v1279 = vmul.f32 %v1269, %v1215
      %v1280 = vmul.f32 %v1269, %v1216
      %v1281 = vmul.f32 %v1269, %v1217
      %v1282 = vmul.f32 %v1269, %v1218
      %v1283 = vmul.f32 %v1269, %v1219
      %v1284 = vmul.f32 %v1269, %v1220
      %v1285 = vmul.f32 %v1269, %v1221
      %v1286 = vmul.f32 %v1269, %v1222
      %v1287 = vmul.f32 %v1269, %v1223
      %v1288 = vmul.f32 %v1269, %v1224
      %v1289 = vmul.f32 %v1269, %v1225
      %v1290 = vmul.f32 %v1269, %v1226
      %v1291 = vmul.f32 %v1269, %v1227
      %v1292 = vmul.f32 %v1269, %v1228
      %v1293 = vmul.f32 %v1269, %v1229
      %v1294 = vmul.f32 %v1269, %v1230
      %v1295 = vmul.f32 %v1269, %v1231
      %v1296 = vmul.f32 %v1269, %v1232
      %v1297 = vmul.f32 %v1269, %v1233
      %v1298 = vmul.f32 %v1269, %v1234
      %v1299 = vmul.f32 %v1269, %v1235
      %v1300 = vmul.f32 %v1269, %v1236
      %v1301 = vmul.f32 %v1269, %v1237
      %v1302 = vmul.f32 %v1269, %v1238
      %v1303 = vmul.f32 %v1269, %v1239
      %v1304 = vmul.f32 %v1269, %v1240
      %v1305 = vmul.f32 %v1269, %v1241
      %v1306 = vmul.f32 %v1269, %v1242
      %v1307 = vmul.f32 %v1269, %v1243
      %v1308 = vmul.f32 %v1269, %v1244
      %v1309 = vmul.f32 %v1269, %v1245
      %v1310 = vmul.f32 %v1269, %v1246
      %v1311 = vmul.f32 %v1269, %v1247
      %v1312 = vmul.f32 %v1269, %v1248
      %v1313 = vmul.f32 %v1269, %v1249
      %v1314 = vmul.f32 %v1269, %v1250
      %v1315 = vmul.f32 %v1269, %v1251
      %v1316 = vmul.f32 %v1269, %v1252
      %v1317 = vmul.f32 %v1269, %v1253
      %v1318 = vmul.f32 %v1269, %v1254
      %v1319 = vmul.f32 %v1269, %v1255
      %v1320 = vmul.f32 %v1269, %v1256
      %v1321 = vmul.f32 %v1269, %v1257
      %v1322 = vmul.f32 %v1269, %v1258
      %v1323 = vmul.f32 %v1269, %v1259
      %v1324 = vmul.f32 %v1269, %v1260
      %v1325 = vmul.f32 %v1269, %v1261
      %v1326 = vmul.f32 %v1269, %v1262
      %v1327 = vmul.f32 %v1269, %v1263
      %v1328 = vmul.f32 %v1269, %v1264
      %v1329 = vmul.f32 %v1269, %v1265
      %v1330 = vmul.f32 %v1269, %v1266
      %v1331 = vmul.f32 %v1269, %v1267
      %v1332 = vmul.f32 %v1269, %v1268
      %v1333 = vmul.f32 %v1270, %v1206
      %v1334 = vmul.f32 %v1271, %v1207
      %v1335 = vmul.f32 %v1272, %v1208
      %v1336 = vmul.f32 %v1273, %v1209
      %v1337 = vmul.f32 %v1274, %v1210
      %v1338 = vmul.f32 %v1275, %v1211
      %v1339 = vmul.f32 %v1276, %v1212
      %v1340 = vmul.f32 %v1277, %v1213
      %v1341 = vmul.f32 %v1278, %v1214
      %v1342 = vmul.f32 %v1279, %v1215
      %v1343 = vmul.f32 %v1280, %v1216
      %v1344 = vmul.f32 %v1281, %v1217
      %v1345 = vmul.f32 %v1282, %v1218
      %v1346 = vmul.f32 %v1283, %v1219
      %v1347 = vmul.f32 %v1284, %v1220
      %v1348 = vmul.f32 %v1285, %v1221
      %v1349 = vmul.f32 %v1286, %v1222
      %v1350 = vmul.f32 %v1287, %v1223
      %v1351 = vmul.f32 %v1288, %v1224
      %v1352 = vmul.f32 %v1289, %v1225
      %v1353 = vmul.f32 %v1290, %v1226
      %v1354 = vmul.f32 %v1291, %v1227
      %v1355 = vmul.f32 %v1292, %v1228
      %v1356 = vmul.f32 %v1293, %v1229
      %v1357 = vmul.f32 %v1294, %v1230
      %v1358 = vmul.f32 %v1295, %v1231
      %v1359 = vmul.f32 %v1296, %v1232
      %v1360 = vmul.f32 %v1297, %v1233
      %v1361 = vmul.f32 %v1298, %v1234
      %v1362 = vmul.f32 %v1299, %v1235
      %v1363 = vmul.f32 %v1300, %v1236
      %v1364 = vmul.f32 %v1301, %v1237
      %v1365 = vmul.f32 %v1302, %v1238
      %v1366 = vmul.f32 %v1303, %v1239
      %v1367 = vmul.f32 %v1304, %v1240
      %v1368 = vmul.f32 %v1305, %v1241
      %v1369 = vmul.f32 %v1306, %v1242
      %v1370 = vmul.f32 %v1307, %v1243
      %v1371 = vmul.f32 %v1308, %v1244
      %v1372 = vmul.f32 %v1309, %v1245
      %v1373 = vmul.f32 %v1310, %v1246
      %v1374 = vmul.f32 %v1311, %v1247
      %v1375 = vmul.f32 %v1312, %v1248
      %v1376 = vmul.f32 %v1313, %v1249
      %v1377 = vmul.f32 %v1314, %v1250
      %v1378 = vmul.f32 %v1315, %v1251
      %v1379 = vmul.f32 %v1316, %v1252
      %v1380 = vmul.f32 %v1317, %v1253
      %v1381 = vmul.f32 %v1318, %v1254
      %v1382 = vmul.f32 %v1319, %v1255
      %v1383 = vmul.f32 %v1320, %v1256
      %v1384 = vmul.f32 %v1321, %v1257
      %v1385 = vmul.f32 %v1322, %v1258
      %v1386 = vmul.f32 %v1323, %v1259
      %v1387 = vmul.f32 %v1324, %v1260
      %v1388 = vmul.f32 %v1325, %v1261
      %v1389 = vmul.f32 %v1326, %v1262
      %v1390 = vmul.f32 %v1327, %v1263
      %v1391 = vmul.f32 %v1328, %v1264
      %v1392 = vmul.f32 %v1329, %v1265
      %v1393 = vmul.f32 %v1330, %v1266
      %v1394 = vmul.f32 %v1331, %v1267
      %v1395 = vmul.f32 %v1332, %v1268
      %v1396 = vmul.f32 %v1333, 1.442695
      %v1397 = vpow.pop %v1396
      %v1398 = vmul.f32 %v1334, 1.442695
      %v1399 = vpow.pop %v1398
      %v1400 = vmul.f32 %v1335, 1.442695
      %v1401 = vpow.pop %v1400
      %v1402 = vmul.f32 %v1336, 1.442695
      %v1403 = vpow.pop %v1402
      %v1404 = vmul.f32 %v1337, 1.442695
      %v1405 = vpow.pop %v1404
      %v1406 = vmul.f32 %v1338, 1.442695
      %v1407 = vpow.pop %v1406
      %v1408 = vmul.f32 %v1339, 1.442695
      %v1409 = vpow.pop %v1408
      %v1410 = vmul.f32 %v1340, 1.442695
      %v1411 = vpow.pop %v1410
      %v1412 = vmul.f32 %v1341, 1.442695
      %v1413 = vpow.pop %v1412
      %v1414 = vmul.f32 %v1342, 1.442695
      %v1415 = vpow.pop %v1414
      %v1416 = vmul.f32 %v1343, 1.442695
      %v1417 = vpow.pop %v1416
      %v1418 = vmul.f32 %v1344, 1.442695
      %v1419 = vpow.pop %v1418
      %v1420 = vmul.f32 %v1345, 1.442695
      %v1421 = vpow.pop %v1420
      %v1422 = vmul.f32 %v1346, 1.442695
      %v1423 = vpow.pop %v1422
      %v1424 = vmul.f32 %v1347, 1.442695
      %v1425 = vpow.pop %v1424
      %v1426 = vmul.f32 %v1348, 1.442695
      %v1427 = vpow.pop %v1426
      %v1428 = vmul.f32 %v1349, 1.442695
      %v1429 = vpow.pop %v1428
      %v1430 = vmul.f32 %v1350, 1.442695
      %v1431 = vpow.pop %v1430
      %v1432 = vmul.f32 %v1351, 1.442695
      %v1433 = vpow.pop %v1432
      %v1434 = vmul.f32 %v1352, 1.442695
      %v1435 = vpow.pop %v1434
      %v1436 = vmul.f32 %v1353, 1.442695
      %v1437 = vpow.pop %v1436
      %v1438 = vmul.f32 %v1354, 1.442695
      %v1439 = vpow.pop %v1438
      %v1440 = vmul.f32 %v1355, 1.442695
      %v1441 = vpow.pop %v1440
      %v1442 = vmul.f32 %v1356, 1.442695
      %v1443 = vpow.pop %v1442
      %v1444 = vmul.f32 %v1357, 1.442695
      %v1445 = vpow.pop %v1444
      %v1446 = vmul.f32 %v1358, 1.442695
      %v1447 = vpow.pop %v1446
      %v1448 = vmul.f32 %v1359, 1.442695
      %v1449 = vpow.pop %v1448
      %v1450 = vmul.f32 %v1360, 1.442695
      %v1451 = vpow.pop %v1450
      %v1452 = vmul.f32 %v1361, 1.442695
      %v1453 = vpow.pop %v1452
      %v1454 = vmul.f32 %v1362, 1.442695
      %v1455 = vpow.pop %v1454
      %v1456 = vmul.f32 %v1363, 1.442695
      %v1457 = vpow.pop %v1456
      %v1458 = vmul.f32 %v1364, 1.442695
      %v1459 = vpow.pop %v1458
      %v1460 = vmul.f32 %v1365, 1.442695
      %v1461 = vpow.pop %v1460
      %v1462 = vmul.f32 %v1366, 1.442695
      %v1463 = vpow.pop %v1462
      %v1464 = vmul.f32 %v1367, 1.442695
      %v1465 = vpow.pop %v1464
      %v1466 = vmul.f32 %v1368, 1.442695
      %v1467 = vpow.pop %v1466
      %v1468 = vmul.f32 %v1369, 1.442695
      %v1469 = vpow.pop %v1468
      %v1470 = vmul.f32 %v1370, 1.442695
      %v1471 = vpow.pop %v1470
      %v1472 = vmul.f32 %v1371, 1.442695
      %v1473 = vpow.pop %v1472
      %v1474 = vmul.f32 %v1372, 1.442695
      %v1475 = vpow.pop %v1474
      %v1476 = vmul.f32 %v1373, 1.442695
      %v1477 = vpow.pop %v1476
      %v1478 = vmul.f32 %v1374, 1.442695
      %v1479 = vpow.pop %v1478
      %v1480 = vmul.f32 %v1375, 1.442695
      %v1481 = vpow.pop %v1480
      %v1482 = vmul.f32 %v1376, 1.442695
      %v1483 = vpow.pop %v1482
      %v1484 = vmul.f32 %v1377, 1.442695
      %v1485 = vpow.pop %v1484
      %v1486 = vmul.f32 %v1378, 1.442695
      %v1487 = vpow.pop %v1486
      %v1488 = vmul.f32 %v1379, 1.442695
      %v1489 = vpow.pop %v1488
      %v1490 = vmul.f32 %v1380, 1.442695
      %v1491 = vpow.pop %v1490
      %v1492 = vmul.f32 %v1381, 1.442695
      %v1493 = vpow.pop %v1492
      %v1494 = vmul.f32 %v1382, 1.442695
      %v1495 = vpow.pop %v1494
      %v1496 = vmul.f32 %v1383, 1.442695
      %v1497 = vpow.pop %v1496
      %v1498 = vmul.f32 %v1384, 1.442695
      %v1499 = vpow.pop %v1498
      %v1500 = vmul.f32 %v1385, 1.442695
      %v1501 = vpow.pop %v1500
      %v1502 = vmul.f32 %v1386, 1.442695
      %v1503 = vpow.pop %v1502
      %v1504 = vmul.f32 %v1387, 1.442695
      %v1505 = vpow.pop %v1504
      %v1506 = vmul.f32 %v1388, 1.442695
      %v1507 = vpow.pop %v1506
      %v1508 = vmul.f32 %v1389, 1.442695
      %v1509 = vpow.pop %v1508
      %v1510 = vmul.f32 %v1390, 1.442695
      %v1511 = vpow.pop %v1510
      %v1512 = vmul.f32 %v1391, 1.442695
      %v1513 = vpow.pop %v1512
      %v1514 = vmul.f32 %v1392, 1.442695
      %v1515 = vpow.pop %v1514
      %v1516 = vmul.f32 %v1393, 1.442695
      %v1517 = vpow.pop %v1516
      %v1518 = vmul.f32 %v1394, 1.442695
      %v1519 = vpow.pop %v1518
      %v1520 = vmul.f32 %v1395, 1.442695
      %v1521 = vpow.pop %v1520
      %v1522 = vsel %vm1199, %v1397, 0.0
      %v1523 = vsel %vm1199, %v1399, 0.0
      %v1524 = vsel %vm1199, %v1401, 0.0
      %v1525 = vsel %vm1199, %v1403, 0.0
      %v1526 = vsel %vm1199, %v1405, 0.0
      %v1527 = vsel %vm1199, %v1407, 0.0
      %v1528 = vsel %vm1199, %v1409, 0.0
      %v1529 = vsel %vm1199, %v1411, 0.0
      %v1530 = vsel %vm1199, %v1413, 0.0
      %v1531 = vsel %vm1199, %v1415, 0.0
      %v1532 = vsel %vm1199, %v1417, 0.0
      %v1533 = vsel %vm1199, %v1419, 0.0
      %v1534 = vsel %vm1199, %v1421, 0.0
      %v1535 = vsel %vm1199, %v1423, 0.0
      %v1536 = vsel %vm1199, %v1425, 0.0
      %v1537 = vsel %vm1199, %v1427, 0.0
      %v1538 = vsel %vm1199, %v1429, 0.0
      %v1539 = vsel %vm1199, %v1431, 0.0
      %v1540 = vsel %vm1199, %v1433, 0.0
      %v1541 = vsel %vm1199, %v1435, 0.0
      %v1542 = vsel %vm1199, %v1437, 0.0
      %v1543 = vsel %vm1199, %v1439, 0.0
      %v1544 = vsel %vm1199, %v1441, 0.0
      %v1545 = vsel %vm1199, %v1443, 0.0
      %v1546 = vsel %vm1199, %v1445, 0.0
      %v1547 = vsel %vm1199, %v1447, 0.0
      %v1548 = vsel %vm1199, %v1449, 0.0
      %v1549 = vsel %vm1199, %v1451, 0.0
      %v1550 = vsel %vm1199, %v1453, 0.0
      %v1551 = vsel %vm1199, %v1455, 0.0
      %v1552 = vsel %vm1199, %v1457, 0.0
      %v1553 = vsel %vm1199, %v1459, 0.0
      %v1554 = vsel %vm1199, %v1461, 0.0
      %v1555 = vsel %vm1199, %v1463, 0.0
      %v1556 = vsel %vm1199, %v1465, 0.0
      %v1557 = vsel %vm1199, %v1467, 0.0
      %v1558 = vsel %vm1199, %v1469, 0.0
      %v1559 = vsel %vm1199, %v1471, 0.0
      %v1560 = vsel %vm1199, %v1473, 0.0
      %v1561 = vsel %vm1199, %v1475, 0.0
      %v1562 = vsel %vm1199, %v1477, 0.0
      %v1563 = vsel %vm1199, %v1479, 0.0
      %v1564 = vsel %vm1199, %v1481, 0.0
      %v1565 = vsel %vm1199, %v1483, 0.0
      %v1566 = vsel %vm1199, %v1485, 0.0
      %v1567 = vsel %vm1199, %v1487, 0.0
      %v1568 = vsel %vm1199, %v1489, 0.0
      %v1569 = vsel %vm1199, %v1491, 0.0
      %v1570 = vsel %vm1199, %v1493, 0.0
      %v1571 = vsel %vm1199, %v1495, 0.0
      %v1572 = vsel %vm1199, %v1497, 0.0
      %v1573 = vsel %vm1199, %v1499, 0.0
      %v1574 = vsel %vm1199, %v1501, 0.0
      %v1575 = vsel %vm1199, %v1503, 0.0
      %v1576 = vsel %vm1199, %v1505, 0.0
      %v1577 = vsel %vm1199, %v1507, 0.0
      %v1578 = vsel %vm1199, %v1509, 0.0
      %v1579 = vsel %vm1199, %v1511, 0.0
      %v1580 = vsel %vm1199, %v1513, 0.0
      %v1581 = vsel %vm1199, %v1515, 0.0
      %v1582 = vsel %vm1199, %v1517, 0.0
      %v1583 = vsel %vm1199, %v1519, 0.0
      %v1584 = vsel %vm1199, %v1521, 0.0
      %v1585 = vpack.c.bf16 %v1523, %v1522
      %v1586 = vpack.c.bf16 %v1525, %v1524
      %v1587 = vpack.c.bf16 %v1527, %v1526
      %v1588 = vpack.c.bf16 %v1529, %v1528
      %v1589 = vpack.c.bf16 %v1531, %v1530
      %v1590 = vpack.c.bf16 %v1533, %v1532
      %v1591 = vpack.c.bf16 %v1535, %v1534
      %v1592 = vpack.c.bf16 %v1537, %v1536
      %v1593 = vpack.c.bf16 %v1539, %v1538
      %v1594 = vpack.c.bf16 %v1541, %v1540
      %v1595 = vpack.c.bf16 %v1543, %v1542
      %v1596 = vpack.c.bf16 %v1545, %v1544
      %v1597 = vpack.c.bf16 %v1547, %v1546
      %v1598 = vpack.c.bf16 %v1549, %v1548
      %v1599 = vpack.c.bf16 %v1551, %v1550
      %v1600 = vpack.c.bf16 %v1553, %v1552
      %v1601 = vpack.c.bf16 %v1555, %v1554
      %v1602 = vpack.c.bf16 %v1557, %v1556
      %v1603 = vpack.c.bf16 %v1559, %v1558
      %v1604 = vpack.c.bf16 %v1561, %v1560
      %v1605 = vpack.c.bf16 %v1563, %v1562
      %v1606 = vpack.c.bf16 %v1565, %v1564
      %v1607 = vpack.c.bf16 %v1567, %v1566
      %v1608 = vpack.c.bf16 %v1569, %v1568
      %v1609 = vpack.c.bf16 %v1571, %v1570
      %v1610 = vpack.c.bf16 %v1573, %v1572
      %v1611 = vpack.c.bf16 %v1575, %v1574
      %v1612 = vpack.c.bf16 %v1577, %v1576
      %v1613 = vpack.c.bf16 %v1579, %v1578
      %v1614 = vpack.c.bf16 %v1581, %v1580
      %v1615 = vpack.c.bf16 %v1583, %v1582
      %v1616 = vpack.c.bf16 %v1584, %v1584
      %v1617 = vld [vmem:[%s3] sm:$0xf]
      %v1618 = vld [vmem:[%s3 + $0x4] sm:$0xf]
      %v1619 = vld [vmem:[%s3 + $0x8] sm:$0xf]
      %v1620 = vld [vmem:[%s3 + $0xc] sm:$0xf]
      %v1621 = vld [vmem:[%s3 + $0x10] sm:$0xf]
      %v1622 = vld [vmem:[%s3 + $0x14] sm:$0xf]
      %v1623 = vld [vmem:[%s3 + $0x18] sm:$0xf]
      %v1624 = vld [vmem:[%s3 + $0x1c] sm:$0xf]
      %v1625 = vld [vmem:[%s3 + $0x20] sm:$0xf]
      %v1626 = vld [vmem:[%s3 + $0x24] sm:$0xf]
      %v1627 = vld [vmem:[%s3 + $0x28] sm:$0xf]
      %v1628 = vld [vmem:[%s3 + $0x2c] sm:$0xf]
      %v1629 = vld [vmem:[%s3 + $0x30] sm:$0xf]
      %v1630 = vld [vmem:[%s3 + $0x34] sm:$0xf]
      %v1631 = vld [vmem:[%s3 + $0x38] sm:$0xf]
      %v1632 = vld [vmem:[%s3 + $0x3c] sm:$0xf]
      %v1633 = vld [vmem:[%s4] sm:$0x1]
      %v1635 = vlaneseq
      %v1636 = vshrl.u32 %v1635, 7
      %v1637 = vsub.s32 0, %v1636
      %v1638 = vrot.slane %v1633, %v1637
      %v1656 = vunpack.c.l.b16 %v1617
      %v1657 = vunpack.c.l.b16 %v1618
      %v1658 = vunpack.c.l.b16 %v1619
      %v1659 = vunpack.c.l.b16 %v1620
      %v1660 = vunpack.c.l.b16 %v1621
      %v1661 = vunpack.c.l.b16 %v1622
      %v1662 = vunpack.c.l.b16 %v1623
      %v1663 = vunpack.c.l.b16 %v1624
      %v1664 = vunpack.c.l.b16 %v1625
      %v1665 = vunpack.c.l.b16 %v1626
      %v1666 = vunpack.c.l.b16 %v1627
      %v1667 = vunpack.c.l.b16 %v1628
      %v1668 = vunpack.c.l.b16 %v1629
      %v1669 = vunpack.c.l.b16 %v1630
      %v1670 = vunpack.c.l.b16 %v1631
      %v1671 = vunpack.c.l.b16 %v1632
      %v1672 = vpack.c.b16 %v1657, %v1656
      %v1673 = vpack.c.b16 %v1659, %v1658
      %v1674 = vpack.c.b16 %v1661, %v1660
      %v1675 = vpack.c.b16 %v1663, %v1662
      %v1676 = vpack.c.b16 %v1665, %v1664
      %v1677 = vpack.c.b16 %v1667, %v1666
      %v1678 = vpack.c.b16 %v1669, %v1668
      %v1679 = vpack.c.b16 %v1671, %v1670
      %1688 = vmatprep.subr.bf16.mxu0 0
      %1689 = vmatpush1.bf16.msra.mxu0 %v1679
      %1690 = vmatprep.subr.bf16.mxu0 0
      %1691 = vmatpush1.bf16.msra.mxu0 %v1678
      %1692 = vmatprep.subr.bf16.mxu0 0
      %1693 = vmatpush1.bf16.msra.mxu0 %v1677
      %1694 = vmatprep.subr.bf16.mxu0 0
      %1695 = vmatpush1.bf16.msra.mxu0 %v1676
      %1696 = vmatprep.subr.bf16.mxu0 0
      %1697 = vmatpush1.bf16.msra.mxu0 %v1675
      %1698 = vmatprep.subr.bf16.mxu0 0
      %1699 = vmatpush1.bf16.msra.mxu0 %v1674
      %1700 = vmatprep.subr.bf16.mxu0 0
      %1701 = vmatpush1.bf16.msra.mxu0 %v1673
      %1702 = vmatprep.subr.bf16.mxu0 0
      %1703 = vmatpush1.bf16.msra.mxu0 %v1672
      %1704 = vmatprep.subr.bf16.mxu0 0
      %1705 = vmatpush2.bf16.msra.mxu0 0
      %1706 = vmatprep.subr.bf16.mxu0 0
      %1707 = vmatpush2.bf16.msra.mxu0 0
      %1708 = vmatprep.subr.bf16.mxu0 0
      %1709 = vmatpush2.bf16.msra.mxu0 0
      %1710 = vmatprep.subr.bf16.mxu0 0
      %1711 = vmatpush2.bf16.msra.mxu0 0
      %1712 = vmatprep.subr.bf16.mxu0 0
      %1713 = vmatpush2.bf16.msra.mxu0 0
      %1714 = vmatprep.subr.bf16.mxu0 0
      %1715 = vmatpush2.bf16.msra.mxu0 0
      %1716 = vmatprep.subr.bf16.mxu0 0
      %1717 = vmatpush2.bf16.msra.mxu0 0
      %1718 = vmatprep.subr.bf16.mxu0 0
      %1719 = vmatpush2.bf16.msra.mxu0 0
      %1720 = vmatprep.mubr.bf16.mxu0 0
      %1721 = vmatmul.mubr.bf16.gmra.mxu0 %v1585
      %v1722 = vpop.f32.mrf.mxu0
      %v1723 = vadd.f32 %v1638, %v1722
      %v1724 = vpop.f32.mrf.mxu0
      %v1725 = vpop.f32.mrf.mxu0
      %v1726 = vadd.f32 %v1638, %v1725
      %v1727 = vpop.f32.mrf.mxu0
      %1728 = vmatprep.mubr.bf16.mxu0 0
      %1729 = vmatmul.mubr.bf16.gmra.mxu0 %v1586
      %v1730 = vpop.f32.mrf.mxu0
      %v1731 = vadd.f32 %v1638, %v1730
      %v1732 = vpop.f32.mrf.mxu0
      %v1733 = vpop.f32.mrf.mxu0
      %v1734 = vadd.f32 %v1638, %v1733
      %v1735 = vpop.f32.mrf.mxu0
      %1736 = vmatprep.mubr.bf16.mxu0 0
      %1737 = vmatmul.mubr.bf16.gmra.mxu0 %v1587
      %v1738 = vpop.f32.mrf.mxu0
      %v1739 = vadd.f32 %v1638, %v1738
      %v1740 = vpop.f32.mrf.mxu0
      %v1741 = vpop.f32.mrf.mxu0
      %v1742 = vadd.f32 %v1638, %v1741
      %v1743 = vpop.f32.mrf.mxu0
      %1744 = vmatprep.mubr.bf16.mxu0 0
      %1745 = vmatmul.mubr.bf16.gmra.mxu0 %v1588
      %v1746 = vpop.f32.mrf.mxu0
      %v1747 = vadd.f32 %v1638, %v1746
      %v1748 = vpop.f32.mrf.mxu0
      %v1749 = vpop.f32.mrf.mxu0
      %v1750 = vadd.f32 %v1638, %v1749
      %v1751 = vpop.f32.mrf.mxu0
      %1752 = vmatprep.mubr.bf16.mxu0 0
      %1753 = vmatmul.mubr.bf16.gmra.mxu0 %v1589
      %v1754 = vpop.f32.mrf.mxu0
      %v1755 = vadd.f32 %v1638, %v1754
      %v1756 = vpop.f32.mrf.mxu0
      %v1757 = vpop.f32.mrf.mxu0
      %v1758 = vadd.f32 %v1638, %v1757
      %v1759 = vpop.f32.mrf.mxu0
      %1760 = vmatprep.mubr.bf16.mxu0 0
      %1761 = vmatmul.mubr.bf16.gmra.mxu0 %v1590
      %v1762 = vpop.f32.mrf.mxu0
      %v1763 = vadd.f32 %v1638, %v1762
      %v1764 = vpop.f32.mrf.mxu0
      %v1765 = vpop.f32.mrf.mxu0
      %v1766 = vadd.f32 %v1638, %v1765
      %v1767 = vpop.f32.mrf.mxu0
      %1768 = vmatprep.mubr.bf16.mxu0 0
      %1769 = vmatmul.mubr.bf16.gmra.mxu0 %v1591
      %v1770 = vpop.f32.mrf.mxu0
      %v1771 = vadd.f32 %v1638, %v1770
      %v1772 = vpop.f32.mrf.mxu0
      %v1773 = vpop.f32.mrf.mxu0
      %v1774 = vadd.f32 %v1638, %v1773
      %v1775 = vpop.f32.mrf.mxu0
      %1776 = vmatprep.mubr.bf16.mxu0 0
      %1777 = vmatmul.mubr.bf16.gmra.mxu0 %v1592
      %v1778 = vpop.f32.mrf.mxu0
      %v1779 = vadd.f32 %v1638, %v1778
      %v1780 = vpop.f32.mrf.mxu0
      %v1781 = vpop.f32.mrf.mxu0
      %v1782 = vadd.f32 %v1638, %v1781
      %v1783 = vpop.f32.mrf.mxu0
      %1784 = vmatprep.mubr.bf16.mxu0 0
      %1785 = vmatmul.mubr.bf16.gmra.mxu0 %v1593
      %v1786 = vpop.f32.mrf.mxu0
      %v1787 = vadd.f32 %v1638, %v1786
      %v1788 = vpop.f32.mrf.mxu0
      %v1789 = vpop.f32.mrf.mxu0
      %v1790 = vadd.f32 %v1638, %v1789
      %v1791 = vpop.f32.mrf.mxu0
      %1792 = vmatprep.mubr.bf16.mxu0 0
      %1793 = vmatmul.mubr.bf16.gmra.mxu0 %v1594
      %v1794 = vpop.f32.mrf.mxu0
      %v1795 = vadd.f32 %v1638, %v1794
      %v1796 = vpop.f32.mrf.mxu0
      %v1797 = vpop.f32.mrf.mxu0
      %v1798 = vadd.f32 %v1638, %v1797
      %v1799 = vpop.f32.mrf.mxu0
      %1800 = vmatprep.mubr.bf16.mxu0 0
      %1801 = vmatmul.mubr.bf16.gmra.mxu0 %v1595
      %v1802 = vpop.f32.mrf.mxu0
      %v1803 = vadd.f32 %v1638, %v1802
      %v1804 = vpop.f32.mrf.mxu0
      %v1805 = vpop.f32.mrf.mxu0
      %v1806 = vadd.f32 %v1638, %v1805
      %v1807 = vpop.f32.mrf.mxu0
      %1808 = vmatprep.mubr.bf16.mxu0 0
      %1809 = vmatmul.mubr.bf16.gmra.mxu0 %v1596
      %v1810 = vpop.f32.mrf.mxu0
      %v1811 = vadd.f32 %v1638, %v1810
      %v1812 = vpop.f32.mrf.mxu0
      %v1813 = vpop.f32.mrf.mxu0
      %v1814 = vadd.f32 %v1638, %v1813
      %v1815 = vpop.f32.mrf.mxu0
      %1816 = vmatprep.mubr.bf16.mxu0 0
      %1817 = vmatmul.mubr.bf16.gmra.mxu0 %v1597
      %v1818 = vpop.f32.mrf.mxu0
      %v1819 = vadd.f32 %v1638, %v1818
      %v1820 = vpop.f32.mrf.mxu0
      %v1821 = vpop.f32.mrf.mxu0
      %v1822 = vadd.f32 %v1638, %v1821
      %v1823 = vpop.f32.mrf.mxu0
      %1824 = vmatprep.mubr.bf16.mxu0 0
      %1825 = vmatmul.mubr.bf16.gmra.mxu0 %v1598
      %v1826 = vpop.f32.mrf.mxu0
      %v1827 = vadd.f32 %v1638, %v1826
      %v1828 = vpop.f32.mrf.mxu0
      %v1829 = vpop.f32.mrf.mxu0
      %v1830 = vadd.f32 %v1638, %v1829
      %v1831 = vpop.f32.mrf.mxu0
      %1832 = vmatprep.mubr.bf16.mxu0 0
      %1833 = vmatmul.mubr.bf16.gmra.mxu0 %v1599
      %v1834 = vpop.f32.mrf.mxu0
      %v1835 = vadd.f32 %v1638, %v1834
      %v1836 = vpop.f32.mrf.mxu0
      %v1837 = vpop.f32.mrf.mxu0
      %v1838 = vadd.f32 %v1638, %v1837
      %v1839 = vpop.f32.mrf.mxu0
      %1840 = vmatprep.mubr.bf16.mxu0 0
      %1841 = vmatmul.mubr.bf16.gmra.mxu0 %v1600
      %v1842 = vpop.f32.mrf.mxu0
      %v1843 = vadd.f32 %v1638, %v1842
      %v1844 = vpop.f32.mrf.mxu0
      %v1845 = vpop.f32.mrf.mxu0
      %v1846 = vadd.f32 %v1638, %v1845
      %v1847 = vpop.f32.mrf.mxu0
      %1848 = vmatprep.mubr.bf16.mxu0 0
      %1849 = vmatmul.mubr.bf16.gmra.mxu0 %v1601
      %v1850 = vpop.f32.mrf.mxu0
      %v1851 = vadd.f32 %v1638, %v1850
      %v1852 = vpop.f32.mrf.mxu0
      %v1853 = vpop.f32.mrf.mxu0
      %v1854 = vadd.f32 %v1638, %v1853
      %v1855 = vpop.f32.mrf.mxu0
      %1856 = vmatprep.mubr.bf16.mxu0 0
      %1857 = vmatmul.mubr.bf16.gmra.mxu0 %v1602
      %v1858 = vpop.f32.mrf.mxu0
      %v1859 = vadd.f32 %v1638, %v1858
      %v1860 = vpop.f32.mrf.mxu0
      %v1861 = vpop.f32.mrf.mxu0
      %v1862 = vadd.f32 %v1638, %v1861
      %v1863 = vpop.f32.mrf.mxu0
      %1864 = vmatprep.mubr.bf16.mxu0 0
      %1865 = vmatmul.mubr.bf16.gmra.mxu0 %v1603
      %v1866 = vpop.f32.mrf.mxu0
      %v1867 = vadd.f32 %v1638, %v1866
      %v1868 = vpop.f32.mrf.mxu0
      %v1869 = vpop.f32.mrf.mxu0
      %v1870 = vadd.f32 %v1638, %v1869
      %v1871 = vpop.f32.mrf.mxu0
      %1872 = vmatprep.mubr.bf16.mxu0 0
      %1873 = vmatmul.mubr.bf16.gmra.mxu0 %v1604
      %v1874 = vpop.f32.mrf.mxu0
      %v1875 = vadd.f32 %v1638, %v1874
      %v1876 = vpop.f32.mrf.mxu0
      %v1877 = vpop.f32.mrf.mxu0
      %v1878 = vadd.f32 %v1638, %v1877
      %v1879 = vpop.f32.mrf.mxu0
      %1880 = vmatprep.mubr.bf16.mxu0 0
      %1881 = vmatmul.mubr.bf16.gmra.mxu0 %v1605
      %v1882 = vpop.f32.mrf.mxu0
      %v1883 = vadd.f32 %v1638, %v1882
      %v1884 = vpop.f32.mrf.mxu0
      %v1885 = vpop.f32.mrf.mxu0
      %v1886 = vadd.f32 %v1638, %v1885
      %v1887 = vpop.f32.mrf.mxu0
      %1888 = vmatprep.mubr.bf16.mxu0 0
      %1889 = vmatmul.mubr.bf16.gmra.mxu0 %v1606
      %v1890 = vpop.f32.mrf.mxu0
      %v1891 = vadd.f32 %v1638, %v1890
      %v1892 = vpop.f32.mrf.mxu0
      %v1893 = vpop.f32.mrf.mxu0
      %v1894 = vadd.f32 %v1638, %v1893
      %v1895 = vpop.f32.mrf.mxu0
      %1896 = vmatprep.mubr.bf16.mxu0 0
      %1897 = vmatmul.mubr.bf16.gmra.mxu0 %v1607
      %v1898 = vpop.f32.mrf.mxu0
      %v1899 = vadd.f32 %v1638, %v1898
      %v1900 = vpop.f32.mrf.mxu0
      %v1901 = vpop.f32.mrf.mxu0
      %v1902 = vadd.f32 %v1638, %v1901
      %v1903 = vpop.f32.mrf.mxu0
      %1904 = vmatprep.mubr.bf16.mxu0 0
      %1905 = vmatmul.mubr.bf16.gmra.mxu0 %v1608
      %v1906 = vpop.f32.mrf.mxu0
      %v1907 = vadd.f32 %v1638, %v1906
      %v1908 = vpop.f32.mrf.mxu0
      %v1909 = vpop.f32.mrf.mxu0
      %v1910 = vadd.f32 %v1638, %v1909
      %v1911 = vpop.f32.mrf.mxu0
      %1912 = vmatprep.mubr.bf16.mxu0 0
      %1913 = vmatmul.mubr.bf16.gmra.mxu0 %v1609
      %v1914 = vpop.f32.mrf.mxu0
      %v1915 = vadd.f32 %v1638, %v1914
      %v1916 = vpop.f32.mrf.mxu0
      %v1917 = vpop.f32.mrf.mxu0
      %v1918 = vadd.f32 %v1638, %v1917
      %v1919 = vpop.f32.mrf.mxu0
      %1920 = vmatprep.mubr.bf16.mxu0 0
      %1921 = vmatmul.mubr.bf16.gmra.mxu0 %v1610
      %v1922 = vpop.f32.mrf.mxu0
      %v1923 = vadd.f32 %v1638, %v1922
      %v1924 = vpop.f32.mrf.mxu0
      %v1925 = vpop.f32.mrf.mxu0
      %v1926 = vadd.f32 %v1638, %v1925
      %v1927 = vpop.f32.mrf.mxu0
      %1928 = vmatprep.mubr.bf16.mxu0 0
      %1929 = vmatmul.mubr.bf16.gmra.mxu0 %v1611
      %v1930 = vpop.f32.mrf.mxu0
      %v1931 = vadd.f32 %v1638, %v1930
      %v1932 = vpop.f32.mrf.mxu0
      %v1933 = vpop.f32.mrf.mxu0
      %v1934 = vadd.f32 %v1638, %v1933
      %v1935 = vpop.f32.mrf.mxu0
      %1936 = vmatprep.mubr.bf16.mxu0 0
      %1937 = vmatmul.mubr.bf16.gmra.mxu0 %v1612
      %v1938 = vpop.f32.mrf.mxu0
      %v1939 = vadd.f32 %v1638, %v1938
      %v1940 = vpop.f32.mrf.mxu0
      %v1941 = vpop.f32.mrf.mxu0
      %v1942 = vadd.f32 %v1638, %v1941
      %v1943 = vpop.f32.mrf.mxu0
      %1944 = vmatprep.mubr.bf16.mxu0 0
      %1945 = vmatmul.mubr.bf16.gmra.mxu0 %v1613
      %v1946 = vpop.f32.mrf.mxu0
      %v1947 = vadd.f32 %v1638, %v1946
      %v1948 = vpop.f32.mrf.mxu0
      %v1949 = vpop.f32.mrf.mxu0
      %v1950 = vadd.f32 %v1638, %v1949
      %v1951 = vpop.f32.mrf.mxu0
      %1952 = vmatprep.mubr.bf16.mxu0 0
      %1953 = vmatmul.mubr.bf16.gmra.mxu0 %v1614
      %v1954 = vpop.f32.mrf.mxu0
      %v1955 = vadd.f32 %v1638, %v1954
      %v1956 = vpop.f32.mrf.mxu0
      %v1957 = vpop.f32.mrf.mxu0
      %v1958 = vadd.f32 %v1638, %v1957
      %v1959 = vpop.f32.mrf.mxu0
      %1960 = vmatprep.mubr.bf16.mxu0 0
      %1961 = vmatmul.mubr.bf16.gmra.mxu0 %v1615
      %v1962 = vpop.f32.mrf.mxu0
      %v1963 = vadd.f32 %v1638, %v1962
      %v1964 = vpop.f32.mrf.mxu0
      %v1965 = vpop.f32.mrf.mxu0
      %v1966 = vadd.f32 %v1638, %v1965
      %v1967 = vpop.f32.mrf.mxu0
      %1968 = vmatprep.mubr.bf16.mxu0 0
      %1969 = vmatmul.mubr.bf16.gmra.mxu0 %v1616
      %v1970 = vpop.f32.mrf.mxu0
      %v1971 = vadd.f32 %v1638, %v1970
      %v1972 = vpop.f32.mrf.mxu0
      %v1973 = vpop.f32.mrf.mxu0
      %v1974 = vpop.f32.mrf.mxu0
      %1975 = vdwg.mxu0
      %v1976 = vmax.f32 %v1723, 0.0
      %v1977 = vmax.f32 %v1726, 0.0
      %v1978 = vmax.f32 %v1731, 0.0
      %v1979 = vmax.f32 %v1734, 0.0
      %v1980 = vmax.f32 %v1739, 0.0
      %v1981 = vmax.f32 %v1742, 0.0
      %v1982 = vmax.f32 %v1747, 0.0
      %v1983 = vmax.f32 %v1750, 0.0
      %v1984 = vmax.f32 %v1755, 0.0
      %v1985 = vmax.f32 %v1758, 0.0
      %v1986 = vmax.f32 %v1763, 0.0
      %v1987 = vmax.f32 %v1766, 0.0
      %v1988 = vmax.f32 %v1771, 0.0
      %v1989 = vmax.f32 %v1774, 0.0
      %v1990 = vmax.f32 %v1779, 0.0
      %v1991 = vmax.f32 %v1782, 0.0
      %v1992 = vmax.f32 %v1787, 0.0
      %v1993 = vmax.f32 %v1790, 0.0
      %v1994 = vmax.f32 %v1795, 0.0
      %v1995 = vmax.f32 %v1798, 0.0
      %v1996 = vmax.f32 %v1803, 0.0
      %v1997 = vmax.f32 %v1806, 0.0
      %v1998 = vmax.f32 %v1811, 0.0
      %v1999 = vmax.f32 %v1814, 0.0
      %v2000 = vmax.f32 %v1819, 0.0
      %v2001 = vmax.f32 %v1822, 0.0
      %v2002 = vmax.f32 %v1827, 0.0
      %v2003 = vmax.f32 %v1830, 0.0
      %v2004 = vmax.f32 %v1835, 0.0
      %v2005 = vmax.f32 %v1838, 0.0
      %v2006 = vmax.f32 %v1843, 0.0
      %v2007 = vmax.f32 %v1846, 0.0
      %v2008 = vmax.f32 %v1851, 0.0
      %v2009 = vmax.f32 %v1854, 0.0
      %v2010 = vmax.f32 %v1859, 0.0
      %v2011 = vmax.f32 %v1862, 0.0
      %v2012 = vmax.f32 %v1867, 0.0
      %v2013 = vmax.f32 %v1870, 0.0
      %v2014 = vmax.f32 %v1875, 0.0
      %v2015 = vmax.f32 %v1878, 0.0
      %v2016 = vmax.f32 %v1883, 0.0
      %v2017 = vmax.f32 %v1886, 0.0
      %v2018 = vmax.f32 %v1891, 0.0
      %v2019 = vmax.f32 %v1894, 0.0
      %v2020 = vmax.f32 %v1899, 0.0
      %v2021 = vmax.f32 %v1902, 0.0
      %v2022 = vmax.f32 %v1907, 0.0
      %v2023 = vmax.f32 %v1910, 0.0
      %v2024 = vmax.f32 %v1915, 0.0
      %v2025 = vmax.f32 %v1918, 0.0
      %v2026 = vmax.f32 %v1923, 0.0
      %v2027 = vmax.f32 %v1926, 0.0
      %v2028 = vmax.f32 %v1931, 0.0
      %v2029 = vmax.f32 %v1934, 0.0
      %v2030 = vmax.f32 %v1939, 0.0
      %v2031 = vmax.f32 %v1942, 0.0
      %v2032 = vmax.f32 %v1947, 0.0
      %v2033 = vmax.f32 %v1950, 0.0
      %v2034 = vmax.f32 %v1955, 0.0
      %v2035 = vmax.f32 %v1958, 0.0
      %v2036 = vmax.f32 %v1963, 0.0
      %v2037 = vmax.f32 %v1966, 0.0
      %v2038 = vmax.f32 %v1971, 0.0
      %v2039 = vpack.c.bf16 %v1977, %v1976
      %v2040 = vpack.c.bf16 %v1979, %v1978
      %v2041 = vpack.c.bf16 %v1981, %v1980
      %v2042 = vpack.c.bf16 %v1983, %v1982
      %v2043 = vpack.c.bf16 %v1985, %v1984
      %v2044 = vpack.c.bf16 %v1987, %v1986
      %v2045 = vpack.c.bf16 %v1989, %v1988
      %v2046 = vpack.c.bf16 %v1991, %v1990
      %v2047 = vpack.c.bf16 %v1993, %v1992
      %v2048 = vpack.c.bf16 %v1995, %v1994
      %v2049 = vpack.c.bf16 %v1997, %v1996
      %v2050 = vpack.c.bf16 %v1999, %v1998
      %v2051 = vpack.c.bf16 %v2001, %v2000
      %v2052 = vpack.c.bf16 %v2003, %v2002
      %v2053 = vpack.c.bf16 %v2005, %v2004
      %v2054 = vpack.c.bf16 %v2007, %v2006
      %v2055 = vpack.c.bf16 %v2009, %v2008
      %v2056 = vpack.c.bf16 %v2011, %v2010
      %v2057 = vpack.c.bf16 %v2013, %v2012
      %v2058 = vpack.c.bf16 %v2015, %v2014
      %v2059 = vpack.c.bf16 %v2017, %v2016
      %v2060 = vpack.c.bf16 %v2019, %v2018
      %v2061 = vpack.c.bf16 %v2021, %v2020
      %v2062 = vpack.c.bf16 %v2023, %v2022
      %v2063 = vpack.c.bf16 %v2025, %v2024
      %v2064 = vpack.c.bf16 %v2027, %v2026
      %v2065 = vpack.c.bf16 %v2029, %v2028
      %v2066 = vpack.c.bf16 %v2031, %v2030
      %v2067 = vpack.c.bf16 %v2033, %v2032
      %v2068 = vpack.c.bf16 %v2035, %v2034
      %v2069 = vpack.c.bf16 %v2037, %v2036
      %v2070 = vpack.c.bf16 %v2038, %v2038
      %v2071 = vld [vmem:[%s5] sm:$0xf]
      %v2072 = vld [vmem:[%s5 + $0x4] sm:$0xf]
      %v2073 = vld [vmem:[%s5 + $0x8] sm:$0xf]
      %v2074 = vld [vmem:[%s5 + $0xc] sm:$0xf]
      %v2075 = vld [vmem:[%s5 + $0x10] sm:$0xf]
      %v2076 = vld [vmem:[%s5 + $0x14] sm:$0xf]
      %v2077 = vld [vmem:[%s5 + $0x18] sm:$0xf]
      %v2078 = vld [vmem:[%s5 + $0x1c] sm:$0xf]
      %v2079 = vld [vmem:[%s5 + $0x20] sm:$0xf]
      %v2080 = vld [vmem:[%s5 + $0x24] sm:$0xf]
      %v2081 = vld [vmem:[%s5 + $0x28] sm:$0xf]
      %v2082 = vld [vmem:[%s5 + $0x2c] sm:$0xf]
      %v2083 = vld [vmem:[%s5 + $0x30] sm:$0xf]
      %v2084 = vld [vmem:[%s5 + $0x34] sm:$0xf]
      %v2085 = vld [vmem:[%s5 + $0x38] sm:$0xf]
      %v2086 = vld [vmem:[%s5 + $0x3c] sm:$0xf]
      %v2087 = vld [vmem:[%s6] sm:$0x1]
      %v2089 = vlaneseq
      %v2090 = vshrl.u32 %v2089, 7
      %v2091 = vsub.s32 0, %v2090
      %v2092 = vrot.slane %v2087, %v2091
      %v2110 = vunpack.c.l.b16 %v2071
      %v2111 = vunpack.c.l.b16 %v2072
      %v2112 = vunpack.c.l.b16 %v2073
      %v2113 = vunpack.c.l.b16 %v2074
      %v2114 = vunpack.c.l.b16 %v2075
      %v2115 = vunpack.c.l.b16 %v2076
      %v2116 = vunpack.c.l.b16 %v2077
      %v2117 = vunpack.c.l.b16 %v2078
      %v2118 = vunpack.c.l.b16 %v2079
      %v2119 = vunpack.c.l.b16 %v2080
      %v2120 = vunpack.c.l.b16 %v2081
      %v2121 = vunpack.c.l.b16 %v2082
      %v2122 = vunpack.c.l.b16 %v2083
      %v2123 = vunpack.c.l.b16 %v2084
      %v2124 = vunpack.c.l.b16 %v2085
      %v2125 = vunpack.c.l.b16 %v2086
      %v2126 = vpack.c.b16 %v2111, %v2110
      %v2127 = vpack.c.b16 %v2113, %v2112
      %v2128 = vpack.c.b16 %v2115, %v2114
      %v2129 = vpack.c.b16 %v2117, %v2116
      %v2130 = vpack.c.b16 %v2119, %v2118
      %v2131 = vpack.c.b16 %v2121, %v2120
      %v2132 = vpack.c.b16 %v2123, %v2122
      %v2133 = vpack.c.b16 %v2125, %v2124
      %2142 = vmatprep.subr.bf16.mxu0 0
      %2143 = vmatpush1.bf16.msra.mxu0 %v2133
      %2144 = vmatprep.subr.bf16.mxu0 0
      %2145 = vmatpush1.bf16.msra.mxu0 %v2132
      %2146 = vmatprep.subr.bf16.mxu0 0
      %2147 = vmatpush1.bf16.msra.mxu0 %v2131
      %2148 = vmatprep.subr.bf16.mxu0 0
      %2149 = vmatpush1.bf16.msra.mxu0 %v2130
      %2150 = vmatprep.subr.bf16.mxu0 0
      %2151 = vmatpush1.bf16.msra.mxu0 %v2129
      %2152 = vmatprep.subr.bf16.mxu0 0
      %2153 = vmatpush1.bf16.msra.mxu0 %v2128
      %2154 = vmatprep.subr.bf16.mxu0 0
      %2155 = vmatpush1.bf16.msra.mxu0 %v2127
      %2156 = vmatprep.subr.bf16.mxu0 0
      %2157 = vmatpush1.bf16.msra.mxu0 %v2126
      %2158 = vmatprep.subr.bf16.mxu0 0
      %2159 = vmatpush2.bf16.msra.mxu0 0
      %2160 = vmatprep.subr.bf16.mxu0 0
      %2161 = vmatpush2.bf16.msra.mxu0 0
      %2162 = vmatprep.subr.bf16.mxu0 0
      %2163 = vmatpush2.bf16.msra.mxu0 0
      %2164 = vmatprep.subr.bf16.mxu0 0
      %2165 = vmatpush2.bf16.msra.mxu0 0
      %2166 = vmatprep.subr.bf16.mxu0 0
      %2167 = vmatpush2.bf16.msra.mxu0 0
      %2168 = vmatprep.subr.bf16.mxu0 0
      %2169 = vmatpush2.bf16.msra.mxu0 0
      %2170 = vmatprep.subr.bf16.mxu0 0
      %2171 = vmatpush2.bf16.msra.mxu0 0
      %2172 = vmatprep.subr.bf16.mxu0 0
      %2173 = vmatpush2.bf16.msra.mxu0 0
      %2174 = vmatprep.mubr.bf16.mxu0 0
      %2175 = vmatmul.mubr.bf16.gmra.mxu0 %v2039
      %v2176 = vpop.f32.mrf.mxu0
      %v2177 = vadd.f32 %v2092, %v2176
      %v2178 = vpop.f32.mrf.mxu0
      %v2179 = vpop.f32.mrf.mxu0
      %v2180 = vadd.f32 %v2092, %v2179
      %v2181 = vpop.f32.mrf.mxu0
      %2182 = vmatprep.mubr.bf16.mxu0 0
      %2183 = vmatmul.mubr.bf16.gmra.mxu0 %v2040
      %v2184 = vpop.f32.mrf.mxu0
      %v2185 = vadd.f32 %v2092, %v2184
      %v2186 = vpop.f32.mrf.mxu0
      %v2187 = vpop.f32.mrf.mxu0
      %v2188 = vadd.f32 %v2092, %v2187
      %v2189 = vpop.f32.mrf.mxu0
      %2190 = vmatprep.mubr.bf16.mxu0 0
      %2191 = vmatmul.mubr.bf16.gmra.mxu0 %v2041
      %v2192 = vpop.f32.mrf.mxu0
      %v2193 = vadd.f32 %v2092, %v2192
      %v2194 = vpop.f32.mrf.mxu0
      %v2195 = vpop.f32.mrf.mxu0
      %v2196 = vadd.f32 %v2092, %v2195
      %v2197 = vpop.f32.mrf.mxu0
      %2198 = vmatprep.mubr.bf16.mxu0 0
      %2199 = vmatmul.mubr.bf16.gmra.mxu0 %v2042
      %v2200 = vpop.f32.mrf.mxu0
      %v2201 = vadd.f32 %v2092, %v2200
      %v2202 = vpop.f32.mrf.mxu0
      %v2203 = vpop.f32.mrf.mxu0
      %v2204 = vadd.f32 %v2092, %v2203
      %v2205 = vpop.f32.mrf.mxu0
      %2206 = vmatprep.mubr.bf16.mxu0 0
      %2207 = vmatmul.mubr.bf16.gmra.mxu0 %v2043
      %v2208 = vpop.f32.mrf.mxu0
      %v2209 = vadd.f32 %v2092, %v2208
      %v2210 = vpop.f32.mrf.mxu0
      %v2211 = vpop.f32.mrf.mxu0
      %v2212 = vadd.f32 %v2092, %v2211
      %v2213 = vpop.f32.mrf.mxu0
      %2214 = vmatprep.mubr.bf16.mxu0 0
      %2215 = vmatmul.mubr.bf16.gmra.mxu0 %v2044
      %v2216 = vpop.f32.mrf.mxu0
      %v2217 = vadd.f32 %v2092, %v2216
      %v2218 = vpop.f32.mrf.mxu0
      %v2219 = vpop.f32.mrf.mxu0
      %v2220 = vadd.f32 %v2092, %v2219
      %v2221 = vpop.f32.mrf.mxu0
      %2222 = vmatprep.mubr.bf16.mxu0 0
      %2223 = vmatmul.mubr.bf16.gmra.mxu0 %v2045
      %v2224 = vpop.f32.mrf.mxu0
      %v2225 = vadd.f32 %v2092, %v2224
      %v2226 = vpop.f32.mrf.mxu0
      %v2227 = vpop.f32.mrf.mxu0
      %v2228 = vadd.f32 %v2092, %v2227
      %v2229 = vpop.f32.mrf.mxu0
      %2230 = vmatprep.mubr.bf16.mxu0 0
      %2231 = vmatmul.mubr.bf16.gmra.mxu0 %v2046
      %v2232 = vpop.f32.mrf.mxu0
      %v2233 = vadd.f32 %v2092, %v2232
      %v2234 = vpop.f32.mrf.mxu0
      %v2235 = vpop.f32.mrf.mxu0
      %v2236 = vadd.f32 %v2092, %v2235
      %v2237 = vpop.f32.mrf.mxu0
      %2238 = vmatprep.mubr.bf16.mxu0 0
      %2239 = vmatmul.mubr.bf16.gmra.mxu0 %v2047
      %v2240 = vpop.f32.mrf.mxu0
      %v2241 = vadd.f32 %v2092, %v2240
      %v2242 = vpop.f32.mrf.mxu0
      %v2243 = vpop.f32.mrf.mxu0
      %v2244 = vadd.f32 %v2092, %v2243
      %v2245 = vpop.f32.mrf.mxu0
      %2246 = vmatprep.mubr.bf16.mxu0 0
      %2247 = vmatmul.mubr.bf16.gmra.mxu0 %v2048
      %v2248 = vpop.f32.mrf.mxu0
      %v2249 = vadd.f32 %v2092, %v2248
      %v2250 = vpop.f32.mrf.mxu0
      %v2251 = vpop.f32.mrf.mxu0
      %v2252 = vadd.f32 %v2092, %v2251
      %v2253 = vpop.f32.mrf.mxu0
      %2254 = vmatprep.mubr.bf16.mxu0 0
      %2255 = vmatmul.mubr.bf16.gmra.mxu0 %v2049
      %v2256 = vpop.f32.mrf.mxu0
      %v2257 = vadd.f32 %v2092, %v2256
      %v2258 = vpop.f32.mrf.mxu0
      %v2259 = vpop.f32.mrf.mxu0
      %v2260 = vadd.f32 %v2092, %v2259
      %v2261 = vpop.f32.mrf.mxu0
      %2262 = vmatprep.mubr.bf16.mxu0 0
      %2263 = vmatmul.mubr.bf16.gmra.mxu0 %v2050
      %v2264 = vpop.f32.mrf.mxu0
      %v2265 = vadd.f32 %v2092, %v2264
      %v2266 = vpop.f32.mrf.mxu0
      %v2267 = vpop.f32.mrf.mxu0
      %v2268 = vadd.f32 %v2092, %v2267
      %v2269 = vpop.f32.mrf.mxu0
      %2270 = vmatprep.mubr.bf16.mxu0 0
      %2271 = vmatmul.mubr.bf16.gmra.mxu0 %v2051
      %v2272 = vpop.f32.mrf.mxu0
      %v2273 = vadd.f32 %v2092, %v2272
      %v2274 = vpop.f32.mrf.mxu0
      %v2275 = vpop.f32.mrf.mxu0
      %v2276 = vadd.f32 %v2092, %v2275
      %v2277 = vpop.f32.mrf.mxu0
      %2278 = vmatprep.mubr.bf16.mxu0 0
      %2279 = vmatmul.mubr.bf16.gmra.mxu0 %v2052
      %v2280 = vpop.f32.mrf.mxu0
      %v2281 = vadd.f32 %v2092, %v2280
      %v2282 = vpop.f32.mrf.mxu0
      %v2283 = vpop.f32.mrf.mxu0
      %v2284 = vadd.f32 %v2092, %v2283
      %v2285 = vpop.f32.mrf.mxu0
      %2286 = vmatprep.mubr.bf16.mxu0 0
      %2287 = vmatmul.mubr.bf16.gmra.mxu0 %v2053
      %v2288 = vpop.f32.mrf.mxu0
      %v2289 = vadd.f32 %v2092, %v2288
      %v2290 = vpop.f32.mrf.mxu0
      %v2291 = vpop.f32.mrf.mxu0
      %v2292 = vadd.f32 %v2092, %v2291
      %v2293 = vpop.f32.mrf.mxu0
      %2294 = vmatprep.mubr.bf16.mxu0 0
      %2295 = vmatmul.mubr.bf16.gmra.mxu0 %v2054
      %v2296 = vpop.f32.mrf.mxu0
      %v2297 = vadd.f32 %v2092, %v2296
      %v2298 = vpop.f32.mrf.mxu0
      %v2299 = vpop.f32.mrf.mxu0
      %v2300 = vadd.f32 %v2092, %v2299
      %v2301 = vpop.f32.mrf.mxu0
      %2302 = vmatprep.mubr.bf16.mxu0 0
      %2303 = vmatmul.mubr.bf16.gmra.mxu0 %v2055
      %v2304 = vpop.f32.mrf.mxu0
      %v2305 = vadd.f32 %v2092, %v2304
      %v2306 = vpop.f32.mrf.mxu0
      %v2307 = vpop.f32.mrf.mxu0
      %v2308 = vadd.f32 %v2092, %v2307
      %v2309 = vpop.f32.mrf.mxu0
      %2310 = vmatprep.mubr.bf16.mxu0 0
      %2311 = vmatmul.mubr.bf16.gmra.mxu0 %v2056
      %v2312 = vpop.f32.mrf.mxu0
      %v2313 = vadd.f32 %v2092, %v2312
      %v2314 = vpop.f32.mrf.mxu0
      %v2315 = vpop.f32.mrf.mxu0
      %v2316 = vadd.f32 %v2092, %v2315
      %v2317 = vpop.f32.mrf.mxu0
      %2318 = vmatprep.mubr.bf16.mxu0 0
      %2319 = vmatmul.mubr.bf16.gmra.mxu0 %v2057
      %v2320 = vpop.f32.mrf.mxu0
      %v2321 = vadd.f32 %v2092, %v2320
      %v2322 = vpop.f32.mrf.mxu0
      %v2323 = vpop.f32.mrf.mxu0
      %v2324 = vadd.f32 %v2092, %v2323
      %v2325 = vpop.f32.mrf.mxu0
      %2326 = vmatprep.mubr.bf16.mxu0 0
      %2327 = vmatmul.mubr.bf16.gmra.mxu0 %v2058
      %v2328 = vpop.f32.mrf.mxu0
      %v2329 = vadd.f32 %v2092, %v2328
      %v2330 = vpop.f32.mrf.mxu0
      %v2331 = vpop.f32.mrf.mxu0
      %v2332 = vadd.f32 %v2092, %v2331
      %v2333 = vpop.f32.mrf.mxu0
      %2334 = vmatprep.mubr.bf16.mxu0 0
      %2335 = vmatmul.mubr.bf16.gmra.mxu0 %v2059
      %v2336 = vpop.f32.mrf.mxu0
      %v2337 = vadd.f32 %v2092, %v2336
      %v2338 = vpop.f32.mrf.mxu0
      %v2339 = vpop.f32.mrf.mxu0
      %v2340 = vadd.f32 %v2092, %v2339
      %v2341 = vpop.f32.mrf.mxu0
      %2342 = vmatprep.mubr.bf16.mxu0 0
      %2343 = vmatmul.mubr.bf16.gmra.mxu0 %v2060
      %v2344 = vpop.f32.mrf.mxu0
      %v2345 = vadd.f32 %v2092, %v2344
      %v2346 = vpop.f32.mrf.mxu0
      %v2347 = vpop.f32.mrf.mxu0
      %v2348 = vadd.f32 %v2092, %v2347
      %v2349 = vpop.f32.mrf.mxu0
      %2350 = vmatprep.mubr.bf16.mxu0 0
      %2351 = vmatmul.mubr.bf16.gmra.mxu0 %v2061
      %v2352 = vpop.f32.mrf.mxu0
      %v2353 = vadd.f32 %v2092, %v2352
      %v2354 = vpop.f32.mrf.mxu0
      %v2355 = vpop.f32.mrf.mxu0
      %v2356 = vadd.f32 %v2092, %v2355
      %v2357 = vpop.f32.mrf.mxu0
      %2358 = vmatprep.mubr.bf16.mxu0 0
      %2359 = vmatmul.mubr.bf16.gmra.mxu0 %v2062
      %v2360 = vpop.f32.mrf.mxu0
      %v2361 = vadd.f32 %v2092, %v2360
      %v2362 = vpop.f32.mrf.mxu0
      %v2363 = vpop.f32.mrf.mxu0
      %v2364 = vadd.f32 %v2092, %v2363
      %v2365 = vpop.f32.mrf.mxu0
      %2366 = vmatprep.mubr.bf16.mxu0 0
      %2367 = vmatmul.mubr.bf16.gmra.mxu0 %v2063
      %v2368 = vpop.f32.mrf.mxu0
      %v2369 = vadd.f32 %v2092, %v2368
      %v2370 = vpop.f32.mrf.mxu0
      %v2371 = vpop.f32.mrf.mxu0
      %v2372 = vadd.f32 %v2092, %v2371
      %v2373 = vpop.f32.mrf.mxu0
      %2374 = vmatprep.mubr.bf16.mxu0 0
      %2375 = vmatmul.mubr.bf16.gmra.mxu0 %v2064
      %v2376 = vpop.f32.mrf.mxu0
      %v2377 = vadd.f32 %v2092, %v2376
      %v2378 = vpop.f32.mrf.mxu0
      %v2379 = vpop.f32.mrf.mxu0
      %v2380 = vadd.f32 %v2092, %v2379
      %v2381 = vpop.f32.mrf.mxu0
      %2382 = vmatprep.mubr.bf16.mxu0 0
      %2383 = vmatmul.mubr.bf16.gmra.mxu0 %v2065
      %v2384 = vpop.f32.mrf.mxu0
      %v2385 = vadd.f32 %v2092, %v2384
      %v2386 = vpop.f32.mrf.mxu0
      %v2387 = vpop.f32.mrf.mxu0
      %v2388 = vadd.f32 %v2092, %v2387
      %v2389 = vpop.f32.mrf.mxu0
      %2390 = vmatprep.mubr.bf16.mxu0 0
      %2391 = vmatmul.mubr.bf16.gmra.mxu0 %v2066
      %v2392 = vpop.f32.mrf.mxu0
      %v2393 = vadd.f32 %v2092, %v2392
      %v2394 = vpop.f32.mrf.mxu0
      %v2395 = vpop.f32.mrf.mxu0
      %v2396 = vadd.f32 %v2092, %v2395
      %v2397 = vpop.f32.mrf.mxu0
      %2398 = vmatprep.mubr.bf16.mxu0 0
      %2399 = vmatmul.mubr.bf16.gmra.mxu0 %v2067
      %v2400 = vpop.f32.mrf.mxu0
      %v2401 = vadd.f32 %v2092, %v2400
      %v2402 = vpop.f32.mrf.mxu0
      %v2403 = vpop.f32.mrf.mxu0
      %v2404 = vadd.f32 %v2092, %v2403
      %v2405 = vpop.f32.mrf.mxu0
      %2406 = vmatprep.mubr.bf16.mxu0 0
      %2407 = vmatmul.mubr.bf16.gmra.mxu0 %v2068
      %v2408 = vpop.f32.mrf.mxu0
      %v2409 = vadd.f32 %v2092, %v2408
      %v2410 = vpop.f32.mrf.mxu0
      %v2411 = vpop.f32.mrf.mxu0
      %v2412 = vadd.f32 %v2092, %v2411
      %v2413 = vpop.f32.mrf.mxu0
      %2414 = vmatprep.mubr.bf16.mxu0 0
      %2415 = vmatmul.mubr.bf16.gmra.mxu0 %v2069
      %v2416 = vpop.f32.mrf.mxu0
      %v2417 = vadd.f32 %v2092, %v2416
      %v2418 = vpop.f32.mrf.mxu0
      %v2419 = vpop.f32.mrf.mxu0
      %v2420 = vadd.f32 %v2092, %v2419
      %v2421 = vpop.f32.mrf.mxu0
      %2422 = vmatprep.mubr.bf16.mxu0 0
      %2423 = vmatmul.mubr.bf16.gmra.mxu0 %v2070
      %v2424 = vpop.f32.mrf.mxu0
      %v2425 = vadd.f32 %v2092, %v2424
      %v2426 = vpop.f32.mrf.mxu0
      %v2427 = vpop.f32.mrf.mxu0
      %v2428 = vpop.f32.mrf.mxu0
      %2429 = vdwg.mxu0
      %v2430 = vmax.f32 %v2177, 0.0
      %v2431 = vmax.f32 %v2180, 0.0
      %v2432 = vmax.f32 %v2185, 0.0
      %v2433 = vmax.f32 %v2188, 0.0
      %v2434 = vmax.f32 %v2193, 0.0
      %v2435 = vmax.f32 %v2196, 0.0
      %v2436 = vmax.f32 %v2201, 0.0
      %v2437 = vmax.f32 %v2204, 0.0
      %v2438 = vmax.f32 %v2209, 0.0
      %v2439 = vmax.f32 %v2212, 0.0
      %v2440 = vmax.f32 %v2217, 0.0
      %v2441 = vmax.f32 %v2220, 0.0
      %v2442 = vmax.f32 %v2225, 0.0
      %v2443 = vmax.f32 %v2228, 0.0
      %v2444 = vmax.f32 %v2233, 0.0
      %v2445 = vmax.f32 %v2236, 0.0
      %v2446 = vmax.f32 %v2241, 0.0
      %v2447 = vmax.f32 %v2244, 0.0
      %v2448 = vmax.f32 %v2249, 0.0
      %v2449 = vmax.f32 %v2252, 0.0
      %v2450 = vmax.f32 %v2257, 0.0
      %v2451 = vmax.f32 %v2260, 0.0
      %v2452 = vmax.f32 %v2265, 0.0
      %v2453 = vmax.f32 %v2268, 0.0
      %v2454 = vmax.f32 %v2273, 0.0
      %v2455 = vmax.f32 %v2276, 0.0
      %v2456 = vmax.f32 %v2281, 0.0
      %v2457 = vmax.f32 %v2284, 0.0
      %v2458 = vmax.f32 %v2289, 0.0
      %v2459 = vmax.f32 %v2292, 0.0
      %v2460 = vmax.f32 %v2297, 0.0
      %v2461 = vmax.f32 %v2300, 0.0
      %v2462 = vmax.f32 %v2305, 0.0
      %v2463 = vmax.f32 %v2308, 0.0
      %v2464 = vmax.f32 %v2313, 0.0
      %v2465 = vmax.f32 %v2316, 0.0
      %v2466 = vmax.f32 %v2321, 0.0
      %v2467 = vmax.f32 %v2324, 0.0
      %v2468 = vmax.f32 %v2329, 0.0
      %v2469 = vmax.f32 %v2332, 0.0
      %v2470 = vmax.f32 %v2337, 0.0
      %v2471 = vmax.f32 %v2340, 0.0
      %v2472 = vmax.f32 %v2345, 0.0
      %v2473 = vmax.f32 %v2348, 0.0
      %v2474 = vmax.f32 %v2353, 0.0
      %v2475 = vmax.f32 %v2356, 0.0
      %v2476 = vmax.f32 %v2361, 0.0
      %v2477 = vmax.f32 %v2364, 0.0
      %v2478 = vmax.f32 %v2369, 0.0
      %v2479 = vmax.f32 %v2372, 0.0
      %v2480 = vmax.f32 %v2377, 0.0
      %v2481 = vmax.f32 %v2380, 0.0
      %v2482 = vmax.f32 %v2385, 0.0
      %v2483 = vmax.f32 %v2388, 0.0
      %v2484 = vmax.f32 %v2393, 0.0
      %v2485 = vmax.f32 %v2396, 0.0
      %v2486 = vmax.f32 %v2401, 0.0
      %v2487 = vmax.f32 %v2404, 0.0
      %v2488 = vmax.f32 %v2409, 0.0
      %v2489 = vmax.f32 %v2412, 0.0
      %v2490 = vmax.f32 %v2417, 0.0
      %v2491 = vmax.f32 %v2420, 0.0
      %v2492 = vmax.f32 %v2425, 0.0
      %v2493 = vpack.c.bf16 %v2431, %v2430
      %v2494 = vpack.c.bf16 %v2433, %v2432
      %v2495 = vpack.c.bf16 %v2435, %v2434
      %v2496 = vpack.c.bf16 %v2437, %v2436
      %v2497 = vpack.c.bf16 %v2439, %v2438
      %v2498 = vpack.c.bf16 %v2441, %v2440
      %v2499 = vpack.c.bf16 %v2443, %v2442
      %v2500 = vpack.c.bf16 %v2445, %v2444
      %v2501 = vpack.c.bf16 %v2447, %v2446
      %v2502 = vpack.c.bf16 %v2449, %v2448
      %v2503 = vpack.c.bf16 %v2451, %v2450
      %v2504 = vpack.c.bf16 %v2453, %v2452
      %v2505 = vpack.c.bf16 %v2455, %v2454
      %v2506 = vpack.c.bf16 %v2457, %v2456
      %v2507 = vpack.c.bf16 %v2459, %v2458
      %v2508 = vpack.c.bf16 %v2461, %v2460
      %v2509 = vpack.c.bf16 %v2463, %v2462
      %v2510 = vpack.c.bf16 %v2465, %v2464
      %v2511 = vpack.c.bf16 %v2467, %v2466
      %v2512 = vpack.c.bf16 %v2469, %v2468
      %v2513 = vpack.c.bf16 %v2471, %v2470
      %v2514 = vpack.c.bf16 %v2473, %v2472
      %v2515 = vpack.c.bf16 %v2475, %v2474
      %v2516 = vpack.c.bf16 %v2477, %v2476
      %v2517 = vpack.c.bf16 %v2479, %v2478
      %v2518 = vpack.c.bf16 %v2481, %v2480
      %v2519 = vpack.c.bf16 %v2483, %v2482
      %v2520 = vpack.c.bf16 %v2485, %v2484
      %v2521 = vpack.c.bf16 %v2487, %v2486
      %v2522 = vpack.c.bf16 %v2489, %v2488
      %v2523 = vpack.c.bf16 %v2491, %v2490
      %v2524 = vpack.c.bf16 %v2492, %v2492
      %v2525 = vld [vmem:[%s7] sm:$0xf]
      %v2526 = vld [vmem:[%s7 + $0x4] sm:$0xf]
      %v2527 = vld [vmem:[%s7 + $0x8] sm:$0xf]
      %v2528 = vld [vmem:[%s7 + $0xc] sm:$0xf]
      %v2529 = vld [vmem:[%s7 + $0x10] sm:$0xf]
      %v2530 = vld [vmem:[%s7 + $0x14] sm:$0xf]
      %v2531 = vld [vmem:[%s7 + $0x18] sm:$0xf]
      %v2532 = vld [vmem:[%s7 + $0x1c] sm:$0xf]
      %v2533 = vld [vmem:[%s7 + $0x20] sm:$0xf]
      %v2534 = vld [vmem:[%s7 + $0x24] sm:$0xf]
      %v2535 = vld [vmem:[%s7 + $0x28] sm:$0xf]
      %v2536 = vld [vmem:[%s7 + $0x2c] sm:$0xf]
      %v2537 = vld [vmem:[%s7 + $0x30] sm:$0xf]
      %v2538 = vld [vmem:[%s7 + $0x34] sm:$0xf]
      %v2539 = vld [vmem:[%s7 + $0x38] sm:$0xf]
      %v2540 = vld [vmem:[%s7 + $0x3c] sm:$0xf]
      %v2541 = vld [vmem:[%s8] sm:$0x1]
      %v2543 = vlaneseq
      %v2544 = vshrl.u32 %v2543, 7
      %v2545 = vsub.s32 0, %v2544
      %v2546 = vrot.slane %v2541, %v2545
      %v2564 = vunpack.c.l.b16 %v2525
      %v2565 = vunpack.c.l.b16 %v2526
      %v2566 = vunpack.c.l.b16 %v2527
      %v2567 = vunpack.c.l.b16 %v2528
      %v2568 = vunpack.c.l.b16 %v2529
      %v2569 = vunpack.c.l.b16 %v2530
      %v2570 = vunpack.c.l.b16 %v2531
      %v2571 = vunpack.c.l.b16 %v2532
      %v2572 = vunpack.c.l.b16 %v2533
      %v2573 = vunpack.c.l.b16 %v2534
      %v2574 = vunpack.c.l.b16 %v2535
      %v2575 = vunpack.c.l.b16 %v2536
      %v2576 = vunpack.c.l.b16 %v2537
      %v2577 = vunpack.c.l.b16 %v2538
      %v2578 = vunpack.c.l.b16 %v2539
      %v2579 = vunpack.c.l.b16 %v2540
      %v2580 = vpack.c.b16 %v2565, %v2564
      %v2581 = vpack.c.b16 %v2567, %v2566
      %v2582 = vpack.c.b16 %v2569, %v2568
      %v2583 = vpack.c.b16 %v2571, %v2570
      %v2584 = vpack.c.b16 %v2573, %v2572
      %v2585 = vpack.c.b16 %v2575, %v2574
      %v2586 = vpack.c.b16 %v2577, %v2576
      %v2587 = vpack.c.b16 %v2579, %v2578
      %2596 = vmatprep.subr.bf16.mxu0 0
      %2597 = vmatpush1.bf16.msra.mxu0 %v2587
      %2598 = vmatprep.subr.bf16.mxu0 0
      %2599 = vmatpush1.bf16.msra.mxu0 %v2586
      %2600 = vmatprep.subr.bf16.mxu0 0
      %2601 = vmatpush1.bf16.msra.mxu0 %v2585
      %2602 = vmatprep.subr.bf16.mxu0 0
      %2603 = vmatpush1.bf16.msra.mxu0 %v2584
      %2604 = vmatprep.subr.bf16.mxu0 0
      %2605 = vmatpush1.bf16.msra.mxu0 %v2583
      %2606 = vmatprep.subr.bf16.mxu0 0
      %2607 = vmatpush1.bf16.msra.mxu0 %v2582
      %2608 = vmatprep.subr.bf16.mxu0 0
      %2609 = vmatpush1.bf16.msra.mxu0 %v2581
      %2610 = vmatprep.subr.bf16.mxu0 0
      %2611 = vmatpush1.bf16.msra.mxu0 %v2580
      %2612 = vmatprep.subr.bf16.mxu0 0
      %2613 = vmatpush2.bf16.msra.mxu0 0
      %2614 = vmatprep.subr.bf16.mxu0 0
      %2615 = vmatpush2.bf16.msra.mxu0 0
      %2616 = vmatprep.subr.bf16.mxu0 0
      %2617 = vmatpush2.bf16.msra.mxu0 0
      %2618 = vmatprep.subr.bf16.mxu0 0
      %2619 = vmatpush2.bf16.msra.mxu0 0
      %2620 = vmatprep.subr.bf16.mxu0 0
      %2621 = vmatpush2.bf16.msra.mxu0 0
      %2622 = vmatprep.subr.bf16.mxu0 0
      %2623 = vmatpush2.bf16.msra.mxu0 0
      %2624 = vmatprep.subr.bf16.mxu0 0
      %2625 = vmatpush2.bf16.msra.mxu0 0
      %2626 = vmatprep.subr.bf16.mxu0 0
      %2627 = vmatpush2.bf16.msra.mxu0 0
      %2628 = vmatprep.mubr.bf16.mxu0 0
      %2629 = vmatmul.mubr.bf16.gmra.mxu0 %v2493
      %v2630 = vpop.f32.mrf.mxu0
      %v2631 = vadd.f32 %v2546, %v2630
      %v2632 = vpop.f32.mrf.mxu0
      %v2633 = vpop.f32.mrf.mxu0
      %v2634 = vadd.f32 %v2546, %v2633
      %v2635 = vpop.f32.mrf.mxu0
      %2636 = vmatprep.mubr.bf16.mxu0 0
      %2637 = vmatmul.mubr.bf16.gmra.mxu0 %v2494
      %v2638 = vpop.f32.mrf.mxu0
      %v2639 = vadd.f32 %v2546, %v2638
      %v2640 = vpop.f32.mrf.mxu0
      %v2641 = vpop.f32.mrf.mxu0
      %v2642 = vadd.f32 %v2546, %v2641
      %v2643 = vpop.f32.mrf.mxu0
      %2644 = vmatprep.mubr.bf16.mxu0 0
      %2645 = vmatmul.mubr.bf16.gmra.mxu0 %v2495
      %v2646 = vpop.f32.mrf.mxu0
      %v2647 = vadd.f32 %v2546, %v2646
      %v2648 = vpop.f32.mrf.mxu0
      %v2649 = vpop.f32.mrf.mxu0
      %v2650 = vadd.f32 %v2546, %v2649
      %v2651 = vpop.f32.mrf.mxu0
      %2652 = vmatprep.mubr.bf16.mxu0 0
      %2653 = vmatmul.mubr.bf16.gmra.mxu0 %v2496
      %v2654 = vpop.f32.mrf.mxu0
      %v2655 = vadd.f32 %v2546, %v2654
      %v2656 = vpop.f32.mrf.mxu0
      %v2657 = vpop.f32.mrf.mxu0
      %v2658 = vadd.f32 %v2546, %v2657
      %v2659 = vpop.f32.mrf.mxu0
      %2660 = vmatprep.mubr.bf16.mxu0 0
      %2661 = vmatmul.mubr.bf16.gmra.mxu0 %v2497
      %v2662 = vpop.f32.mrf.mxu0
      %v2663 = vadd.f32 %v2546, %v2662
      %v2664 = vpop.f32.mrf.mxu0
      %v2665 = vpop.f32.mrf.mxu0
      %v2666 = vadd.f32 %v2546, %v2665
      %v2667 = vpop.f32.mrf.mxu0
      %2668 = vmatprep.mubr.bf16.mxu0 0
      %2669 = vmatmul.mubr.bf16.gmra.mxu0 %v2498
      %v2670 = vpop.f32.mrf.mxu0
      %v2671 = vadd.f32 %v2546, %v2670
      %v2672 = vpop.f32.mrf.mxu0
      %v2673 = vpop.f32.mrf.mxu0
      %v2674 = vadd.f32 %v2546, %v2673
      %v2675 = vpop.f32.mrf.mxu0
      %2676 = vmatprep.mubr.bf16.mxu0 0
      %2677 = vmatmul.mubr.bf16.gmra.mxu0 %v2499
      %v2678 = vpop.f32.mrf.mxu0
      %v2679 = vadd.f32 %v2546, %v2678
      %v2680 = vpop.f32.mrf.mxu0
      %v2681 = vpop.f32.mrf.mxu0
      %v2682 = vadd.f32 %v2546, %v2681
      %v2683 = vpop.f32.mrf.mxu0
      %2684 = vmatprep.mubr.bf16.mxu0 0
      %2685 = vmatmul.mubr.bf16.gmra.mxu0 %v2500
      %v2686 = vpop.f32.mrf.mxu0
      %v2687 = vadd.f32 %v2546, %v2686
      %v2688 = vpop.f32.mrf.mxu0
      %v2689 = vpop.f32.mrf.mxu0
      %v2690 = vadd.f32 %v2546, %v2689
      %v2691 = vpop.f32.mrf.mxu0
      %2692 = vmatprep.mubr.bf16.mxu0 0
      %2693 = vmatmul.mubr.bf16.gmra.mxu0 %v2501
      %v2694 = vpop.f32.mrf.mxu0
      %v2695 = vadd.f32 %v2546, %v2694
      %v2696 = vpop.f32.mrf.mxu0
      %v2697 = vpop.f32.mrf.mxu0
      %v2698 = vadd.f32 %v2546, %v2697
      %v2699 = vpop.f32.mrf.mxu0
      %2700 = vmatprep.mubr.bf16.mxu0 0
      %2701 = vmatmul.mubr.bf16.gmra.mxu0 %v2502
      %v2702 = vpop.f32.mrf.mxu0
      %v2703 = vadd.f32 %v2546, %v2702
      %v2704 = vpop.f32.mrf.mxu0
      %v2705 = vpop.f32.mrf.mxu0
      %v2706 = vadd.f32 %v2546, %v2705
      %v2707 = vpop.f32.mrf.mxu0
      %2708 = vmatprep.mubr.bf16.mxu0 0
      %2709 = vmatmul.mubr.bf16.gmra.mxu0 %v2503
      %v2710 = vpop.f32.mrf.mxu0
      %v2711 = vadd.f32 %v2546, %v2710
      %v2712 = vpop.f32.mrf.mxu0
      %v2713 = vpop.f32.mrf.mxu0
      %v2714 = vadd.f32 %v2546, %v2713
      %v2715 = vpop.f32.mrf.mxu0
      %2716 = vmatprep.mubr.bf16.mxu0 0
      %2717 = vmatmul.mubr.bf16.gmra.mxu0 %v2504
      %v2718 = vpop.f32.mrf.mxu0
      %v2719 = vadd.f32 %v2546, %v2718
      %v2720 = vpop.f32.mrf.mxu0
      %v2721 = vpop.f32.mrf.mxu0
      %v2722 = vadd.f32 %v2546, %v2721
      %v2723 = vpop.f32.mrf.mxu0
      %2724 = vmatprep.mubr.bf16.mxu0 0
      %2725 = vmatmul.mubr.bf16.gmra.mxu0 %v2505
      %v2726 = vpop.f32.mrf.mxu0
      %v2727 = vadd.f32 %v2546, %v2726
      %v2728 = vpop.f32.mrf.mxu0
      %v2729 = vpop.f32.mrf.mxu0
      %v2730 = vadd.f32 %v2546, %v2729
      %v2731 = vpop.f32.mrf.mxu0
      %2732 = vmatprep.mubr.bf16.mxu0 0
      %2733 = vmatmul.mubr.bf16.gmra.mxu0 %v2506
      %v2734 = vpop.f32.mrf.mxu0
      %v2735 = vadd.f32 %v2546, %v2734
      %v2736 = vpop.f32.mrf.mxu0
      %v2737 = vpop.f32.mrf.mxu0
      %v2738 = vadd.f32 %v2546, %v2737
      %v2739 = vpop.f32.mrf.mxu0
      %2740 = vmatprep.mubr.bf16.mxu0 0
      %2741 = vmatmul.mubr.bf16.gmra.mxu0 %v2507
      %v2742 = vpop.f32.mrf.mxu0
      %v2743 = vadd.f32 %v2546, %v2742
      %v2744 = vpop.f32.mrf.mxu0
      %v2745 = vpop.f32.mrf.mxu0
      %v2746 = vadd.f32 %v2546, %v2745
      %v2747 = vpop.f32.mrf.mxu0
      %2748 = vmatprep.mubr.bf16.mxu0 0
      %2749 = vmatmul.mubr.bf16.gmra.mxu0 %v2508
      %v2750 = vpop.f32.mrf.mxu0
      %v2751 = vadd.f32 %v2546, %v2750
      %v2752 = vpop.f32.mrf.mxu0
      %v2753 = vpop.f32.mrf.mxu0
      %v2754 = vadd.f32 %v2546, %v2753
      %v2755 = vpop.f32.mrf.mxu0
      %2756 = vmatprep.mubr.bf16.mxu0 0
      %2757 = vmatmul.mubr.bf16.gmra.mxu0 %v2509
      %v2758 = vpop.f32.mrf.mxu0
      %v2759 = vadd.f32 %v2546, %v2758
      %v2760 = vpop.f32.mrf.mxu0
      %v2761 = vpop.f32.mrf.mxu0
      %v2762 = vadd.f32 %v2546, %v2761
      %v2763 = vpop.f32.mrf.mxu0
      %2764 = vmatprep.mubr.bf16.mxu0 0
      %2765 = vmatmul.mubr.bf16.gmra.mxu0 %v2510
      %v2766 = vpop.f32.mrf.mxu0
      %v2767 = vadd.f32 %v2546, %v2766
      %v2768 = vpop.f32.mrf.mxu0
      %v2769 = vpop.f32.mrf.mxu0
      %v2770 = vadd.f32 %v2546, %v2769
      %v2771 = vpop.f32.mrf.mxu0
      %2772 = vmatprep.mubr.bf16.mxu0 0
      %2773 = vmatmul.mubr.bf16.gmra.mxu0 %v2511
      %v2774 = vpop.f32.mrf.mxu0
      %v2775 = vadd.f32 %v2546, %v2774
      %v2776 = vpop.f32.mrf.mxu0
      %v2777 = vpop.f32.mrf.mxu0
      %v2778 = vadd.f32 %v2546, %v2777
      %v2779 = vpop.f32.mrf.mxu0
      %2780 = vmatprep.mubr.bf16.mxu0 0
      %2781 = vmatmul.mubr.bf16.gmra.mxu0 %v2512
      %v2782 = vpop.f32.mrf.mxu0
      %v2783 = vadd.f32 %v2546, %v2782
      %v2784 = vpop.f32.mrf.mxu0
      %v2785 = vpop.f32.mrf.mxu0
      %v2786 = vadd.f32 %v2546, %v2785
      %v2787 = vpop.f32.mrf.mxu0
      %2788 = vmatprep.mubr.bf16.mxu0 0
      %2789 = vmatmul.mubr.bf16.gmra.mxu0 %v2513
      %v2790 = vpop.f32.mrf.mxu0
      %v2791 = vadd.f32 %v2546, %v2790
      %v2792 = vpop.f32.mrf.mxu0
      %v2793 = vpop.f32.mrf.mxu0
      %v2794 = vadd.f32 %v2546, %v2793
      %v2795 = vpop.f32.mrf.mxu0
      %2796 = vmatprep.mubr.bf16.mxu0 0
      %2797 = vmatmul.mubr.bf16.gmra.mxu0 %v2514
      %v2798 = vpop.f32.mrf.mxu0
      %v2799 = vadd.f32 %v2546, %v2798
      %v2800 = vpop.f32.mrf.mxu0
      %v2801 = vpop.f32.mrf.mxu0
      %v2802 = vadd.f32 %v2546, %v2801
      %v2803 = vpop.f32.mrf.mxu0
      %2804 = vmatprep.mubr.bf16.mxu0 0
      %2805 = vmatmul.mubr.bf16.gmra.mxu0 %v2515
      %v2806 = vpop.f32.mrf.mxu0
      %v2807 = vadd.f32 %v2546, %v2806
      %v2808 = vpop.f32.mrf.mxu0
      %v2809 = vpop.f32.mrf.mxu0
      %v2810 = vadd.f32 %v2546, %v2809
      %v2811 = vpop.f32.mrf.mxu0
      %2812 = vmatprep.mubr.bf16.mxu0 0
      %2813 = vmatmul.mubr.bf16.gmra.mxu0 %v2516
      %v2814 = vpop.f32.mrf.mxu0
      %v2815 = vadd.f32 %v2546, %v2814
      %v2816 = vpop.f32.mrf.mxu0
      %v2817 = vpop.f32.mrf.mxu0
      %v2818 = vadd.f32 %v2546, %v2817
      %v2819 = vpop.f32.mrf.mxu0
      %2820 = vmatprep.mubr.bf16.mxu0 0
      %2821 = vmatmul.mubr.bf16.gmra.mxu0 %v2517
      %v2822 = vpop.f32.mrf.mxu0
      %v2823 = vadd.f32 %v2546, %v2822
      %v2824 = vpop.f32.mrf.mxu0
      %v2825 = vpop.f32.mrf.mxu0
      %v2826 = vadd.f32 %v2546, %v2825
      %v2827 = vpop.f32.mrf.mxu0
      %2828 = vmatprep.mubr.bf16.mxu0 0
      %2829 = vmatmul.mubr.bf16.gmra.mxu0 %v2518
      %v2830 = vpop.f32.mrf.mxu0
      %v2831 = vadd.f32 %v2546, %v2830
      %v2832 = vpop.f32.mrf.mxu0
      %v2833 = vpop.f32.mrf.mxu0
      %v2834 = vadd.f32 %v2546, %v2833
      %v2835 = vpop.f32.mrf.mxu0
      %2836 = vmatprep.mubr.bf16.mxu0 0
      %2837 = vmatmul.mubr.bf16.gmra.mxu0 %v2519
      %v2838 = vpop.f32.mrf.mxu0
      %v2839 = vadd.f32 %v2546, %v2838
      %v2840 = vpop.f32.mrf.mxu0
      %v2841 = vpop.f32.mrf.mxu0
      %v2842 = vadd.f32 %v2546, %v2841
      %v2843 = vpop.f32.mrf.mxu0
      %2844 = vmatprep.mubr.bf16.mxu0 0
      %2845 = vmatmul.mubr.bf16.gmra.mxu0 %v2520
      %v2846 = vpop.f32.mrf.mxu0
      %v2847 = vadd.f32 %v2546, %v2846
      %v2848 = vpop.f32.mrf.mxu0
      %v2849 = vpop.f32.mrf.mxu0
      %v2850 = vadd.f32 %v2546, %v2849
      %v2851 = vpop.f32.mrf.mxu0
      %2852 = vmatprep.mubr.bf16.mxu0 0
      %2853 = vmatmul.mubr.bf16.gmra.mxu0 %v2521
      %v2854 = vpop.f32.mrf.mxu0
      %v2855 = vadd.f32 %v2546, %v2854
      %v2856 = vpop.f32.mrf.mxu0
      %v2857 = vpop.f32.mrf.mxu0
      %v2858 = vadd.f32 %v2546, %v2857
      %v2859 = vpop.f32.mrf.mxu0
      %2860 = vmatprep.mubr.bf16.mxu0 0
      %2861 = vmatmul.mubr.bf16.gmra.mxu0 %v2522
      %v2862 = vpop.f32.mrf.mxu0
      %v2863 = vadd.f32 %v2546, %v2862
      %v2864 = vpop.f32.mrf.mxu0
      %v2865 = vpop.f32.mrf.mxu0
      %v2866 = vadd.f32 %v2546, %v2865
      %v2867 = vpop.f32.mrf.mxu0
      %2868 = vmatprep.mubr.bf16.mxu0 0
      %2869 = vmatmul.mubr.bf16.gmra.mxu0 %v2523
      %v2870 = vpop.f32.mrf.mxu0
      %v2871 = vadd.f32 %v2546, %v2870
      %v2872 = vpop.f32.mrf.mxu0
      %v2873 = vpop.f32.mrf.mxu0
      %v2874 = vadd.f32 %v2546, %v2873
      %v2875 = vpop.f32.mrf.mxu0
      %2876 = vmatprep.mubr.bf16.mxu0 0
      %2877 = vmatmul.mubr.bf16.gmra.mxu0 %v2524
      %v2878 = vpop.f32.mrf.mxu0
      %v2879 = vadd.f32 %v2546, %v2878
      %v2880 = vpop.f32.mrf.mxu0
      %v2881 = vpop.f32.mrf.mxu0
      %v2882 = vpop.f32.mrf.mxu0
      %2883 = vdwg.mxu0
      %v2884 = vmax.f32 %v2631, 0.0
      %v2885 = vmax.f32 %v2634, 0.0
      %v2886 = vmax.f32 %v2639, 0.0
      %v2887 = vmax.f32 %v2642, 0.0
      %v2888 = vmax.f32 %v2647, 0.0
      %v2889 = vmax.f32 %v2650, 0.0
      %v2890 = vmax.f32 %v2655, 0.0
      %v2891 = vmax.f32 %v2658, 0.0
      %v2892 = vmax.f32 %v2663, 0.0
      %v2893 = vmax.f32 %v2666, 0.0
      %v2894 = vmax.f32 %v2671, 0.0
      %v2895 = vmax.f32 %v2674, 0.0
      %v2896 = vmax.f32 %v2679, 0.0
      %v2897 = vmax.f32 %v2682, 0.0
      %v2898 = vmax.f32 %v2687, 0.0
      %v2899 = vmax.f32 %v2690, 0.0
      %v2900 = vmax.f32 %v2695, 0.0
      %v2901 = vmax.f32 %v2698, 0.0
      %v2902 = vmax.f32 %v2703, 0.0
      %v2903 = vmax.f32 %v2706, 0.0
      %v2904 = vmax.f32 %v2711, 0.0
      %v2905 = vmax.f32 %v2714, 0.0
      %v2906 = vmax.f32 %v2719, 0.0
      %v2907 = vmax.f32 %v2722, 0.0
      %v2908 = vmax.f32 %v2727, 0.0
      %v2909 = vmax.f32 %v2730, 0.0
      %v2910 = vmax.f32 %v2735, 0.0
      %v2911 = vmax.f32 %v2738, 0.0
      %v2912 = vmax.f32 %v2743, 0.0
      %v2913 = vmax.f32 %v2746, 0.0
      %v2914 = vmax.f32 %v2751, 0.0
      %v2915 = vmax.f32 %v2754, 0.0
      %v2916 = vmax.f32 %v2759, 0.0
      %v2917 = vmax.f32 %v2762, 0.0
      %v2918 = vmax.f32 %v2767, 0.0
      %v2919 = vmax.f32 %v2770, 0.0
      %v2920 = vmax.f32 %v2775, 0.0
      %v2921 = vmax.f32 %v2778, 0.0
      %v2922 = vmax.f32 %v2783, 0.0
      %v2923 = vmax.f32 %v2786, 0.0
      %v2924 = vmax.f32 %v2791, 0.0
      %v2925 = vmax.f32 %v2794, 0.0
      %v2926 = vmax.f32 %v2799, 0.0
      %v2927 = vmax.f32 %v2802, 0.0
      %v2928 = vmax.f32 %v2807, 0.0
      %v2929 = vmax.f32 %v2810, 0.0
      %v2930 = vmax.f32 %v2815, 0.0
      %v2931 = vmax.f32 %v2818, 0.0
      %v2932 = vmax.f32 %v2823, 0.0
      %v2933 = vmax.f32 %v2826, 0.0
      %v2934 = vmax.f32 %v2831, 0.0
      %v2935 = vmax.f32 %v2834, 0.0
      %v2936 = vmax.f32 %v2839, 0.0
      %v2937 = vmax.f32 %v2842, 0.0
      %v2938 = vmax.f32 %v2847, 0.0
      %v2939 = vmax.f32 %v2850, 0.0
      %v2940 = vmax.f32 %v2855, 0.0
      %v2941 = vmax.f32 %v2858, 0.0
      %v2942 = vmax.f32 %v2863, 0.0
      %v2943 = vmax.f32 %v2866, 0.0
      %v2944 = vmax.f32 %v2871, 0.0
      %v2945 = vmax.f32 %v2874, 0.0
      %v2946 = vmax.f32 %v2879, 0.0
      %v2947 = vpack.c.bf16 %v2885, %v2884
      %v2948 = vpack.c.bf16 %v2887, %v2886
      %v2949 = vpack.c.bf16 %v2889, %v2888
      %v2950 = vpack.c.bf16 %v2891, %v2890
      %v2951 = vpack.c.bf16 %v2893, %v2892
      %v2952 = vpack.c.bf16 %v2895, %v2894
      %v2953 = vpack.c.bf16 %v2897, %v2896
      %v2954 = vpack.c.bf16 %v2899, %v2898
      %v2955 = vpack.c.bf16 %v2901, %v2900
      %v2956 = vpack.c.bf16 %v2903, %v2902
      %v2957 = vpack.c.bf16 %v2905, %v2904
      %v2958 = vpack.c.bf16 %v2907, %v2906
      %v2959 = vpack.c.bf16 %v2909, %v2908
      %v2960 = vpack.c.bf16 %v2911, %v2910
      %v2961 = vpack.c.bf16 %v2913, %v2912
      %v2962 = vpack.c.bf16 %v2915, %v2914
      %v2963 = vpack.c.bf16 %v2917, %v2916
      %v2964 = vpack.c.bf16 %v2919, %v2918
      %v2965 = vpack.c.bf16 %v2921, %v2920
      %v2966 = vpack.c.bf16 %v2923, %v2922
      %v2967 = vpack.c.bf16 %v2925, %v2924
      %v2968 = vpack.c.bf16 %v2927, %v2926
      %v2969 = vpack.c.bf16 %v2929, %v2928
      %v2970 = vpack.c.bf16 %v2931, %v2930
      %v2971 = vpack.c.bf16 %v2933, %v2932
      %v2972 = vpack.c.bf16 %v2935, %v2934
      %v2973 = vpack.c.bf16 %v2937, %v2936
      %v2974 = vpack.c.bf16 %v2939, %v2938
      %v2975 = vpack.c.bf16 %v2941, %v2940
      %v2976 = vpack.c.bf16 %v2943, %v2942
      %v2977 = vpack.c.bf16 %v2945, %v2944
      %v2978 = vpack.c.bf16 %v2946, %v2946
      %v2979 = vld [vmem:[%s9] sm:$0xf]
      %v2980 = vld [vmem:[%s9 + $0x4] sm:$0xf]
      %v2981 = vld [vmem:[%s9 + $0x8] sm:$0xf]
      %v2982 = vld [vmem:[%s9 + $0xc] sm:$0xf]
      %v2983 = vld [vmem:[%s9 + $0x10] sm:$0xf]
      %v2984 = vld [vmem:[%s9 + $0x14] sm:$0xf]
      %v2985 = vld [vmem:[%s9 + $0x18] sm:$0xf]
      %v2986 = vld [vmem:[%s9 + $0x1c] sm:$0xf]
      %v2987 = vld [vmem:[%s9 + $0x20] sm:$0xf]
      %v2988 = vld [vmem:[%s9 + $0x24] sm:$0xf]
      %v2989 = vld [vmem:[%s9 + $0x28] sm:$0xf]
      %v2990 = vld [vmem:[%s9 + $0x2c] sm:$0xf]
      %v2991 = vld [vmem:[%s9 + $0x30] sm:$0xf]
      %v2992 = vld [vmem:[%s9 + $0x34] sm:$0xf]
      %v2993 = vld [vmem:[%s9 + $0x38] sm:$0xf]
      %v2994 = vld [vmem:[%s9 + $0x3c] sm:$0xf]
      %v2995 = vld [vmem:[%s10] sm:$0x1]
      %v2997 = vlaneseq
      %v2998 = vshrl.u32 %v2997, 7
      %v2999 = vsub.s32 0, %v2998
      %v3000 = vrot.slane %v2995, %v2999
      %v3018 = vunpack.c.l.b16 %v2979
      %v3019 = vunpack.c.l.b16 %v2980
      %v3020 = vunpack.c.l.b16 %v2981
      %v3021 = vunpack.c.l.b16 %v2982
      %v3022 = vunpack.c.l.b16 %v2983
      %v3023 = vunpack.c.l.b16 %v2984
      %v3024 = vunpack.c.l.b16 %v2985
      %v3025 = vunpack.c.l.b16 %v2986
      %v3026 = vunpack.c.l.b16 %v2987
      %v3027 = vunpack.c.l.b16 %v2988
      %v3028 = vunpack.c.l.b16 %v2989
      %v3029 = vunpack.c.l.b16 %v2990
      %v3030 = vunpack.c.l.b16 %v2991
      %v3031 = vunpack.c.l.b16 %v2992
      %v3032 = vunpack.c.l.b16 %v2993
      %v3033 = vunpack.c.l.b16 %v2994
      %v3034 = vpack.c.b16 %v3019, %v3018
      %v3035 = vpack.c.b16 %v3021, %v3020
      %v3036 = vpack.c.b16 %v3023, %v3022
      %v3037 = vpack.c.b16 %v3025, %v3024
      %v3038 = vpack.c.b16 %v3027, %v3026
      %v3039 = vpack.c.b16 %v3029, %v3028
      %v3040 = vpack.c.b16 %v3031, %v3030
      %v3041 = vpack.c.b16 %v3033, %v3032
      %3050 = vmatprep.subr.bf16.mxu0 0
      %3051 = vmatpush1.bf16.msra.mxu0 %v3041
      %3052 = vmatprep.subr.bf16.mxu0 0
      %3053 = vmatpush1.bf16.msra.mxu0 %v3040
      %3054 = vmatprep.subr.bf16.mxu0 0
      %3055 = vmatpush1.bf16.msra.mxu0 %v3039
      %3056 = vmatprep.subr.bf16.mxu0 0
      %3057 = vmatpush1.bf16.msra.mxu0 %v3038
      %3058 = vmatprep.subr.bf16.mxu0 0
      %3059 = vmatpush1.bf16.msra.mxu0 %v3037
      %3060 = vmatprep.subr.bf16.mxu0 0
      %3061 = vmatpush1.bf16.msra.mxu0 %v3036
      %3062 = vmatprep.subr.bf16.mxu0 0
      %3063 = vmatpush1.bf16.msra.mxu0 %v3035
      %3064 = vmatprep.subr.bf16.mxu0 0
      %3065 = vmatpush1.bf16.msra.mxu0 %v3034
      %3066 = vmatprep.subr.bf16.mxu0 0
      %3067 = vmatpush2.bf16.msra.mxu0 0
      %3068 = vmatprep.subr.bf16.mxu0 0
      %3069 = vmatpush2.bf16.msra.mxu0 0
      %3070 = vmatprep.subr.bf16.mxu0 0
      %3071 = vmatpush2.bf16.msra.mxu0 0
      %3072 = vmatprep.subr.bf16.mxu0 0
      %3073 = vmatpush2.bf16.msra.mxu0 0
      %3074 = vmatprep.subr.bf16.mxu0 0
      %3075 = vmatpush2.bf16.msra.mxu0 0
      %3076 = vmatprep.subr.bf16.mxu0 0
      %3077 = vmatpush2.bf16.msra.mxu0 0
      %3078 = vmatprep.subr.bf16.mxu0 0
      %3079 = vmatpush2.bf16.msra.mxu0 0
      %3080 = vmatprep.subr.bf16.mxu0 0
      %3081 = vmatpush2.bf16.msra.mxu0 0
      %3082 = vmatprep.mubr.bf16.mxu0 0
      %3083 = vmatmul.mubr.bf16.gmra.mxu0 %v2947
      %v3084 = vpop.f32.mrf.mxu0
      %v3085 = vadd.f32 %v3000, %v3084
      %v3086 = vpop.f32.mrf.mxu0
      %v3087 = vpop.f32.mrf.mxu0
      %v3088 = vadd.f32 %v3000, %v3087
      %v3089 = vpop.f32.mrf.mxu0
      %3090 = vmatprep.mubr.bf16.mxu0 0
      %3091 = vmatmul.mubr.bf16.gmra.mxu0 %v2948
      %v3092 = vpop.f32.mrf.mxu0
      %v3093 = vadd.f32 %v3000, %v3092
      %v3094 = vpop.f32.mrf.mxu0
      %v3095 = vpop.f32.mrf.mxu0
      %v3096 = vadd.f32 %v3000, %v3095
      %v3097 = vpop.f32.mrf.mxu0
      %3098 = vmatprep.mubr.bf16.mxu0 0
      %3099 = vmatmul.mubr.bf16.gmra.mxu0 %v2949
      %v3100 = vpop.f32.mrf.mxu0
      %v3101 = vadd.f32 %v3000, %v3100
      %v3102 = vpop.f32.mrf.mxu0
      %v3103 = vpop.f32.mrf.mxu0
      %v3104 = vadd.f32 %v3000, %v3103
      %v3105 = vpop.f32.mrf.mxu0
      %3106 = vmatprep.mubr.bf16.mxu0 0
      %3107 = vmatmul.mubr.bf16.gmra.mxu0 %v2950
      %v3108 = vpop.f32.mrf.mxu0
      %v3109 = vadd.f32 %v3000, %v3108
      %v3110 = vpop.f32.mrf.mxu0
      %v3111 = vpop.f32.mrf.mxu0
      %v3112 = vadd.f32 %v3000, %v3111
      %v3113 = vpop.f32.mrf.mxu0
      %3114 = vmatprep.mubr.bf16.mxu0 0
      %3115 = vmatmul.mubr.bf16.gmra.mxu0 %v2951
      %v3116 = vpop.f32.mrf.mxu0
      %v3117 = vadd.f32 %v3000, %v3116
      %v3118 = vpop.f32.mrf.mxu0
      %v3119 = vpop.f32.mrf.mxu0
      %v3120 = vadd.f32 %v3000, %v3119
      %v3121 = vpop.f32.mrf.mxu0
      %3122 = vmatprep.mubr.bf16.mxu0 0
      %3123 = vmatmul.mubr.bf16.gmra.mxu0 %v2952
      %v3124 = vpop.f32.mrf.mxu0
      %v3125 = vadd.f32 %v3000, %v3124
      %v3126 = vpop.f32.mrf.mxu0
      %v3127 = vpop.f32.mrf.mxu0
      %v3128 = vadd.f32 %v3000, %v3127
      %v3129 = vpop.f32.mrf.mxu0
      %3130 = vmatprep.mubr.bf16.mxu0 0
      %3131 = vmatmul.mubr.bf16.gmra.mxu0 %v2953
      %v3132 = vpop.f32.mrf.mxu0
      %v3133 = vadd.f32 %v3000, %v3132
      %v3134 = vpop.f32.mrf.mxu0
      %v3135 = vpop.f32.mrf.mxu0
      %v3136 = vadd.f32 %v3000, %v3135
      %v3137 = vpop.f32.mrf.mxu0
      %3138 = vmatprep.mubr.bf16.mxu0 0
      %3139 = vmatmul.mubr.bf16.gmra.mxu0 %v2954
      %v3140 = vpop.f32.mrf.mxu0
      %v3141 = vadd.f32 %v3000, %v3140
      %v3142 = vpop.f32.mrf.mxu0
      %v3143 = vpop.f32.mrf.mxu0
      %v3144 = vadd.f32 %v3000, %v3143
      %v3145 = vpop.f32.mrf.mxu0
      %3146 = vmatprep.mubr.bf16.mxu0 0
      %3147 = vmatmul.mubr.bf16.gmra.mxu0 %v2955
      %v3148 = vpop.f32.mrf.mxu0
      %v3149 = vadd.f32 %v3000, %v3148
      %v3150 = vpop.f32.mrf.mxu0
      %v3151 = vpop.f32.mrf.mxu0
      %v3152 = vadd.f32 %v3000, %v3151
      %v3153 = vpop.f32.mrf.mxu0
      %3154 = vmatprep.mubr.bf16.mxu0 0
      %3155 = vmatmul.mubr.bf16.gmra.mxu0 %v2956
      %v3156 = vpop.f32.mrf.mxu0
      %v3157 = vadd.f32 %v3000, %v3156
      %v3158 = vpop.f32.mrf.mxu0
      %v3159 = vpop.f32.mrf.mxu0
      %v3160 = vadd.f32 %v3000, %v3159
      %v3161 = vpop.f32.mrf.mxu0
      %3162 = vmatprep.mubr.bf16.mxu0 0
      %3163 = vmatmul.mubr.bf16.gmra.mxu0 %v2957
      %v3164 = vpop.f32.mrf.mxu0
      %v3165 = vadd.f32 %v3000, %v3164
      %v3166 = vpop.f32.mrf.mxu0
      %v3167 = vpop.f32.mrf.mxu0
      %v3168 = vadd.f32 %v3000, %v3167
      %v3169 = vpop.f32.mrf.mxu0
      %3170 = vmatprep.mubr.bf16.mxu0 0
      %3171 = vmatmul.mubr.bf16.gmra.mxu0 %v2958
      %v3172 = vpop.f32.mrf.mxu0
      %v3173 = vadd.f32 %v3000, %v3172
      %v3174 = vpop.f32.mrf.mxu0
      %v3175 = vpop.f32.mrf.mxu0
      %v3176 = vadd.f32 %v3000, %v3175
      %v3177 = vpop.f32.mrf.mxu0
      %3178 = vmatprep.mubr.bf16.mxu0 0
      %3179 = vmatmul.mubr.bf16.gmra.mxu0 %v2959
      %v3180 = vpop.f32.mrf.mxu0
      %v3181 = vadd.f32 %v3000, %v3180
      %v3182 = vpop.f32.mrf.mxu0
      %v3183 = vpop.f32.mrf.mxu0
      %v3184 = vadd.f32 %v3000, %v3183
      %v3185 = vpop.f32.mrf.mxu0
      %3186 = vmatprep.mubr.bf16.mxu0 0
      %3187 = vmatmul.mubr.bf16.gmra.mxu0 %v2960
      %v3188 = vpop.f32.mrf.mxu0
      %v3189 = vadd.f32 %v3000, %v3188
      %v3190 = vpop.f32.mrf.mxu0
      %v3191 = vpop.f32.mrf.mxu0
      %v3192 = vadd.f32 %v3000, %v3191
      %v3193 = vpop.f32.mrf.mxu0
      %3194 = vmatprep.mubr.bf16.mxu0 0
      %3195 = vmatmul.mubr.bf16.gmra.mxu0 %v2961
      %v3196 = vpop.f32.mrf.mxu0
      %v3197 = vadd.f32 %v3000, %v3196
      %v3198 = vpop.f32.mrf.mxu0
      %v3199 = vpop.f32.mrf.mxu0
      %v3200 = vadd.f32 %v3000, %v3199
      %v3201 = vpop.f32.mrf.mxu0
      %3202 = vmatprep.mubr.bf16.mxu0 0
      %3203 = vmatmul.mubr.bf16.gmra.mxu0 %v2962
      %v3204 = vpop.f32.mrf.mxu0
      %v3205 = vadd.f32 %v3000, %v3204
      %v3206 = vpop.f32.mrf.mxu0
      %v3207 = vpop.f32.mrf.mxu0
      %v3208 = vadd.f32 %v3000, %v3207
      %v3209 = vpop.f32.mrf.mxu0
      %3210 = vmatprep.mubr.bf16.mxu0 0
      %3211 = vmatmul.mubr.bf16.gmra.mxu0 %v2963
      %v3212 = vpop.f32.mrf.mxu0
      %v3213 = vadd.f32 %v3000, %v3212
      %v3214 = vpop.f32.mrf.mxu0
      %v3215 = vpop.f32.mrf.mxu0
      %v3216 = vadd.f32 %v3000, %v3215
      %v3217 = vpop.f32.mrf.mxu0
      %3218 = vmatprep.mubr.bf16.mxu0 0
      %3219 = vmatmul.mubr.bf16.gmra.mxu0 %v2964
      %v3220 = vpop.f32.mrf.mxu0
      %v3221 = vadd.f32 %v3000, %v3220
      %v3222 = vpop.f32.mrf.mxu0
      %v3223 = vpop.f32.mrf.mxu0
      %v3224 = vadd.f32 %v3000, %v3223
      %v3225 = vpop.f32.mrf.mxu0
      %3226 = vmatprep.mubr.bf16.mxu0 0
      %3227 = vmatmul.mubr.bf16.gmra.mxu0 %v2965
      %v3228 = vpop.f32.mrf.mxu0
      %v3229 = vadd.f32 %v3000, %v3228
      %v3230 = vpop.f32.mrf.mxu0
      %v3231 = vpop.f32.mrf.mxu0
      %v3232 = vadd.f32 %v3000, %v3231
      %v3233 = vpop.f32.mrf.mxu0
      %3234 = vmatprep.mubr.bf16.mxu0 0
      %3235 = vmatmul.mubr.bf16.gmra.mxu0 %v2966
      %v3236 = vpop.f32.mrf.mxu0
      %v3237 = vadd.f32 %v3000, %v3236
      %v3238 = vpop.f32.mrf.mxu0
      %v3239 = vpop.f32.mrf.mxu0
      %v3240 = vadd.f32 %v3000, %v3239
      %v3241 = vpop.f32.mrf.mxu0
      %3242 = vmatprep.mubr.bf16.mxu0 0
      %3243 = vmatmul.mubr.bf16.gmra.mxu0 %v2967
      %v3244 = vpop.f32.mrf.mxu0
      %v3245 = vadd.f32 %v3000, %v3244
      %v3246 = vpop.f32.mrf.mxu0
      %v3247 = vpop.f32.mrf.mxu0
      %v3248 = vadd.f32 %v3000, %v3247
      %v3249 = vpop.f32.mrf.mxu0
      %3250 = vmatprep.mubr.bf16.mxu0 0
      %3251 = vmatmul.mubr.bf16.gmra.mxu0 %v2968
      %v3252 = vpop.f32.mrf.mxu0
      %v3253 = vadd.f32 %v3000, %v3252
      %v3254 = vpop.f32.mrf.mxu0
      %v3255 = vpop.f32.mrf.mxu0
      %v3256 = vadd.f32 %v3000, %v3255
      %v3257 = vpop.f32.mrf.mxu0
      %3258 = vmatprep.mubr.bf16.mxu0 0
      %3259 = vmatmul.mubr.bf16.gmra.mxu0 %v2969
      %v3260 = vpop.f32.mrf.mxu0
      %v3261 = vadd.f32 %v3000, %v3260
      %v3262 = vpop.f32.mrf.mxu0
      %v3263 = vpop.f32.mrf.mxu0
      %v3264 = vadd.f32 %v3000, %v3263
      %v3265 = vpop.f32.mrf.mxu0
      %3266 = vmatprep.mubr.bf16.mxu0 0
      %3267 = vmatmul.mubr.bf16.gmra.mxu0 %v2970
      %v3268 = vpop.f32.mrf.mxu0
      %v3269 = vadd.f32 %v3000, %v3268
      %v3270 = vpop.f32.mrf.mxu0
      %v3271 = vpop.f32.mrf.mxu0
      %v3272 = vadd.f32 %v3000, %v3271
      %v3273 = vpop.f32.mrf.mxu0
      %3274 = vmatprep.mubr.bf16.mxu0 0
      %3275 = vmatmul.mubr.bf16.gmra.mxu0 %v2971
      %v3276 = vpop.f32.mrf.mxu0
      %v3277 = vadd.f32 %v3000, %v3276
      %v3278 = vpop.f32.mrf.mxu0
      %v3279 = vpop.f32.mrf.mxu0
      %v3280 = vadd.f32 %v3000, %v3279
      %v3281 = vpop.f32.mrf.mxu0
      %3282 = vmatprep.mubr.bf16.mxu0 0
      %3283 = vmatmul.mubr.bf16.gmra.mxu0 %v2972
      %v3284 = vpop.f32.mrf.mxu0
      %v3285 = vadd.f32 %v3000, %v3284
      %v3286 = vpop.f32.mrf.mxu0
      %v3287 = vpop.f32.mrf.mxu0
      %v3288 = vadd.f32 %v3000, %v3287
      %v3289 = vpop.f32.mrf.mxu0
      %3290 = vmatprep.mubr.bf16.mxu0 0
      %3291 = vmatmul.mubr.bf16.gmra.mxu0 %v2973
      %v3292 = vpop.f32.mrf.mxu0
      %v3293 = vadd.f32 %v3000, %v3292
      %v3294 = vpop.f32.mrf.mxu0
      %v3295 = vpop.f32.mrf.mxu0
      %v3296 = vadd.f32 %v3000, %v3295
      %v3297 = vpop.f32.mrf.mxu0
      %3298 = vmatprep.mubr.bf16.mxu0 0
      %3299 = vmatmul.mubr.bf16.gmra.mxu0 %v2974
      %v3300 = vpop.f32.mrf.mxu0
      %v3301 = vadd.f32 %v3000, %v3300
      %v3302 = vpop.f32.mrf.mxu0
      %v3303 = vpop.f32.mrf.mxu0
      %v3304 = vadd.f32 %v3000, %v3303
      %v3305 = vpop.f32.mrf.mxu0
      %3306 = vmatprep.mubr.bf16.mxu0 0
      %3307 = vmatmul.mubr.bf16.gmra.mxu0 %v2975
      %v3308 = vpop.f32.mrf.mxu0
      %v3309 = vadd.f32 %v3000, %v3308
      %v3310 = vpop.f32.mrf.mxu0
      %v3311 = vpop.f32.mrf.mxu0
      %v3312 = vadd.f32 %v3000, %v3311
      %v3313 = vpop.f32.mrf.mxu0
      %3314 = vmatprep.mubr.bf16.mxu0 0
      %3315 = vmatmul.mubr.bf16.gmra.mxu0 %v2976
      %v3316 = vpop.f32.mrf.mxu0
      %v3317 = vadd.f32 %v3000, %v3316
      %v3318 = vpop.f32.mrf.mxu0
      %v3319 = vpop.f32.mrf.mxu0
      %v3320 = vadd.f32 %v3000, %v3319
      %v3321 = vpop.f32.mrf.mxu0
      %3322 = vmatprep.mubr.bf16.mxu0 0
      %3323 = vmatmul.mubr.bf16.gmra.mxu0 %v2977
      %v3324 = vpop.f32.mrf.mxu0
      %v3325 = vadd.f32 %v3000, %v3324
      %v3326 = vpop.f32.mrf.mxu0
      %v3327 = vpop.f32.mrf.mxu0
      %v3328 = vadd.f32 %v3000, %v3327
      %v3329 = vpop.f32.mrf.mxu0
      %3330 = vmatprep.mubr.bf16.mxu0 0
      %3331 = vmatmul.mubr.bf16.gmra.mxu0 %v2978
      %v3332 = vpop.f32.mrf.mxu0
      %v3333 = vadd.f32 %v3000, %v3332
      %v3334 = vpop.f32.mrf.mxu0
      %v3335 = vpop.f32.mrf.mxu0
      %v3336 = vpop.f32.mrf.mxu0
      %3337 = vdwg.mxu0
      %v3338 = vmax.f32 %v3085, 0.0
      %v3339 = vmax.f32 %v3088, 0.0
      %v3340 = vmax.f32 %v3093, 0.0
      %v3341 = vmax.f32 %v3096, 0.0
      %v3342 = vmax.f32 %v3101, 0.0
      %v3343 = vmax.f32 %v3104, 0.0
      %v3344 = vmax.f32 %v3109, 0.0
      %v3345 = vmax.f32 %v3112, 0.0
      %v3346 = vmax.f32 %v3117, 0.0
      %v3347 = vmax.f32 %v3120, 0.0
      %v3348 = vmax.f32 %v3125, 0.0
      %v3349 = vmax.f32 %v3128, 0.0
      %v3350 = vmax.f32 %v3133, 0.0
      %v3351 = vmax.f32 %v3136, 0.0
      %v3352 = vmax.f32 %v3141, 0.0
      %v3353 = vmax.f32 %v3144, 0.0
      %v3354 = vmax.f32 %v3149, 0.0
      %v3355 = vmax.f32 %v3152, 0.0
      %v3356 = vmax.f32 %v3157, 0.0
      %v3357 = vmax.f32 %v3160, 0.0
      %v3358 = vmax.f32 %v3165, 0.0
      %v3359 = vmax.f32 %v3168, 0.0
      %v3360 = vmax.f32 %v3173, 0.0
      %v3361 = vmax.f32 %v3176, 0.0
      %v3362 = vmax.f32 %v3181, 0.0
      %v3363 = vmax.f32 %v3184, 0.0
      %v3364 = vmax.f32 %v3189, 0.0
      %v3365 = vmax.f32 %v3192, 0.0
      %v3366 = vmax.f32 %v3197, 0.0
      %v3367 = vmax.f32 %v3200, 0.0
      %v3368 = vmax.f32 %v3205, 0.0
      %v3369 = vmax.f32 %v3208, 0.0
      %v3370 = vmax.f32 %v3213, 0.0
      %v3371 = vmax.f32 %v3216, 0.0
      %v3372 = vmax.f32 %v3221, 0.0
      %v3373 = vmax.f32 %v3224, 0.0
      %v3374 = vmax.f32 %v3229, 0.0
      %v3375 = vmax.f32 %v3232, 0.0
      %v3376 = vmax.f32 %v3237, 0.0
      %v3377 = vmax.f32 %v3240, 0.0
      %v3378 = vmax.f32 %v3245, 0.0
      %v3379 = vmax.f32 %v3248, 0.0
      %v3380 = vmax.f32 %v3253, 0.0
      %v3381 = vmax.f32 %v3256, 0.0
      %v3382 = vmax.f32 %v3261, 0.0
      %v3383 = vmax.f32 %v3264, 0.0
      %v3384 = vmax.f32 %v3269, 0.0
      %v3385 = vmax.f32 %v3272, 0.0
      %v3386 = vmax.f32 %v3277, 0.0
      %v3387 = vmax.f32 %v3280, 0.0
      %v3388 = vmax.f32 %v3285, 0.0
      %v3389 = vmax.f32 %v3288, 0.0
      %v3390 = vmax.f32 %v3293, 0.0
      %v3391 = vmax.f32 %v3296, 0.0
      %v3392 = vmax.f32 %v3301, 0.0
      %v3393 = vmax.f32 %v3304, 0.0
      %v3394 = vmax.f32 %v3309, 0.0
      %v3395 = vmax.f32 %v3312, 0.0
      %v3396 = vmax.f32 %v3317, 0.0
      %v3397 = vmax.f32 %v3320, 0.0
      %v3398 = vmax.f32 %v3325, 0.0
      %v3399 = vmax.f32 %v3328, 0.0
      %v3400 = vmax.f32 %v3333, 0.0
      %v3401 = vpack.c.bf16 %v3339, %v3338
      %v3402 = vpack.c.bf16 %v3341, %v3340
      %v3403 = vpack.c.bf16 %v3343, %v3342
      %v3404 = vpack.c.bf16 %v3345, %v3344
      %v3405 = vpack.c.bf16 %v3347, %v3346
      %v3406 = vpack.c.bf16 %v3349, %v3348
      %v3407 = vpack.c.bf16 %v3351, %v3350
      %v3408 = vpack.c.bf16 %v3353, %v3352
      %v3409 = vpack.c.bf16 %v3355, %v3354
      %v3410 = vpack.c.bf16 %v3357, %v3356
      %v3411 = vpack.c.bf16 %v3359, %v3358
      %v3412 = vpack.c.bf16 %v3361, %v3360
      %v3413 = vpack.c.bf16 %v3363, %v3362
      %v3414 = vpack.c.bf16 %v3365, %v3364
      %v3415 = vpack.c.bf16 %v3367, %v3366
      %v3416 = vpack.c.bf16 %v3369, %v3368
      %v3417 = vpack.c.bf16 %v3371, %v3370
      %v3418 = vpack.c.bf16 %v3373, %v3372
      %v3419 = vpack.c.bf16 %v3375, %v3374
      %v3420 = vpack.c.bf16 %v3377, %v3376
      %v3421 = vpack.c.bf16 %v3379, %v3378
      %v3422 = vpack.c.bf16 %v3381, %v3380
      %v3423 = vpack.c.bf16 %v3383, %v3382
      %v3424 = vpack.c.bf16 %v3385, %v3384
      %v3425 = vpack.c.bf16 %v3387, %v3386
      %v3426 = vpack.c.bf16 %v3389, %v3388
      %v3427 = vpack.c.bf16 %v3391, %v3390
      %v3428 = vpack.c.bf16 %v3393, %v3392
      %v3429 = vpack.c.bf16 %v3395, %v3394
      %v3430 = vpack.c.bf16 %v3397, %v3396
      %v3431 = vpack.c.bf16 %v3399, %v3398
      %v3432 = vpack.c.bf16 %v3400, %v3400
      %v3433 = vld [vmem:[%s11] sm:$0xf]
      %v3434 = vld [vmem:[%s11 + $0x4] sm:$0xf]
      %v3435 = vld [vmem:[%s11 + $0x8] sm:$0xf]
      %v3436 = vld [vmem:[%s11 + $0xc] sm:$0xf]
      %v3437 = vld [vmem:[%s11 + $0x10] sm:$0xf]
      %v3438 = vld [vmem:[%s11 + $0x14] sm:$0xf]
      %v3439 = vld [vmem:[%s11 + $0x18] sm:$0xf]
      %v3440 = vld [vmem:[%s11 + $0x1c] sm:$0xf]
      %v3441 = vld [vmem:[%s11 + $0x20] sm:$0xf]
      %v3442 = vld [vmem:[%s11 + $0x24] sm:$0xf]
      %v3443 = vld [vmem:[%s11 + $0x28] sm:$0xf]
      %v3444 = vld [vmem:[%s11 + $0x2c] sm:$0xf]
      %v3445 = vld [vmem:[%s11 + $0x30] sm:$0xf]
      %v3446 = vld [vmem:[%s11 + $0x34] sm:$0xf]
      %v3447 = vld [vmem:[%s11 + $0x38] sm:$0xf]
      %v3448 = vld [vmem:[%s11 + $0x3c] sm:$0xf]
      %v3449 = vld [vmem:[%s12] sm:$0x1]
      %v3451 = vlaneseq
      %v3452 = vshrl.u32 %v3451, 7
      %v3453 = vsub.s32 0, %v3452
      %v3454 = vrot.slane %v3449, %v3453
      %v3472 = vunpack.c.l.b16 %v3433
      %v3473 = vunpack.c.l.b16 %v3434
      %v3474 = vunpack.c.l.b16 %v3435
      %v3475 = vunpack.c.l.b16 %v3436
      %v3476 = vunpack.c.l.b16 %v3437
      %v3477 = vunpack.c.l.b16 %v3438
      %v3478 = vunpack.c.l.b16 %v3439
      %v3479 = vunpack.c.l.b16 %v3440
      %v3480 = vunpack.c.l.b16 %v3441
      %v3481 = vunpack.c.l.b16 %v3442
      %v3482 = vunpack.c.l.b16 %v3443
      %v3483 = vunpack.c.l.b16 %v3444
      %v3484 = vunpack.c.l.b16 %v3445
      %v3485 = vunpack.c.l.b16 %v3446
      %v3486 = vunpack.c.l.b16 %v3447
      %v3487 = vunpack.c.l.b16 %v3448
      %v3488 = vpack.c.b16 %v3473, %v3472
      %v3489 = vpack.c.b16 %v3475, %v3474
      %v3490 = vpack.c.b16 %v3477, %v3476
      %v3491 = vpack.c.b16 %v3479, %v3478
      %v3492 = vpack.c.b16 %v3481, %v3480
      %v3493 = vpack.c.b16 %v3483, %v3482
      %v3494 = vpack.c.b16 %v3485, %v3484
      %v3495 = vpack.c.b16 %v3487, %v3486
      %3504 = vmatprep.subr.bf16.mxu0 0
      %3505 = vmatpush1.bf16.msra.mxu0 %v3495
      %3506 = vmatprep.subr.bf16.mxu0 0
      %3507 = vmatpush1.bf16.msra.mxu0 %v3494
      %3508 = vmatprep.subr.bf16.mxu0 0
      %3509 = vmatpush1.bf16.msra.mxu0 %v3493
      %3510 = vmatprep.subr.bf16.mxu0 0
      %3511 = vmatpush1.bf16.msra.mxu0 %v3492
      %3512 = vmatprep.subr.bf16.mxu0 0
      %3513 = vmatpush1.bf16.msra.mxu0 %v3491
      %3514 = vmatprep.subr.bf16.mxu0 0
      %3515 = vmatpush1.bf16.msra.mxu0 %v3490
      %3516 = vmatprep.subr.bf16.mxu0 0
      %3517 = vmatpush1.bf16.msra.mxu0 %v3489
      %3518 = vmatprep.subr.bf16.mxu0 0
      %3519 = vmatpush1.bf16.msra.mxu0 %v3488
      %3520 = vmatprep.subr.bf16.mxu0 0
      %3521 = vmatpush2.bf16.msra.mxu0 0
      %3522 = vmatprep.subr.bf16.mxu0 0
      %3523 = vmatpush2.bf16.msra.mxu0 0
      %3524 = vmatprep.subr.bf16.mxu0 0
      %3525 = vmatpush2.bf16.msra.mxu0 0
      %3526 = vmatprep.subr.bf16.mxu0 0
      %3527 = vmatpush2.bf16.msra.mxu0 0
      %3528 = vmatprep.subr.bf16.mxu0 0
      %3529 = vmatpush2.bf16.msra.mxu0 0
      %3530 = vmatprep.subr.bf16.mxu0 0
      %3531 = vmatpush2.bf16.msra.mxu0 0
      %3532 = vmatprep.subr.bf16.mxu0 0
      %3533 = vmatpush2.bf16.msra.mxu0 0
      %3534 = vmatprep.subr.bf16.mxu0 0
      %3535 = vmatpush2.bf16.msra.mxu0 0
      %3536 = vmatprep.mubr.bf16.mxu0 0
      %3537 = vmatmul.mubr.bf16.gmra.mxu0 %v3401
      %v3538 = vpop.f32.mrf.mxu0
      %v3539 = vadd.f32 %v3454, %v3538
      %v3540 = vpop.f32.mrf.mxu0
      %v3541 = vpop.f32.mrf.mxu0
      %v3542 = vadd.f32 %v3454, %v3541
      %v3543 = vpop.f32.mrf.mxu0
      %3544 = vmatprep.mubr.bf16.mxu0 0
      %3545 = vmatmul.mubr.bf16.gmra.mxu0 %v3402
      %v3546 = vpop.f32.mrf.mxu0
      %v3547 = vadd.f32 %v3454, %v3546
      %v3548 = vpop.f32.mrf.mxu0
      %v3549 = vpop.f32.mrf.mxu0
      %v3550 = vadd.f32 %v3454, %v3549
      %v3551 = vpop.f32.mrf.mxu0
      %3552 = vmatprep.mubr.bf16.mxu0 0
      %3553 = vmatmul.mubr.bf16.gmra.mxu0 %v3403
      %v3554 = vpop.f32.mrf.mxu0
      %v3555 = vadd.f32 %v3454, %v3554
      %v3556 = vpop.f32.mrf.mxu0
      %v3557 = vpop.f32.mrf.mxu0
      %v3558 = vadd.f32 %v3454, %v3557
      %v3559 = vpop.f32.mrf.mxu0
      %3560 = vmatprep.mubr.bf16.mxu0 0
      %3561 = vmatmul.mubr.bf16.gmra.mxu0 %v3404
      %v3562 = vpop.f32.mrf.mxu0
      %v3563 = vadd.f32 %v3454, %v3562
      %v3564 = vpop.f32.mrf.mxu0
      %v3565 = vpop.f32.mrf.mxu0
      %v3566 = vadd.f32 %v3454, %v3565
      %v3567 = vpop.f32.mrf.mxu0
      %3568 = vmatprep.mubr.bf16.mxu0 0
      %3569 = vmatmul.mubr.bf16.gmra.mxu0 %v3405
      %v3570 = vpop.f32.mrf.mxu0
      %v3571 = vadd.f32 %v3454, %v3570
      %v3572 = vpop.f32.mrf.mxu0
      %v3573 = vpop.f32.mrf.mxu0
      %v3574 = vadd.f32 %v3454, %v3573
      %v3575 = vpop.f32.mrf.mxu0
      %3576 = vmatprep.mubr.bf16.mxu0 0
      %3577 = vmatmul.mubr.bf16.gmra.mxu0 %v3406
      %v3578 = vpop.f32.mrf.mxu0
      %v3579 = vadd.f32 %v3454, %v3578
      %v3580 = vpop.f32.mrf.mxu0
      %v3581 = vpop.f32.mrf.mxu0
      %v3582 = vadd.f32 %v3454, %v3581
      %v3583 = vpop.f32.mrf.mxu0
      %3584 = vmatprep.mubr.bf16.mxu0 0
      %3585 = vmatmul.mubr.bf16.gmra.mxu0 %v3407
      %v3586 = vpop.f32.mrf.mxu0
      %v3587 = vadd.f32 %v3454, %v3586
      %v3588 = vpop.f32.mrf.mxu0
      %v3589 = vpop.f32.mrf.mxu0
      %v3590 = vadd.f32 %v3454, %v3589
      %v3591 = vpop.f32.mrf.mxu0
      %3592 = vmatprep.mubr.bf16.mxu0 0
      %3593 = vmatmul.mubr.bf16.gmra.mxu0 %v3408
      %v3594 = vpop.f32.mrf.mxu0
      %v3595 = vadd.f32 %v3454, %v3594
      %v3596 = vpop.f32.mrf.mxu0
      %v3597 = vpop.f32.mrf.mxu0
      %v3598 = vadd.f32 %v3454, %v3597
      %v3599 = vpop.f32.mrf.mxu0
      %3600 = vmatprep.mubr.bf16.mxu0 0
      %3601 = vmatmul.mubr.bf16.gmra.mxu0 %v3409
      %v3602 = vpop.f32.mrf.mxu0
      %v3603 = vadd.f32 %v3454, %v3602
      %v3604 = vpop.f32.mrf.mxu0
      %v3605 = vpop.f32.mrf.mxu0
      %v3606 = vadd.f32 %v3454, %v3605
      %v3607 = vpop.f32.mrf.mxu0
      %3608 = vmatprep.mubr.bf16.mxu0 0
      %3609 = vmatmul.mubr.bf16.gmra.mxu0 %v3410
      %v3610 = vpop.f32.mrf.mxu0
      %v3611 = vadd.f32 %v3454, %v3610
      %v3612 = vpop.f32.mrf.mxu0
      %v3613 = vpop.f32.mrf.mxu0
      %v3614 = vadd.f32 %v3454, %v3613
      %v3615 = vpop.f32.mrf.mxu0
      %3616 = vmatprep.mubr.bf16.mxu0 0
      %3617 = vmatmul.mubr.bf16.gmra.mxu0 %v3411
      %v3618 = vpop.f32.mrf.mxu0
      %v3619 = vadd.f32 %v3454, %v3618
      %v3620 = vpop.f32.mrf.mxu0
      %v3621 = vpop.f32.mrf.mxu0
      %v3622 = vadd.f32 %v3454, %v3621
      %v3623 = vpop.f32.mrf.mxu0
      %3624 = vmatprep.mubr.bf16.mxu0 0
      %3625 = vmatmul.mubr.bf16.gmra.mxu0 %v3412
      %v3626 = vpop.f32.mrf.mxu0
      %v3627 = vadd.f32 %v3454, %v3626
      %v3628 = vpop.f32.mrf.mxu0
      %v3629 = vpop.f32.mrf.mxu0
      %v3630 = vadd.f32 %v3454, %v3629
      %v3631 = vpop.f32.mrf.mxu0
      %3632 = vmatprep.mubr.bf16.mxu0 0
      %3633 = vmatmul.mubr.bf16.gmra.mxu0 %v3413
      %v3634 = vpop.f32.mrf.mxu0
      %v3635 = vadd.f32 %v3454, %v3634
      %v3636 = vpop.f32.mrf.mxu0
      %v3637 = vpop.f32.mrf.mxu0
      %v3638 = vadd.f32 %v3454, %v3637
      %v3639 = vpop.f32.mrf.mxu0
      %3640 = vmatprep.mubr.bf16.mxu0 0
      %3641 = vmatmul.mubr.bf16.gmra.mxu0 %v3414
      %v3642 = vpop.f32.mrf.mxu0
      %v3643 = vadd.f32 %v3454, %v3642
      %v3644 = vpop.f32.mrf.mxu0
      %v3645 = vpop.f32.mrf.mxu0
      %v3646 = vadd.f32 %v3454, %v3645
      %v3647 = vpop.f32.mrf.mxu0
      %3648 = vmatprep.mubr.bf16.mxu0 0
      %3649 = vmatmul.mubr.bf16.gmra.mxu0 %v3415
      %v3650 = vpop.f32.mrf.mxu0
      %v3651 = vadd.f32 %v3454, %v3650
      %v3652 = vpop.f32.mrf.mxu0
      %v3653 = vpop.f32.mrf.mxu0
      %v3654 = vadd.f32 %v3454, %v3653
      %v3655 = vpop.f32.mrf.mxu0
      %3656 = vmatprep.mubr.bf16.mxu0 0
      %3657 = vmatmul.mubr.bf16.gmra.mxu0 %v3416
      %v3658 = vpop.f32.mrf.mxu0
      %v3659 = vadd.f32 %v3454, %v3658
      %v3660 = vpop.f32.mrf.mxu0
      %v3661 = vpop.f32.mrf.mxu0
      %v3662 = vadd.f32 %v3454, %v3661
      %v3663 = vpop.f32.mrf.mxu0
      %3664 = vmatprep.mubr.bf16.mxu0 0
      %3665 = vmatmul.mubr.bf16.gmra.mxu0 %v3417
      %v3666 = vpop.f32.mrf.mxu0
      %v3667 = vadd.f32 %v3454, %v3666
      %v3668 = vpop.f32.mrf.mxu0
      %v3669 = vpop.f32.mrf.mxu0
      %v3670 = vadd.f32 %v3454, %v3669
      %v3671 = vpop.f32.mrf.mxu0
      %3672 = vmatprep.mubr.bf16.mxu0 0
      %3673 = vmatmul.mubr.bf16.gmra.mxu0 %v3418
      %v3674 = vpop.f32.mrf.mxu0
      %v3675 = vadd.f32 %v3454, %v3674
      %v3676 = vpop.f32.mrf.mxu0
      %v3677 = vpop.f32.mrf.mxu0
      %v3678 = vadd.f32 %v3454, %v3677
      %v3679 = vpop.f32.mrf.mxu0
      %3680 = vmatprep.mubr.bf16.mxu0 0
      %3681 = vmatmul.mubr.bf16.gmra.mxu0 %v3419
      %v3682 = vpop.f32.mrf.mxu0
      %v3683 = vadd.f32 %v3454, %v3682
      %v3684 = vpop.f32.mrf.mxu0
      %v3685 = vpop.f32.mrf.mxu0
      %v3686 = vadd.f32 %v3454, %v3685
      %v3687 = vpop.f32.mrf.mxu0
      %3688 = vmatprep.mubr.bf16.mxu0 0
      %3689 = vmatmul.mubr.bf16.gmra.mxu0 %v3420
      %v3690 = vpop.f32.mrf.mxu0
      %v3691 = vadd.f32 %v3454, %v3690
      %v3692 = vpop.f32.mrf.mxu0
      %v3693 = vpop.f32.mrf.mxu0
      %v3694 = vadd.f32 %v3454, %v3693
      %v3695 = vpop.f32.mrf.mxu0
      %3696 = vmatprep.mubr.bf16.mxu0 0
      %3697 = vmatmul.mubr.bf16.gmra.mxu0 %v3421
      %v3698 = vpop.f32.mrf.mxu0
      %v3699 = vadd.f32 %v3454, %v3698
      %v3700 = vpop.f32.mrf.mxu0
      %v3701 = vpop.f32.mrf.mxu0
      %v3702 = vadd.f32 %v3454, %v3701
      %v3703 = vpop.f32.mrf.mxu0
      %3704 = vmatprep.mubr.bf16.mxu0 0
      %3705 = vmatmul.mubr.bf16.gmra.mxu0 %v3422
      %v3706 = vpop.f32.mrf.mxu0
      %v3707 = vadd.f32 %v3454, %v3706
      %v3708 = vpop.f32.mrf.mxu0
      %v3709 = vpop.f32.mrf.mxu0
      %v3710 = vadd.f32 %v3454, %v3709
      %v3711 = vpop.f32.mrf.mxu0
      %3712 = vmatprep.mubr.bf16.mxu0 0
      %3713 = vmatmul.mubr.bf16.gmra.mxu0 %v3423
      %v3714 = vpop.f32.mrf.mxu0
      %v3715 = vadd.f32 %v3454, %v3714
      %v3716 = vpop.f32.mrf.mxu0
      %v3717 = vpop.f32.mrf.mxu0
      %v3718 = vadd.f32 %v3454, %v3717
      %v3719 = vpop.f32.mrf.mxu0
      %3720 = vmatprep.mubr.bf16.mxu0 0
      %3721 = vmatmul.mubr.bf16.gmra.mxu0 %v3424
      %v3722 = vpop.f32.mrf.mxu0
      %v3723 = vadd.f32 %v3454, %v3722
      %v3724 = vpop.f32.mrf.mxu0
      %v3725 = vpop.f32.mrf.mxu0
      %v3726 = vadd.f32 %v3454, %v3725
      %v3727 = vpop.f32.mrf.mxu0
      %3728 = vmatprep.mubr.bf16.mxu0 0
      %3729 = vmatmul.mubr.bf16.gmra.mxu0 %v3425
      %v3730 = vpop.f32.mrf.mxu0
      %v3731 = vadd.f32 %v3454, %v3730
      %v3732 = vpop.f32.mrf.mxu0
      %v3733 = vpop.f32.mrf.mxu0
      %v3734 = vadd.f32 %v3454, %v3733
      %v3735 = vpop.f32.mrf.mxu0
      %3736 = vmatprep.mubr.bf16.mxu0 0
      %3737 = vmatmul.mubr.bf16.gmra.mxu0 %v3426
      %v3738 = vpop.f32.mrf.mxu0
      %v3739 = vadd.f32 %v3454, %v3738
      %v3740 = vpop.f32.mrf.mxu0
      %v3741 = vpop.f32.mrf.mxu0
      %v3742 = vadd.f32 %v3454, %v3741
      %v3743 = vpop.f32.mrf.mxu0
      %3744 = vmatprep.mubr.bf16.mxu0 0
      %3745 = vmatmul.mubr.bf16.gmra.mxu0 %v3427
      %v3746 = vpop.f32.mrf.mxu0
      %v3747 = vadd.f32 %v3454, %v3746
      %v3748 = vpop.f32.mrf.mxu0
      %v3749 = vpop.f32.mrf.mxu0
      %v3750 = vadd.f32 %v3454, %v3749
      %v3751 = vpop.f32.mrf.mxu0
      %3752 = vmatprep.mubr.bf16.mxu0 0
      %3753 = vmatmul.mubr.bf16.gmra.mxu0 %v3428
      %v3754 = vpop.f32.mrf.mxu0
      %v3755 = vadd.f32 %v3454, %v3754
      %v3756 = vpop.f32.mrf.mxu0
      %v3757 = vpop.f32.mrf.mxu0
      %v3758 = vadd.f32 %v3454, %v3757
      %v3759 = vpop.f32.mrf.mxu0
      %3760 = vmatprep.mubr.bf16.mxu0 0
      %3761 = vmatmul.mubr.bf16.gmra.mxu0 %v3429
      %v3762 = vpop.f32.mrf.mxu0
      %v3763 = vadd.f32 %v3454, %v3762
      %v3764 = vpop.f32.mrf.mxu0
      %v3765 = vpop.f32.mrf.mxu0
      %v3766 = vadd.f32 %v3454, %v3765
      %v3767 = vpop.f32.mrf.mxu0
      %3768 = vmatprep.mubr.bf16.mxu0 0
      %3769 = vmatmul.mubr.bf16.gmra.mxu0 %v3430
      %v3770 = vpop.f32.mrf.mxu0
      %v3771 = vadd.f32 %v3454, %v3770
      %v3772 = vpop.f32.mrf.mxu0
      %v3773 = vpop.f32.mrf.mxu0
      %v3774 = vadd.f32 %v3454, %v3773
      %v3775 = vpop.f32.mrf.mxu0
      %3776 = vmatprep.mubr.bf16.mxu0 0
      %3777 = vmatmul.mubr.bf16.gmra.mxu0 %v3431
      %v3778 = vpop.f32.mrf.mxu0
      %v3779 = vadd.f32 %v3454, %v3778
      %v3780 = vpop.f32.mrf.mxu0
      %v3781 = vpop.f32.mrf.mxu0
      %v3782 = vadd.f32 %v3454, %v3781
      %v3783 = vpop.f32.mrf.mxu0
      %3784 = vmatprep.mubr.bf16.mxu0 0
      %3785 = vmatmul.mubr.bf16.gmra.mxu0 %v3432
      %v3786 = vpop.f32.mrf.mxu0
      %v3787 = vadd.f32 %v3454, %v3786
      %v3788 = vpop.f32.mrf.mxu0
      %v3789 = vpop.f32.mrf.mxu0
      %v3790 = vpop.f32.mrf.mxu0
      %3791 = vdwg.mxu0
      %v3792 = vmax.f32 %v3539, 0.0
      %v3793 = vmax.f32 %v3542, 0.0
      %v3794 = vmax.f32 %v3547, 0.0
      %v3795 = vmax.f32 %v3550, 0.0
      %v3796 = vmax.f32 %v3555, 0.0
      %v3797 = vmax.f32 %v3558, 0.0
      %v3798 = vmax.f32 %v3563, 0.0
      %v3799 = vmax.f32 %v3566, 0.0
      %v3800 = vmax.f32 %v3571, 0.0
      %v3801 = vmax.f32 %v3574, 0.0
      %v3802 = vmax.f32 %v3579, 0.0
      %v3803 = vmax.f32 %v3582, 0.0
      %v3804 = vmax.f32 %v3587, 0.0
      %v3805 = vmax.f32 %v3590, 0.0
      %v3806 = vmax.f32 %v3595, 0.0
      %v3807 = vmax.f32 %v3598, 0.0
      %v3808 = vmax.f32 %v3603, 0.0
      %v3809 = vmax.f32 %v3606, 0.0
      %v3810 = vmax.f32 %v3611, 0.0
      %v3811 = vmax.f32 %v3614, 0.0
      %v3812 = vmax.f32 %v3619, 0.0
      %v3813 = vmax.f32 %v3622, 0.0
      %v3814 = vmax.f32 %v3627, 0.0
      %v3815 = vmax.f32 %v3630, 0.0
      %v3816 = vmax.f32 %v3635, 0.0
      %v3817 = vmax.f32 %v3638, 0.0
      %v3818 = vmax.f32 %v3643, 0.0
      %v3819 = vmax.f32 %v3646, 0.0
      %v3820 = vmax.f32 %v3651, 0.0
      %v3821 = vmax.f32 %v3654, 0.0
      %v3822 = vmax.f32 %v3659, 0.0
      %v3823 = vmax.f32 %v3662, 0.0
      %v3824 = vmax.f32 %v3667, 0.0
      %v3825 = vmax.f32 %v3670, 0.0
      %v3826 = vmax.f32 %v3675, 0.0
      %v3827 = vmax.f32 %v3678, 0.0
      %v3828 = vmax.f32 %v3683, 0.0
      %v3829 = vmax.f32 %v3686, 0.0
      %v3830 = vmax.f32 %v3691, 0.0
      %v3831 = vmax.f32 %v3694, 0.0
      %v3832 = vmax.f32 %v3699, 0.0
      %v3833 = vmax.f32 %v3702, 0.0
      %v3834 = vmax.f32 %v3707, 0.0
      %v3835 = vmax.f32 %v3710, 0.0
      %v3836 = vmax.f32 %v3715, 0.0
      %v3837 = vmax.f32 %v3718, 0.0
      %v3838 = vmax.f32 %v3723, 0.0
      %v3839 = vmax.f32 %v3726, 0.0
      %v3840 = vmax.f32 %v3731, 0.0
      %v3841 = vmax.f32 %v3734, 0.0
      %v3842 = vmax.f32 %v3739, 0.0
      %v3843 = vmax.f32 %v3742, 0.0
      %v3844 = vmax.f32 %v3747, 0.0
      %v3845 = vmax.f32 %v3750, 0.0
      %v3846 = vmax.f32 %v3755, 0.0
      %v3847 = vmax.f32 %v3758, 0.0
      %v3848 = vmax.f32 %v3763, 0.0
      %v3849 = vmax.f32 %v3766, 0.0
      %v3850 = vmax.f32 %v3771, 0.0
      %v3851 = vmax.f32 %v3774, 0.0
      %v3852 = vmax.f32 %v3779, 0.0
      %v3853 = vmax.f32 %v3782, 0.0
      %v3854 = vmax.f32 %v3787, 0.0
      %v3855 = vld [vmem:[%s13] sm:$0x1]
      %v3856 = vld [vmem:[%s14] sm:$0x1]
      %v3858 = vlaneseq
      %v3859 = vshrl.u32 %v3858, 7
      %v3860 = vsub.s32 0, %v3859
      %v3861 = vrot.slane %v3855, %v3860
      %v3863 = vmul.f32 %v3792, %v3861
      %v3864 = vmul.f32 %v3793, %v3861
      %v3865 = vmul.f32 %v3794, %v3861
      %v3866 = vmul.f32 %v3795, %v3861
      %v3867 = vmul.f32 %v3796, %v3861
      %v3868 = vmul.f32 %v3797, %v3861
      %v3869 = vmul.f32 %v3798, %v3861
      %v3870 = vmul.f32 %v3799, %v3861
      %v3871 = vmul.f32 %v3800, %v3861
      %v3872 = vmul.f32 %v3801, %v3861
      %v3873 = vmul.f32 %v3802, %v3861
      %v3874 = vmul.f32 %v3803, %v3861
      %v3875 = vmul.f32 %v3804, %v3861
      %v3876 = vmul.f32 %v3805, %v3861
      %v3877 = vmul.f32 %v3806, %v3861
      %v3878 = vmul.f32 %v3807, %v3861
      %v3879 = vmul.f32 %v3808, %v3861
      %v3880 = vmul.f32 %v3809, %v3861
      %v3881 = vmul.f32 %v3810, %v3861
      %v3882 = vmul.f32 %v3811, %v3861
      %v3883 = vmul.f32 %v3812, %v3861
      %v3884 = vmul.f32 %v3813, %v3861
      %v3885 = vmul.f32 %v3814, %v3861
      %v3886 = vmul.f32 %v3815, %v3861
      %v3887 = vmul.f32 %v3816, %v3861
      %v3888 = vmul.f32 %v3817, %v3861
      %v3889 = vmul.f32 %v3818, %v3861
      %v3890 = vmul.f32 %v3819, %v3861
      %v3891 = vmul.f32 %v3820, %v3861
      %v3892 = vmul.f32 %v3821, %v3861
      %v3893 = vmul.f32 %v3822, %v3861
      %v3894 = vmul.f32 %v3823, %v3861
      %v3895 = vmul.f32 %v3824, %v3861
      %v3896 = vmul.f32 %v3825, %v3861
      %v3897 = vmul.f32 %v3826, %v3861
      %v3898 = vmul.f32 %v3827, %v3861
      %v3899 = vmul.f32 %v3828, %v3861
      %v3900 = vmul.f32 %v3829, %v3861
      %v3901 = vmul.f32 %v3830, %v3861
      %v3902 = vmul.f32 %v3831, %v3861
      %v3903 = vmul.f32 %v3832, %v3861
      %v3904 = vmul.f32 %v3833, %v3861
      %v3905 = vmul.f32 %v3834, %v3861
      %v3906 = vmul.f32 %v3835, %v3861
      %v3907 = vmul.f32 %v3836, %v3861
      %v3908 = vmul.f32 %v3837, %v3861
      %v3909 = vmul.f32 %v3838, %v3861
      %v3910 = vmul.f32 %v3839, %v3861
      %v3911 = vmul.f32 %v3840, %v3861
      %v3912 = vmul.f32 %v3841, %v3861
      %v3913 = vmul.f32 %v3842, %v3861
      %v3914 = vmul.f32 %v3843, %v3861
      %v3915 = vmul.f32 %v3844, %v3861
      %v3916 = vmul.f32 %v3845, %v3861
      %v3917 = vmul.f32 %v3846, %v3861
      %v3918 = vmul.f32 %v3847, %v3861
      %v3919 = vmul.f32 %v3848, %v3861
      %v3920 = vmul.f32 %v3849, %v3861
      %v3921 = vmul.f32 %v3850, %v3861
      %v3922 = vmul.f32 %v3851, %v3861
      %v3923 = vmul.f32 %v3852, %v3861
      %v3924 = vmul.f32 %v3853, %v3861
      %v3925 = vmul.f32 %v3854, %v3861
      %v3926 = vsel %vm567, %v3863, 0.0
      %v3927 = vsel %vm567, %v3864, 0.0
      %v3928 = vsel %vm567, %v3865, 0.0
      %v3929 = vsel %vm567, %v3866, 0.0
      %v3930 = vsel %vm567, %v3867, 0.0
      %v3931 = vsel %vm567, %v3868, 0.0
      %v3932 = vsel %vm567, %v3869, 0.0
      %v3933 = vsel %vm567, %v3870, 0.0
      %v3934 = vsel %vm567, %v3871, 0.0
      %v3935 = vsel %vm567, %v3872, 0.0
      %v3936 = vsel %vm567, %v3873, 0.0
      %v3937 = vsel %vm567, %v3874, 0.0
      %v3938 = vsel %vm567, %v3875, 0.0
      %v3939 = vsel %vm567, %v3876, 0.0
      %v3940 = vsel %vm567, %v3877, 0.0
      %v3941 = vsel %vm567, %v3878, 0.0
      %v3942 = vsel %vm567, %v3879, 0.0
      %v3943 = vsel %vm567, %v3880, 0.0
      %v3944 = vsel %vm567, %v3881, 0.0
      %v3945 = vsel %vm567, %v3882, 0.0
      %v3946 = vsel %vm567, %v3883, 0.0
      %v3947 = vsel %vm567, %v3884, 0.0
      %v3948 = vsel %vm567, %v3885, 0.0
      %v3949 = vsel %vm567, %v3886, 0.0
      %v3950 = vsel %vm567, %v3887, 0.0
      %v3951 = vsel %vm567, %v3888, 0.0
      %v3952 = vsel %vm567, %v3889, 0.0
      %v3953 = vsel %vm567, %v3890, 0.0
      %v3954 = vsel %vm567, %v3891, 0.0
      %v3955 = vsel %vm567, %v3892, 0.0
      %v3956 = vsel %vm567, %v3893, 0.0
      %v3957 = vsel %vm567, %v3894, 0.0
      %v3958 = vsel %vm567, %v3895, 0.0
      %v3959 = vsel %vm567, %v3896, 0.0
      %v3960 = vsel %vm567, %v3897, 0.0
      %v3961 = vsel %vm567, %v3898, 0.0
      %v3962 = vsel %vm567, %v3899, 0.0
      %v3963 = vsel %vm567, %v3900, 0.0
      %v3964 = vsel %vm567, %v3901, 0.0
      %v3965 = vsel %vm567, %v3902, 0.0
      %v3966 = vsel %vm567, %v3903, 0.0
      %v3967 = vsel %vm567, %v3904, 0.0
      %v3968 = vsel %vm567, %v3905, 0.0
      %v3969 = vsel %vm567, %v3906, 0.0
      %v3970 = vsel %vm567, %v3907, 0.0
      %v3971 = vsel %vm567, %v3908, 0.0
      %v3972 = vsel %vm567, %v3909, 0.0
      %v3973 = vsel %vm567, %v3910, 0.0
      %v3974 = vsel %vm567, %v3911, 0.0
      %v3975 = vsel %vm567, %v3912, 0.0
      %v3976 = vsel %vm567, %v3913, 0.0
      %v3977 = vsel %vm567, %v3914, 0.0
      %v3978 = vsel %vm567, %v3915, 0.0
      %v3979 = vsel %vm567, %v3916, 0.0
      %v3980 = vsel %vm567, %v3917, 0.0
      %v3981 = vsel %vm567, %v3918, 0.0
      %v3982 = vsel %vm567, %v3919, 0.0
      %v3983 = vsel %vm567, %v3920, 0.0
      %v3984 = vsel %vm567, %v3921, 0.0
      %v3985 = vsel %vm567, %v3922, 0.0
      %v3986 = vsel %vm567, %v3923, 0.0
      %v3987 = vsel %vm567, %v3924, 0.0
      %v3988 = vsel %vm567, %v3925, 0.0
      %3989 = vadd.xlane.f32.xlu0 %v3926
      %v3990 = vpop.xlane.xlu0 %3989
      %3991 = vadd.xlane.f32.xlu0 %v3927
      %v3992 = vpop.xlane.xlu0 %3991
      %3993 = vadd.xlane.f32.xlu0 %v3928
      %v3994 = vpop.xlane.xlu0 %3993
      %3995 = vadd.xlane.f32.xlu0 %v3929
      %v3996 = vpop.xlane.xlu0 %3995
      %3997 = vadd.xlane.f32.xlu0 %v3930
      %v3998 = vpop.xlane.xlu0 %3997
      %3999 = vadd.xlane.f32.xlu0 %v3931
      %v4000 = vpop.xlane.xlu0 %3999
      %4001 = vadd.xlane.f32.xlu0 %v3932
      %v4002 = vpop.xlane.xlu0 %4001
      %4003 = vadd.xlane.f32.xlu0 %v3933
      %v4004 = vpop.xlane.xlu0 %4003
      %4005 = vadd.xlane.f32.xlu0 %v3934
      %v4006 = vpop.xlane.xlu0 %4005
      %4007 = vadd.xlane.f32.xlu0 %v3935
      %v4008 = vpop.xlane.xlu0 %4007
      %4009 = vadd.xlane.f32.xlu0 %v3936
      %v4010 = vpop.xlane.xlu0 %4009
      %4011 = vadd.xlane.f32.xlu0 %v3937
      %v4012 = vpop.xlane.xlu0 %4011
      %4013 = vadd.xlane.f32.xlu0 %v3938
      %v4014 = vpop.xlane.xlu0 %4013
      %4015 = vadd.xlane.f32.xlu0 %v3939
      %v4016 = vpop.xlane.xlu0 %4015
      %4017 = vadd.xlane.f32.xlu0 %v3940
      %v4018 = vpop.xlane.xlu0 %4017
      %4019 = vadd.xlane.f32.xlu0 %v3941
      %v4020 = vpop.xlane.xlu0 %4019
      %4021 = vadd.xlane.f32.xlu0 %v3942
      %v4022 = vpop.xlane.xlu0 %4021
      %4023 = vadd.xlane.f32.xlu0 %v3943
      %v4024 = vpop.xlane.xlu0 %4023
      %4025 = vadd.xlane.f32.xlu0 %v3944
      %v4026 = vpop.xlane.xlu0 %4025
      %4027 = vadd.xlane.f32.xlu0 %v3945
      %v4028 = vpop.xlane.xlu0 %4027
      %4029 = vadd.xlane.f32.xlu0 %v3946
      %v4030 = vpop.xlane.xlu0 %4029
      %4031 = vadd.xlane.f32.xlu0 %v3947
      %v4032 = vpop.xlane.xlu0 %4031
      %4033 = vadd.xlane.f32.xlu0 %v3948
      %v4034 = vpop.xlane.xlu0 %4033
      %4035 = vadd.xlane.f32.xlu0 %v3949
      %v4036 = vpop.xlane.xlu0 %4035
      %4037 = vadd.xlane.f32.xlu0 %v3950
      %v4038 = vpop.xlane.xlu0 %4037
      %4039 = vadd.xlane.f32.xlu0 %v3951
      %v4040 = vpop.xlane.xlu0 %4039
      %4041 = vadd.xlane.f32.xlu0 %v3952
      %v4042 = vpop.xlane.xlu0 %4041
      %4043 = vadd.xlane.f32.xlu0 %v3953
      %v4044 = vpop.xlane.xlu0 %4043
      %4045 = vadd.xlane.f32.xlu0 %v3954
      %v4046 = vpop.xlane.xlu0 %4045
      %4047 = vadd.xlane.f32.xlu0 %v3955
      %v4048 = vpop.xlane.xlu0 %4047
      %4049 = vadd.xlane.f32.xlu0 %v3956
      %v4050 = vpop.xlane.xlu0 %4049
      %4051 = vadd.xlane.f32.xlu0 %v3957
      %v4052 = vpop.xlane.xlu0 %4051
      %4053 = vadd.xlane.f32.xlu0 %v3958
      %v4054 = vpop.xlane.xlu0 %4053
      %4055 = vadd.xlane.f32.xlu0 %v3959
      %v4056 = vpop.xlane.xlu0 %4055
      %4057 = vadd.xlane.f32.xlu0 %v3960
      %v4058 = vpop.xlane.xlu0 %4057
      %4059 = vadd.xlane.f32.xlu0 %v3961
      %v4060 = vpop.xlane.xlu0 %4059
      %4061 = vadd.xlane.f32.xlu0 %v3962
      %v4062 = vpop.xlane.xlu0 %4061
      %4063 = vadd.xlane.f32.xlu0 %v3963
      %v4064 = vpop.xlane.xlu0 %4063
      %4065 = vadd.xlane.f32.xlu0 %v3964
      %v4066 = vpop.xlane.xlu0 %4065
      %4067 = vadd.xlane.f32.xlu0 %v3965
      %v4068 = vpop.xlane.xlu0 %4067
      %4069 = vadd.xlane.f32.xlu0 %v3966
      %v4070 = vpop.xlane.xlu0 %4069
      %4071 = vadd.xlane.f32.xlu0 %v3967
      %v4072 = vpop.xlane.xlu0 %4071
      %4073 = vadd.xlane.f32.xlu0 %v3968
      %v4074 = vpop.xlane.xlu0 %4073
      %4075 = vadd.xlane.f32.xlu0 %v3969
      %v4076 = vpop.xlane.xlu0 %4075
      %4077 = vadd.xlane.f32.xlu0 %v3970
      %v4078 = vpop.xlane.xlu0 %4077
      %4079 = vadd.xlane.f32.xlu0 %v3971
      %v4080 = vpop.xlane.xlu0 %4079
      %4081 = vadd.xlane.f32.xlu0 %v3972
      %v4082 = vpop.xlane.xlu0 %4081
      %4083 = vadd.xlane.f32.xlu0 %v3973
      %v4084 = vpop.xlane.xlu0 %4083
      %4085 = vadd.xlane.f32.xlu0 %v3974
      %v4086 = vpop.xlane.xlu0 %4085
      %4087 = vadd.xlane.f32.xlu0 %v3975
      %v4088 = vpop.xlane.xlu0 %4087
      %4089 = vadd.xlane.f32.xlu0 %v3976
      %v4090 = vpop.xlane.xlu0 %4089
      %4091 = vadd.xlane.f32.xlu0 %v3977
      %v4092 = vpop.xlane.xlu0 %4091
      %4093 = vadd.xlane.f32.xlu0 %v3978
      %v4094 = vpop.xlane.xlu0 %4093
      %4095 = vadd.xlane.f32.xlu0 %v3979
      %v4096 = vpop.xlane.xlu0 %4095
      %4097 = vadd.xlane.f32.xlu0 %v3980
      %v4098 = vpop.xlane.xlu0 %4097
      %4099 = vadd.xlane.f32.xlu0 %v3981
      %v4100 = vpop.xlane.xlu0 %4099
      %4101 = vadd.xlane.f32.xlu0 %v3982
      %v4102 = vpop.xlane.xlu0 %4101
      %4103 = vadd.xlane.f32.xlu0 %v3983
      %v4104 = vpop.xlane.xlu0 %4103
      %4105 = vadd.xlane.f32.xlu0 %v3984
      %v4106 = vpop.xlane.xlu0 %4105
      %4107 = vadd.xlane.f32.xlu0 %v3985
      %v4108 = vpop.xlane.xlu0 %4107
      %4109 = vadd.xlane.f32.xlu0 %v3986
      %v4110 = vpop.xlane.xlu0 %4109
      %4111 = vadd.xlane.f32.xlu0 %v3987
      %v4112 = vpop.xlane.xlu0 %4111
      %4113 = vadd.xlane.f32.xlu0 %v3988
      %v4114 = vpop.xlane.xlu0 %4113
      %vm4115 = vcmp.ge.s32.totalorder %v566, 64
      %v4116 = vsel %vm4115, %v3863, 0.0
      %v4117 = vsel %vm4115, %v3864, 0.0
      %v4118 = vsel %vm4115, %v3865, 0.0
      %v4119 = vsel %vm4115, %v3866, 0.0
      %v4120 = vsel %vm4115, %v3867, 0.0
      %v4121 = vsel %vm4115, %v3868, 0.0
      %v4122 = vsel %vm4115, %v3869, 0.0
      %v4123 = vsel %vm4115, %v3870, 0.0
      %v4124 = vsel %vm4115, %v3871, 0.0
      %v4125 = vsel %vm4115, %v3872, 0.0
      %v4126 = vsel %vm4115, %v3873, 0.0
      %v4127 = vsel %vm4115, %v3874, 0.0
      %v4128 = vsel %vm4115, %v3875, 0.0
      %v4129 = vsel %vm4115, %v3876, 0.0
      %v4130 = vsel %vm4115, %v3877, 0.0
      %v4131 = vsel %vm4115, %v3878, 0.0
      %v4132 = vsel %vm4115, %v3879, 0.0
      %v4133 = vsel %vm4115, %v3880, 0.0
      %v4134 = vsel %vm4115, %v3881, 0.0
      %v4135 = vsel %vm4115, %v3882, 0.0
      %v4136 = vsel %vm4115, %v3883, 0.0
      %v4137 = vsel %vm4115, %v3884, 0.0
      %v4138 = vsel %vm4115, %v3885, 0.0
      %v4139 = vsel %vm4115, %v3886, 0.0
      %v4140 = vsel %vm4115, %v3887, 0.0
      %v4141 = vsel %vm4115, %v3888, 0.0
      %v4142 = vsel %vm4115, %v3889, 0.0
      %v4143 = vsel %vm4115, %v3890, 0.0
      %v4144 = vsel %vm4115, %v3891, 0.0
      %v4145 = vsel %vm4115, %v3892, 0.0
      %v4146 = vsel %vm4115, %v3893, 0.0
      %v4147 = vsel %vm4115, %v3894, 0.0
      %v4148 = vsel %vm4115, %v3895, 0.0
      %v4149 = vsel %vm4115, %v3896, 0.0
      %v4150 = vsel %vm4115, %v3897, 0.0
      %v4151 = vsel %vm4115, %v3898, 0.0
      %v4152 = vsel %vm4115, %v3899, 0.0
      %v4153 = vsel %vm4115, %v3900, 0.0
      %v4154 = vsel %vm4115, %v3901, 0.0
      %v4155 = vsel %vm4115, %v3902, 0.0
      %v4156 = vsel %vm4115, %v3903, 0.0
      %v4157 = vsel %vm4115, %v3904, 0.0
      %v4158 = vsel %vm4115, %v3905, 0.0
      %v4159 = vsel %vm4115, %v3906, 0.0
      %v4160 = vsel %vm4115, %v3907, 0.0
      %v4161 = vsel %vm4115, %v3908, 0.0
      %v4162 = vsel %vm4115, %v3909, 0.0
      %v4163 = vsel %vm4115, %v3910, 0.0
      %v4164 = vsel %vm4115, %v3911, 0.0
      %v4165 = vsel %vm4115, %v3912, 0.0
      %v4166 = vsel %vm4115, %v3913, 0.0
      %v4167 = vsel %vm4115, %v3914, 0.0
      %v4168 = vsel %vm4115, %v3915, 0.0
      %v4169 = vsel %vm4115, %v3916, 0.0
      %v4170 = vsel %vm4115, %v3917, 0.0
      %v4171 = vsel %vm4115, %v3918, 0.0
      %v4172 = vsel %vm4115, %v3919, 0.0
      %v4173 = vsel %vm4115, %v3920, 0.0
      %v4174 = vsel %vm4115, %v3921, 0.0
      %v4175 = vsel %vm4115, %v3922, 0.0
      %v4176 = vsel %vm4115, %v3923, 0.0
      %v4177 = vsel %vm4115, %v3924, 0.0
      %v4178 = vsel %vm4115, %v3925, 0.0
      %4179 = vadd.xlane.f32.xlu0 %v4116
      %v4180 = vpop.xlane.xlu0 %4179
      %4181 = vadd.xlane.f32.xlu0 %v4117
      %v4182 = vpop.xlane.xlu0 %4181
      %4183 = vadd.xlane.f32.xlu0 %v4118
      %v4184 = vpop.xlane.xlu0 %4183
      %4185 = vadd.xlane.f32.xlu0 %v4119
      %v4186 = vpop.xlane.xlu0 %4185
      %4187 = vadd.xlane.f32.xlu0 %v4120
      %v4188 = vpop.xlane.xlu0 %4187
      %4189 = vadd.xlane.f32.xlu0 %v4121
      %v4190 = vpop.xlane.xlu0 %4189
      %4191 = vadd.xlane.f32.xlu0 %v4122
      %v4192 = vpop.xlane.xlu0 %4191
      %4193 = vadd.xlane.f32.xlu0 %v4123
      %v4194 = vpop.xlane.xlu0 %4193
      %4195 = vadd.xlane.f32.xlu0 %v4124
      %v4196 = vpop.xlane.xlu0 %4195
      %4197 = vadd.xlane.f32.xlu0 %v4125
      %v4198 = vpop.xlane.xlu0 %4197
      %4199 = vadd.xlane.f32.xlu0 %v4126
      %v4200 = vpop.xlane.xlu0 %4199
      %4201 = vadd.xlane.f32.xlu0 %v4127
      %v4202 = vpop.xlane.xlu0 %4201
      %4203 = vadd.xlane.f32.xlu0 %v4128
      %v4204 = vpop.xlane.xlu0 %4203
      %4205 = vadd.xlane.f32.xlu0 %v4129
      %v4206 = vpop.xlane.xlu0 %4205
      %4207 = vadd.xlane.f32.xlu0 %v4130
      %v4208 = vpop.xlane.xlu0 %4207
      %4209 = vadd.xlane.f32.xlu0 %v4131
      %v4210 = vpop.xlane.xlu0 %4209
      %4211 = vadd.xlane.f32.xlu0 %v4132
      %v4212 = vpop.xlane.xlu0 %4211
      %4213 = vadd.xlane.f32.xlu0 %v4133
      %v4214 = vpop.xlane.xlu0 %4213
      %4215 = vadd.xlane.f32.xlu0 %v4134
      %v4216 = vpop.xlane.xlu0 %4215
      %4217 = vadd.xlane.f32.xlu0 %v4135
      %v4218 = vpop.xlane.xlu0 %4217
      %4219 = vadd.xlane.f32.xlu0 %v4136
      %v4220 = vpop.xlane.xlu0 %4219
      %4221 = vadd.xlane.f32.xlu0 %v4137
      %v4222 = vpop.xlane.xlu0 %4221
      %4223 = vadd.xlane.f32.xlu0 %v4138
      %v4224 = vpop.xlane.xlu0 %4223
      %4225 = vadd.xlane.f32.xlu0 %v4139
      %v4226 = vpop.xlane.xlu0 %4225
      %4227 = vadd.xlane.f32.xlu0 %v4140
      %v4228 = vpop.xlane.xlu0 %4227
      %4229 = vadd.xlane.f32.xlu0 %v4141
      %v4230 = vpop.xlane.xlu0 %4229
      %4231 = vadd.xlane.f32.xlu0 %v4142
      %v4232 = vpop.xlane.xlu0 %4231
      %4233 = vadd.xlane.f32.xlu0 %v4143
      %v4234 = vpop.xlane.xlu0 %4233
      %4235 = vadd.xlane.f32.xlu0 %v4144
      %v4236 = vpop.xlane.xlu0 %4235
      %4237 = vadd.xlane.f32.xlu0 %v4145
      %v4238 = vpop.xlane.xlu0 %4237
      %4239 = vadd.xlane.f32.xlu0 %v4146
      %v4240 = vpop.xlane.xlu0 %4239
      %4241 = vadd.xlane.f32.xlu0 %v4147
      %v4242 = vpop.xlane.xlu0 %4241
      %4243 = vadd.xlane.f32.xlu0 %v4148
      %v4244 = vpop.xlane.xlu0 %4243
      %4245 = vadd.xlane.f32.xlu0 %v4149
      %v4246 = vpop.xlane.xlu0 %4245
      %4247 = vadd.xlane.f32.xlu0 %v4150
      %v4248 = vpop.xlane.xlu0 %4247
      %4249 = vadd.xlane.f32.xlu0 %v4151
      %v4250 = vpop.xlane.xlu0 %4249
      %4251 = vadd.xlane.f32.xlu0 %v4152
      %v4252 = vpop.xlane.xlu0 %4251
      %4253 = vadd.xlane.f32.xlu0 %v4153
      %v4254 = vpop.xlane.xlu0 %4253
      %4255 = vadd.xlane.f32.xlu0 %v4154
      %v4256 = vpop.xlane.xlu0 %4255
      %4257 = vadd.xlane.f32.xlu0 %v4155
      %v4258 = vpop.xlane.xlu0 %4257
      %4259 = vadd.xlane.f32.xlu0 %v4156
      %v4260 = vpop.xlane.xlu0 %4259
      %4261 = vadd.xlane.f32.xlu0 %v4157
      %v4262 = vpop.xlane.xlu0 %4261
      %4263 = vadd.xlane.f32.xlu0 %v4158
      %v4264 = vpop.xlane.xlu0 %4263
      %4265 = vadd.xlane.f32.xlu0 %v4159
      %v4266 = vpop.xlane.xlu0 %4265
      %4267 = vadd.xlane.f32.xlu0 %v4160
      %v4268 = vpop.xlane.xlu0 %4267
      %4269 = vadd.xlane.f32.xlu0 %v4161
      %v4270 = vpop.xlane.xlu0 %4269
      %4271 = vadd.xlane.f32.xlu0 %v4162
      %v4272 = vpop.xlane.xlu0 %4271
      %4273 = vadd.xlane.f32.xlu0 %v4163
      %v4274 = vpop.xlane.xlu0 %4273
      %4275 = vadd.xlane.f32.xlu0 %v4164
      %v4276 = vpop.xlane.xlu0 %4275
      %4277 = vadd.xlane.f32.xlu0 %v4165
      %v4278 = vpop.xlane.xlu0 %4277
      %4279 = vadd.xlane.f32.xlu0 %v4166
      %v4280 = vpop.xlane.xlu0 %4279
      %4281 = vadd.xlane.f32.xlu0 %v4167
      %v4282 = vpop.xlane.xlu0 %4281
      %4283 = vadd.xlane.f32.xlu0 %v4168
      %v4284 = vpop.xlane.xlu0 %4283
      %4285 = vadd.xlane.f32.xlu0 %v4169
      %v4286 = vpop.xlane.xlu0 %4285
      %4287 = vadd.xlane.f32.xlu0 %v4170
      %v4288 = vpop.xlane.xlu0 %4287
      %4289 = vadd.xlane.f32.xlu0 %v4171
      %v4290 = vpop.xlane.xlu0 %4289
      %4291 = vadd.xlane.f32.xlu0 %v4172
      %v4292 = vpop.xlane.xlu0 %4291
      %4293 = vadd.xlane.f32.xlu0 %v4173
      %v4294 = vpop.xlane.xlu0 %4293
      %4295 = vadd.xlane.f32.xlu0 %v4174
      %v4296 = vpop.xlane.xlu0 %4295
      %4297 = vadd.xlane.f32.xlu0 %v4175
      %v4298 = vpop.xlane.xlu0 %4297
      %4299 = vadd.xlane.f32.xlu0 %v4176
      %v4300 = vpop.xlane.xlu0 %4299
      %4301 = vadd.xlane.f32.xlu0 %v4177
      %v4302 = vpop.xlane.xlu0 %4301
      %4303 = vadd.xlane.f32.xlu0 %v4178
      %v4304 = vpop.xlane.xlu0 %4303
      %vm4305 = vcmp.eq.s32.totalorder %v566, 0
      %v4306 = vsel %vm4305, %v3990, %v4180
      %v4307 = vsel %vm4305, %v3992, %v4182
      %v4308 = vsel %vm4305, %v3994, %v4184
      %v4309 = vsel %vm4305, %v3996, %v4186
      %v4310 = vsel %vm4305, %v3998, %v4188
      %v4311 = vsel %vm4305, %v4000, %v4190
      %v4312 = vsel %vm4305, %v4002, %v4192
      %v4313 = vsel %vm4305, %v4004, %v4194
      %v4314 = vsel %vm4305, %v4006, %v4196
      %v4315 = vsel %vm4305, %v4008, %v4198
      %v4316 = vsel %vm4305, %v4010, %v4200
      %v4317 = vsel %vm4305, %v4012, %v4202
      %v4318 = vsel %vm4305, %v4014, %v4204
      %v4319 = vsel %vm4305, %v4016, %v4206
      %v4320 = vsel %vm4305, %v4018, %v4208
      %v4321 = vsel %vm4305, %v4020, %v4210
      %v4322 = vsel %vm4305, %v4022, %v4212
      %v4323 = vsel %vm4305, %v4024, %v4214
      %v4324 = vsel %vm4305, %v4026, %v4216
      %v4325 = vsel %vm4305, %v4028, %v4218
      %v4326 = vsel %vm4305, %v4030, %v4220
      %v4327 = vsel %vm4305, %v4032, %v4222
      %v4328 = vsel %vm4305, %v4034, %v4224
      %v4329 = vsel %vm4305, %v4036, %v4226
      %v4330 = vsel %vm4305, %v4038, %v4228
      %v4331 = vsel %vm4305, %v4040, %v4230
      %v4332 = vsel %vm4305, %v4042, %v4232
      %v4333 = vsel %vm4305, %v4044, %v4234
      %v4334 = vsel %vm4305, %v4046, %v4236
      %v4335 = vsel %vm4305, %v4048, %v4238
      %v4336 = vsel %vm4305, %v4050, %v4240
      %v4337 = vsel %vm4305, %v4052, %v4242
      %v4338 = vsel %vm4305, %v4054, %v4244
      %v4339 = vsel %vm4305, %v4056, %v4246
      %v4340 = vsel %vm4305, %v4058, %v4248
      %v4341 = vsel %vm4305, %v4060, %v4250
      %v4342 = vsel %vm4305, %v4062, %v4252
      %v4343 = vsel %vm4305, %v4064, %v4254
      %v4344 = vsel %vm4305, %v4066, %v4256
      %v4345 = vsel %vm4305, %v4068, %v4258
      %v4346 = vsel %vm4305, %v4070, %v4260
      %v4347 = vsel %vm4305, %v4072, %v4262
      %v4348 = vsel %vm4305, %v4074, %v4264
      %v4349 = vsel %vm4305, %v4076, %v4266
      %v4350 = vsel %vm4305, %v4078, %v4268
      %v4351 = vsel %vm4305, %v4080, %v4270
      %v4352 = vsel %vm4305, %v4082, %v4272
      %v4353 = vsel %vm4305, %v4084, %v4274
      %v4354 = vsel %vm4305, %v4086, %v4276
      %v4355 = vsel %vm4305, %v4088, %v4278
      %v4356 = vsel %vm4305, %v4090, %v4280
      %v4357 = vsel %vm4305, %v4092, %v4282
      %v4358 = vsel %vm4305, %v4094, %v4284
      %v4359 = vsel %vm4305, %v4096, %v4286
      %v4360 = vsel %vm4305, %v4098, %v4288
      %v4361 = vsel %vm4305, %v4100, %v4290
      %v4362 = vsel %vm4305, %v4102, %v4292
      %v4363 = vsel %vm4305, %v4104, %v4294
      %v4364 = vsel %vm4305, %v4106, %v4296
      %v4365 = vsel %vm4305, %v4108, %v4298
      %v4366 = vsel %vm4305, %v4110, %v4300
      %v4367 = vsel %vm4305, %v4112, %v4302
      %v4368 = vsel %vm4305, %v4114, %v4304
      %v4370 = vlaneseq
      %v4371 = vshrl.u32 %v4370, 7
      %v4372 = vsub.s32 0, %v4371
      %v4373 = vrot.slane %v3856, %v4372
      %v4375 = vadd.f32 %v4306, %v4373
      %v4376 = vadd.f32 %v4307, %v4373
      %v4377 = vadd.f32 %v4308, %v4373
      %v4378 = vadd.f32 %v4309, %v4373
      %v4379 = vadd.f32 %v4310, %v4373
      %v4380 = vadd.f32 %v4311, %v4373
      %v4381 = vadd.f32 %v4312, %v4373
      %v4382 = vadd.f32 %v4313, %v4373
      %v4383 = vadd.f32 %v4314, %v4373
      %v4384 = vadd.f32 %v4315, %v4373
      %v4385 = vadd.f32 %v4316, %v4373
      %v4386 = vadd.f32 %v4317, %v4373
      %v4387 = vadd.f32 %v4318, %v4373
      %v4388 = vadd.f32 %v4319, %v4373
      %v4389 = vadd.f32 %v4320, %v4373
      %v4390 = vadd.f32 %v4321, %v4373
      %v4391 = vadd.f32 %v4322, %v4373
      %v4392 = vadd.f32 %v4323, %v4373
      %v4393 = vadd.f32 %v4324, %v4373
      %v4394 = vadd.f32 %v4325, %v4373
      %v4395 = vadd.f32 %v4326, %v4373
      %v4396 = vadd.f32 %v4327, %v4373
      %v4397 = vadd.f32 %v4328, %v4373
      %v4398 = vadd.f32 %v4329, %v4373
      %v4399 = vadd.f32 %v4330, %v4373
      %v4400 = vadd.f32 %v4331, %v4373
      %v4401 = vadd.f32 %v4332, %v4373
      %v4402 = vadd.f32 %v4333, %v4373
      %v4403 = vadd.f32 %v4334, %v4373
      %v4404 = vadd.f32 %v4335, %v4373
      %v4405 = vadd.f32 %v4336, %v4373
      %v4406 = vadd.f32 %v4337, %v4373
      %v4407 = vadd.f32 %v4338, %v4373
      %v4408 = vadd.f32 %v4339, %v4373
      %v4409 = vadd.f32 %v4340, %v4373
      %v4410 = vadd.f32 %v4341, %v4373
      %v4411 = vadd.f32 %v4342, %v4373
      %v4412 = vadd.f32 %v4343, %v4373
      %v4413 = vadd.f32 %v4344, %v4373
      %v4414 = vadd.f32 %v4345, %v4373
      %v4415 = vadd.f32 %v4346, %v4373
      %v4416 = vadd.f32 %v4347, %v4373
      %v4417 = vadd.f32 %v4348, %v4373
      %v4418 = vadd.f32 %v4349, %v4373
      %v4419 = vadd.f32 %v4350, %v4373
      %v4420 = vadd.f32 %v4351, %v4373
      %v4421 = vadd.f32 %v4352, %v4373
      %v4422 = vadd.f32 %v4353, %v4373
      %v4423 = vadd.f32 %v4354, %v4373
      %v4424 = vadd.f32 %v4355, %v4373
      %v4425 = vadd.f32 %v4356, %v4373
      %v4426 = vadd.f32 %v4357, %v4373
      %v4427 = vadd.f32 %v4358, %v4373
      %v4428 = vadd.f32 %v4359, %v4373
      %v4429 = vadd.f32 %v4360, %v4373
      %v4430 = vadd.f32 %v4361, %v4373
      %v4431 = vadd.f32 %v4362, %v4373
      %v4432 = vadd.f32 %v4363, %v4373
      %v4433 = vadd.f32 %v4364, %v4373
      %v4434 = vadd.f32 %v4365, %v4373
      %v4435 = vadd.f32 %v4366, %v4373
      %v4436 = vadd.f32 %v4367, %v4373
      %v4437 = vadd.f32 %v4368, %v4373
      %vm4438 = vcmask 15360
      %4439 = vst.msk [vmem:[%s497] sm:$0xff] %vm4438, %v4375
      %4440 = vst.msk [vmem:[%s497 + $0x8] sm:$0xff] %vm4438, %v4376
      %4441 = vst.msk [vmem:[%s497 + $0x10] sm:$0xff] %vm4438, %v4377
      %4442 = vst.msk [vmem:[%s497 + $0x18] sm:$0xff] %vm4438, %v4378
      %4443 = vst.msk [vmem:[%s497 + $0x20] sm:$0xff] %vm4438, %v4379
      %4444 = vst.msk [vmem:[%s497 + $0x28] sm:$0xff] %vm4438, %v4380
      %4445 = vst.msk [vmem:[%s497 + $0x30] sm:$0xff] %vm4438, %v4381
      %4446 = vst.msk [vmem:[%s497 + $0x38] sm:$0xff] %vm4438, %v4382
      %4447 = vst.msk [vmem:[%s497 + $0x40] sm:$0xff] %vm4438, %v4383
      %4448 = vst.msk [vmem:[%s497 + $0x48] sm:$0xff] %vm4438, %v4384
      %4449 = vst.msk [vmem:[%s497 + $0x50] sm:$0xff] %vm4438, %v4385
      %4450 = vst.msk [vmem:[%s497 + $0x58] sm:$0xff] %vm4438, %v4386
      %4451 = vst.msk [vmem:[%s497 + $0x60] sm:$0xff] %vm4438, %v4387
      %4452 = vst.msk [vmem:[%s497 + $0x68] sm:$0xff] %vm4438, %v4388
      %4453 = vst.msk [vmem:[%s497 + $0x70] sm:$0xff] %vm4438, %v4389
      %4454 = vst.msk [vmem:[%s497 + $0x78] sm:$0xff] %vm4438, %v4390
      %4455 = vst.msk [vmem:[%s497 + $0x80] sm:$0xff] %vm4438, %v4391
      %4456 = vst.msk [vmem:[%s497 + $0x88] sm:$0xff] %vm4438, %v4392
      %4457 = vst.msk [vmem:[%s497 + $0x90] sm:$0xff] %vm4438, %v4393
      %4458 = vst.msk [vmem:[%s497 + $0x98] sm:$0xff] %vm4438, %v4394
      %4459 = vst.msk [vmem:[%s497 + $0xa0] sm:$0xff] %vm4438, %v4395
      %4460 = vst.msk [vmem:[%s497 + $0xa8] sm:$0xff] %vm4438, %v4396
      %4461 = vst.msk [vmem:[%s497 + $0xb0] sm:$0xff] %vm4438, %v4397
      %4462 = vst.msk [vmem:[%s497 + $0xb8] sm:$0xff] %vm4438, %v4398
      %4463 = vst.msk [vmem:[%s497 + $0xc0] sm:$0xff] %vm4438, %v4399
      %4464 = vst.msk [vmem:[%s497 + $0xc8] sm:$0xff] %vm4438, %v4400
      %4465 = vst.msk [vmem:[%s497 + $0xd0] sm:$0xff] %vm4438, %v4401
      %4466 = vst.msk [vmem:[%s497 + $0xd8] sm:$0xff] %vm4438, %v4402
      %4467 = vst.msk [vmem:[%s497 + $0xe0] sm:$0xff] %vm4438, %v4403
      %4468 = vst.msk [vmem:[%s497 + $0xe8] sm:$0xff] %vm4438, %v4404
      %4469 = vst.msk [vmem:[%s497 + $0xf0] sm:$0xff] %vm4438, %v4405
      %4470 = vst.msk [vmem:[%s497 + $0xf8] sm:$0xff] %vm4438, %v4406
      %4471 = vst.msk [vmem:[%s497 + $0x100] sm:$0xff] %vm4438, %v4407
      %4472 = vst.msk [vmem:[%s497 + $0x108] sm:$0xff] %vm4438, %v4408
      %4473 = vst.msk [vmem:[%s497 + $0x110] sm:$0xff] %vm4438, %v4409
      %4474 = vst.msk [vmem:[%s497 + $0x118] sm:$0xff] %vm4438, %v4410
      %4475 = vst.msk [vmem:[%s497 + $0x120] sm:$0xff] %vm4438, %v4411
      %4476 = vst.msk [vmem:[%s497 + $0x128] sm:$0xff] %vm4438, %v4412
      %4477 = vst.msk [vmem:[%s497 + $0x130] sm:$0xff] %vm4438, %v4413
      %4478 = vst.msk [vmem:[%s497 + $0x138] sm:$0xff] %vm4438, %v4414
      %4479 = vst.msk [vmem:[%s497 + $0x140] sm:$0xff] %vm4438, %v4415
      %4480 = vst.msk [vmem:[%s497 + $0x148] sm:$0xff] %vm4438, %v4416
      %4481 = vst.msk [vmem:[%s497 + $0x150] sm:$0xff] %vm4438, %v4417
      %4482 = vst.msk [vmem:[%s497 + $0x158] sm:$0xff] %vm4438, %v4418
      %4483 = vst.msk [vmem:[%s497 + $0x160] sm:$0xff] %vm4438, %v4419
      %4484 = vst.msk [vmem:[%s497 + $0x168] sm:$0xff] %vm4438, %v4420
      %4485 = vst.msk [vmem:[%s497 + $0x170] sm:$0xff] %vm4438, %v4421
      %4486 = vst.msk [vmem:[%s497 + $0x178] sm:$0xff] %vm4438, %v4422
      %4487 = vst.msk [vmem:[%s497 + $0x180] sm:$0xff] %vm4438, %v4423
      %4488 = vst.msk [vmem:[%s497 + $0x188] sm:$0xff] %vm4438, %v4424
      %4489 = vst.msk [vmem:[%s497 + $0x190] sm:$0xff] %vm4438, %v4425
      %4490 = vst.msk [vmem:[%s497 + $0x198] sm:$0xff] %vm4438, %v4426
      %4491 = vst.msk [vmem:[%s497 + $0x1a0] sm:$0xff] %vm4438, %v4427
      %4492 = vst.msk [vmem:[%s497 + $0x1a8] sm:$0xff] %vm4438, %v4428
      %4493 = vst.msk [vmem:[%s497 + $0x1b0] sm:$0xff] %vm4438, %v4429
      %4494 = vst.msk [vmem:[%s497 + $0x1b8] sm:$0xff] %vm4438, %v4430
      %4495 = vst.msk [vmem:[%s497 + $0x1c0] sm:$0xff] %vm4438, %v4431
      %4496 = vst.msk [vmem:[%s497 + $0x1c8] sm:$0xff] %vm4438, %v4432
      %4497 = vst.msk [vmem:[%s497 + $0x1d0] sm:$0xff] %vm4438, %v4433
      %4498 = vst.msk [vmem:[%s497 + $0x1d8] sm:$0xff] %vm4438, %v4434
      %4499 = vst.msk [vmem:[%s497 + $0x1e0] sm:$0xff] %vm4438, %v4435
      %4500 = vst.msk [vmem:[%s497 + $0x1e8] sm:$0xff] %vm4438, %v4436
      %4501 = vst.msk [vmem:[%s497 + $0x1f0] sm:$0xff] %vm4438, %v4437
      %s4502 = smul.u32 63, %s27
      %p4503 = scmp.lt.s32.totalorder %s4502, 125
      %s4504 = scalar_select %p4503, %s4502, 125
      %s4505 = smul.addr %s4504, 8
      %s4506 = scalar_lea.vmem %s15, %s4505
      // Predicated region
      $region81: #{tpu_custom_call.1} parent=79 // pred_check
        %p4507 = pneg %p365
      $region82: #{tpu_custom_call.1} parent=79 // pred_check_branch
        %4509 = sbr.rel (%p4507) target = $region84
      $region83: #{tpu_custom_call.1} parent=79 // pred_region
        %s4510 = smul.u32 63, %s27
      $region84: #{tpu_custom_call.1} parent=79 // pred_fallthru
        _
    $region80: #{tpu_custom_call.1} parent=5 // pred_fallthru
      _
    %p4511 = scmp.le.s32.totalorder 2, %s22
    // Predicated region
    $region85: #{tpu_custom_call.1} parent=5 // pred_check
      %p4512 = pneg %p4511
    $region86: #{tpu_custom_call.1} parent=5 // pred_check_branch
      %4514 = sbr.rel (%p4512) target = $region88
    $region87: #{tpu_custom_call.1} parent=5 // pred_region
      %s4515 = ssub.s32 %s22, 2
      // Predicated region
      $region89: #{tpu_custom_call.1} parent=87 // pred_check
        %p4516 = pneg %p371
      $region90: #{tpu_custom_call.1} parent=87 // pred_check_branch
        %4518 = sbr.rel (%p4516) target = $region92
      $region91: #{tpu_custom_call.1} parent=87 // pred_region
        %s4519 = smul.u32 63, %s28
        %p4520 = scmp.lt.s32.totalorder %s4519, 125
        %s4521 = scalar_select %p4520, %s4519, 125
        %s4522 = smul.addr %s4521, 8
        %s4523 = scalar_lea.vmem %s15, %s4522
      $region92: #{tpu_custom_call.1} parent=87 // pred_fallthru
        _
    $region88: #{tpu_custom_call.1} parent=5 // pred_fallthru
      _
  $region6: #{tpu_custom_call.1} parent=0 // loop_footer
    %s26 = sadd.s32 1, %s22
  $region7: #{tpu_custom_call.1} parent=0 // loop_footer_branch
    %21 = sbr.rel target = $region3
  $region8: #{tpu_custom_call.1} parent=0 // loop_exit
    _

</llo_original>
